<compile_context>
chip_gen: v6e
topology: v6e:2x2x1
jax: 0.10.0
libtpu: 0.0.40
codegen_flags: <defaults>
</compile_context>

<pallas_src>
import functools

import jax
import jax.numpy as jnp
from jax.experimental import pallas as pl
from jax.experimental.pallas import tpu as pltpu


def _round_up(x, m):
    return ((x + m - 1) // m) * m


# ---------------------------------------------------------------------------
# Fused Pallas kernel: all layers, all time steps, one grid step
# ---------------------------------------------------------------------------
def _fused_gru_kernel(x_ref, h0_ref, *args, num_layers, seq_len, batch_pad):
    """Fused multi-layer GRU over the full (padded) sequence.

    x_ref:   (T*Bp, Ip)   time-major, flattened over (T, Bp), zero-padded
    h0_ref:  (L, Bp, Hp)
    per layer l (4 refs):
        wi_cat (in_pad, 3*Hp)   = [wi_r | wi_z | wi_n] pre-transposed
        wh_cat (Hp, 3*Hp)       = [wh_r | wh_z | wh_n] pre-transposed
        b_cat  (1, 3*Hp)        = [b_ir+b_hr | b_iz+b_hz | b_in]
        b_hn   (1, Hp)
    outputs: out_ref (T*Bp, Hp)  -- also used as the inter-layer activation
             hN_ref  (L, Bp, Hp)
    scratch: gi_scr  (T*Bp, 3*Hp)  hoisted input-side projections.
    """
    n_w = 4 * num_layers
    w_refs = args[:n_w]
    out_ref, hN_ref, gi_scr = args[n_w:]

    T = seq_len
    Bp = batch_pad
    Hp = h0_ref.shape[-1]

    for l in range(num_layers):
        wi_cat, wh_cat, b_cat, b_hn = w_refs[4 * l:4 * (l + 1)]

        # Layer input: the raw input for layer 0, otherwise the previous
        # layer's outputs that already live in out_ref.  The read of out_ref
        # into x_in happens (in program order) before this layer's time loop
        # overwrites it, so there is no WAR hazard in this grid-less layout.
        x_in = x_ref[...] if l == 0 else out_ref[...]

        # Hoisted input projection: ONE MXU matmul over the whole sequence for
        # all three gates, r/z biases folded with the hidden-side biases.
        gi_scr[...] = (
            jnp.dot(x_in, wi_cat[...], preferred_element_type=jnp.float32)
            + b_cat[...])

        # Loop-invariant operands hoisted out of the recurrence.
        wh = wh_cat[...]
        bhn = jnp.broadcast_to(b_hn[...], (Bp, Hp))

        def step(t, h, wh=wh, bhn=bhn):
            # Bp is a multiple of 8, so every per-step access is an aligned,
            # full-width (8,128)-tile load/store.
            row = pl.multiple_of(t * Bp, 8)
            gi = gi_scr[pl.ds(row, Bp), :]                      # (Bp, 3*Hp)
            # Single fused hidden matmul per serial step (r|z|n along N).
            gh = jnp.dot(h, wh, preferred_element_type=jnp.float32)
            r = jax.nn.sigmoid(gi[:, 0:Hp] + gh[:, 0:Hp])
            z = jax.nn.sigmoid(gi[:, Hp:2 * Hp] + gh[:, Hp:2 * Hp])
            n = jnp.tanh(gi[:, 2 * Hp:3 * Hp]
                         + r * (gh[:, 2 * Hp:3 * Hp] + bhn))
            h_new = (1.0 - z) * n + z * h
            out_ref[pl.ds(row, Bp), :] = h_new
            return h_new

        # Time must stay serial; fully unroll the short static loop so the
        # scheduler can overlap consecutive steps' independent work.
        # TODO(synk): cap unroll at 2-4 once T is in the hundreds.
        h_final = jax.lax.fori_loop(0, T, step, h0_ref[l], unroll=True)
        hN_ref[l] = h_final


# ---------------------------------------------------------------------------
# Wrapper: pad to (8,128) tiles, fuse per-gate weights, call the kernel
# ---------------------------------------------------------------------------
def _pad2(a, rows, cols):
    return jnp.pad(a, ((0, rows - a.shape[0]), (0, cols - a.shape[1])))


def _prep_layer_params(w_ih, w_hh, b_ih, b_hh, in_pad, Hp):
    """Split per gate, pre-transpose, zero-pad to tiles, fuse along N."""
    H = w_hh.shape[1]

    def wi_gate(g):
        return _pad2(w_ih[g * H:(g + 1) * H, :].T, in_pad, Hp)   # (in_pad, Hp)

    def wh_gate(g):
        return _pad2(w_hh[g * H:(g + 1) * H, :].T, Hp, Hp)       # (Hp, Hp)

    def pad_b(v):
        return jnp.pad(v, (0, Hp - H)).reshape(1, Hp)

    wi_cat = jnp.concatenate([wi_gate(0), wi_gate(1), wi_gate(2)], axis=1)
    wh_cat = jnp.concatenate([wh_gate(0), wh_gate(1), wh_gate(2)], axis=1)
    b_cat = jnp.concatenate([pad_b(b_ih[0:H] + b_hh[0:H]),
                             pad_b(b_ih[H:2 * H] + b_hh[H:2 * H]),
                             pad_b(b_ih[2 * H:3 * H])], axis=1)
    b_hn = pad_b(b_hh[2 * H:3 * H])
    return [wi_cat, wh_cat, b_cat, b_hn]


def rnn_model_forward(inputs, hidden, params):
    """inputs: (B, T, input_size), hidden: (num_layers, B, H).
    Returns (output (B, T, H), hidden_out (num_layers, B, H))."""
    B, T, I = inputs.shape
    L, _, H = hidden.shape

    Bp = _round_up(B, 8)      # sublane tile
    Hp = _round_up(H, 128)    # lane tile
    Ip = _round_up(I, 128)

    # Time-major, zero-padded, flattened over (T, Bp): single cheap XLA
    # transpose/pad at the boundary, lane-dense slabs inside the kernel.
    x = jnp.transpose(inputs, (1, 0, 2)).astype(jnp.float32)       # (T, B, I)
    x = jnp.pad(x, ((0, 0), (0, Bp - B), (0, Ip - I))).reshape(T * Bp, Ip)
    h0 = jnp.pad(hidden.astype(jnp.float32),
                 ((0, 0), (0, Bp - B), (0, Hp - H)))               # (L, Bp, Hp)

    flat_w = []
    for l, (w_ih, w_hh, b_ih, b_hh) in enumerate(params):
        in_pad = Ip if l == 0 else Hp
        flat_w += _prep_layer_params(w_ih.astype(jnp.float32),
                                     w_hh.astype(jnp.float32),
                                     b_ih.astype(jnp.float32),
                                     b_hh.astype(jnp.float32),
                                     in_pad, Hp)

    kernel = functools.partial(_fused_gru_kernel, num_layers=L,
                               seq_len=T, batch_pad=Bp)

    out_flat, h_n = pl.pallas_call(
        kernel,
        out_shape=(
            jax.ShapeDtypeStruct((T * Bp, Hp), jnp.float32),
            jax.ShapeDtypeStruct((L, Bp, Hp), jnp.float32),
        ),
        in_specs=[pl.BlockSpec(memory_space=pltpu.MemorySpace.VMEM)
                  for _ in range(2 + 4 * L)],
        out_specs=(pl.BlockSpec(memory_space=pltpu.MemorySpace.VMEM),
                   pl.BlockSpec(memory_space=pltpu.MemorySpace.VMEM)),
        scratch_shapes=[
            # Single fused (T*Bp, 3*Hp) slab for all hoisted projections.
            pltpu.VMEM((T * Bp, 3 * Hp), jnp.float32),
        ],
        # Explicit (safe-everywhere) scoped VMEM budget; re-derive / chunk over
        # T for production shapes on v7x (64 MiB physical VMEM).
        compiler_params=pltpu.CompilerParams(
            vmem_limit_bytes=32 * 1024 * 1024),
    )(x, h0, *flat_w)

    output = out_flat.reshape(T, Bp, Hp)[:, :B, :H].transpose(1, 0, 2)
    hidden_out = h_n[:, :B, :H]
    return output, hidden_out


# ---------------------------------------------------------------------------
# Pure-JAX reference (same math, lax.scan) for a correctness check
# ---------------------------------------------------------------------------
def _gru_ref(inputs, hidden, params):
    x = jnp.transpose(inputs, (1, 0, 2))  # (T, B, I)
    h_finals = []
    for l, (w_ih, w_hh, b_ih, b_hh) in enumerate(params):
        H = w_hh.shape[1]

        def step(h, x_t, w_ih=w_ih, w_hh=w_hh, b_ih=b_ih, b_hh=b_hh, H=H):
            gi = x_t @ w_ih.T + b_ih
            gh = h @ w_hh.T + b_hh
            r = jax.nn.sigmoid(gi[:, :H] + gh[:, :H])
            z = jax.nn.sigmoid(gi[:, H:2 * H] + gh[:, H:2 * H])
            n = jnp.tanh(gi[:, 2 * H:] + r * gh[:, 2 * H:])
            h_new = (1.0 - z) * n + z * h
            return h_new, h_new

        h_n, ys = jax.lax.scan(step, hidden[l], x)
        x = ys
        h_finals.append(h_n)
    return jnp.transpose(x, (1, 0, 2)), jnp.stack(h_finals, 0)


# ---------------------------------------------------------------------------
# Deterministic parameter construction (mirrors nn.GRU parameter shapes)
# ---------------------------------------------------------------------------
def make_gru_params(key, input_size, hidden_size, num_layers):
    params = []
    for l in range(num_layers):
        in_sz = input_size if l == 0 else hidden_size
        k1, k2, k3, k4, key = jax.random.split(key, 5)
        scale = 1.0 / jnp.sqrt(hidden_size)
        w_ih = jax.random.uniform(k1, (3 * hidden_size, in_sz),
                                  jnp.float32, -scale, scale)
        w_hh = jax.random.uniform(k2, (3 * hidden_size, hidden_size),
                                  jnp.float32, -scale, scale)
        b_ih = jax.random.uniform(k3, (3 * hidden_size,),
                                  jnp.float32, -scale, scale)
        b_hh = jax.random.uniform(k4, (3 * hidden_size,),
                                  jnp.float32, -scale, scale)
        params.append((w_ih, w_hh, b_ih, b_hh))
    return params


if __name__ == "__main__":
    # batch=2, seq=8, input_size=16, hidden_size=32, num_layers=2, GRU.
    B, T, INPUT, HID, LAYERS = 2, 8, 16, 32, 2

    key = jax.random.PRNGKey(0)
    k_in, k_h, k_p = jax.random.split(key, 3)
    inputs = jax.random.normal(k_in, (B, T, INPUT), jnp.float32)
    hidden0 = 0.1 * jax.random.normal(k_h, (LAYERS, B, HID), jnp.float32)
    params = make_gru_params(k_p, INPUT, HID, LAYERS)

    fwd = jax.jit(functools.partial(rnn_model_forward, params=params))
    output, hidden_out = fwd(inputs, hidden0)
    jax.block_until_ready((output, hidden_out))

    # Sanity check against a pure-JAX reference of the same math.
    ref_out, ref_hid = _gru_ref(inputs, hidden0, params)
    assert output.shape == (B, T, HID) and hidden_out.shape == (LAYERS, B, HID)
    assert jnp.allclose(output, ref_out, atol=1e-5, rtol=1e-5)
    assert jnp.allclose(hidden_out, ref_hid, atol=1e-5, rtol=1e-5)

    print("KERNEL_OK")
</pallas_src>

<mosaic_0001>
module attributes {stable_mosaic.version = 11 : i64} {
  func.func @_fused_gru_kernel(%arg0: memref<64x128xf32, #tpu.memory_space<vmem>>, %arg1: memref<2x8x128xf32, #tpu.memory_space<vmem>>, %arg2: memref<128x384xf32, #tpu.memory_space<vmem>>, %arg3: memref<128x384xf32, #tpu.memory_space<vmem>>, %arg4: memref<1x384xf32, #tpu.memory_space<vmem>>, %arg5: memref<1x128xf32, #tpu.memory_space<vmem>>, %arg6: memref<128x384xf32, #tpu.memory_space<vmem>>, %arg7: memref<128x384xf32, #tpu.memory_space<vmem>>, %arg8: memref<1x384xf32, #tpu.memory_space<vmem>>, %arg9: memref<1x128xf32, #tpu.memory_space<vmem>>, %arg10: memref<64x128xf32, #tpu.memory_space<vmem>>, %arg11: memref<2x8x128xf32, #tpu.memory_space<vmem>>, %arg12: memref<64x384xf32, #tpu.memory_space<vmem>>) attributes {dimension_semantics = [], scalar_prefetch = 0 : i64, scratch_operands = 1 : i64, tpu.core_type = #tpu.core_type<tc>} {
    %c0 = arith.constant 0 : index
    %c0_0 = arith.constant 0 : index
    %0 = vector.load %arg0[%c0, %c0_0] : memref<64x128xf32, #tpu.memory_space<vmem>>, vector<64x128xf32>
    %c0_1 = arith.constant 0 : index
    %c0_2 = arith.constant 0 : index
    %1 = vector.load %arg2[%c0_1, %c0_2] : memref<128x384xf32, #tpu.memory_space<vmem>>, vector<128x384xf32>
    %cst = arith.constant dense<0.000000e+00> : vector<64x384xf32>
    %2 = tpu.matmul %0, %1, %cst {dimension_numbers = #tpu.dot_dimension_numbers<[1], [0], [0], [1], [0, 0, 1, 1], [], []>} : vector<64x128xf32>, vector<128x384xf32>, vector<64x384xf32> -> vector<64x384xf32>
    %c0_3 = arith.constant 0 : index
    %c0_4 = arith.constant 0 : index
    %3 = vector.load %arg4[%c0_3, %c0_4] : memref<1x384xf32, #tpu.memory_space<vmem>>, vector<1x384xf32>
    %4 = vector.broadcast %3 : vector<1x384xf32> to vector<64x384xf32>
    %5 = arith.addf %2, %4 : vector<64x384xf32>
    %c0_5 = arith.constant 0 : index
    %c0_6 = arith.constant 0 : index
    %6 = vector.load %arg12[%c0_5, %c0_6] : memref<64x384xf32, #tpu.memory_space<vmem>>, vector<64x384xf32>
    tpu.vector_store %arg12[%c0_5, %c0_6], %5 {strides = array<i32>} : memref<64x384xf32, #tpu.memory_space<vmem>>, vector<64x384xf32>,
    %c0_7 = arith.constant 0 : index
    %c0_8 = arith.constant 0 : index
    %7 = vector.load %arg3[%c0_7, %c0_8] : memref<128x384xf32, #tpu.memory_space<vmem>>, vector<128x384xf32>
    %c0_9 = arith.constant 0 : index
    %c0_10 = arith.constant 0 : index
    %8 = vector.load %arg5[%c0_9, %c0_10] : memref<1x128xf32, #tpu.memory_space<vmem>>, vector<1x128xf32>
    %9 = vector.shape_cast %8 : vector<1x128xf32> to vector<1x128xf32>
    %10 = vector.broadcast %9 : vector<1x128xf32> to vector<8x128xf32>
    %c0_11 = arith.constant 0 : index
    %c0_12 = arith.constant 0 : index
    %c0_13 = arith.constant 0 : index
    %11 = vector.load %arg1[%c0_11, %c0_12, %c0_13] : memref<2x8x128xf32, #tpu.memory_space<vmem>>, vector<1x8x128xf32>
    %12 = vector.shape_cast %11 : vector<1x8x128xf32> to vector<8x128xf32>
    %c0_i32 = arith.constant 0 : i32
    %c8_i32 = arith.constant 8 : i32
    %13 = arith.muli %c0_i32, %c8_i32 : i32
    %14 = tpu.assume_multiple %13, 8 : i32
    %15 = arith.index_cast %14 : i32 to index
    %c0_14 = arith.constant 0 : index
    %16 = vector.load %arg12[%15, %c0_14] : memref<64x384xf32, #tpu.memory_space<vmem>>, vector<8x384xf32>
    %cst_15 = arith.constant dense<0.000000e+00> : vector<8x384xf32>
    %17 = tpu.matmul %12, %7, %cst_15 {dimension_numbers = #tpu.dot_dimension_numbers<[1], [0], [0], [1], [0, 0, 1, 1], [], []>} : vector<8x128xf32>, vector<128x384xf32>, vector<8x384xf32> -> vector<8x384xf32>
    %18 = vector.extract_strided_slice %16 {offsets = [0, 0], sizes = [8, 128], strides = [1, 1]} : vector<8x384xf32> to vector<8x128xf32>
    %19 = vector.extract_strided_slice %17 {offsets = [0, 0], sizes = [8, 128], strides = [1, 1]} : vector<8x384xf32> to vector<8x128xf32>
    %20 = arith.addf %18, %19 : vector<8x128xf32>
    %21 = arith.negf %20 : vector<8x128xf32>
    %22 = math.exp %21 : vector<8x128xf32>
    %cst_16 = arith.constant 1.000000e+00 : f32
    %23 = vector.broadcast %cst_16 : f32 to vector<8x128xf32>
    %24 = arith.addf %23, %22 : vector<8x128xf32>
    %25 = arith.divf %23, %24 : vector<8x128xf32>
    %26 = vector.extract_strided_slice %16 {offsets = [0, 128], sizes = [8, 128], strides = [1, 1]} : vector<8x384xf32> to vector<8x128xf32>
    %27 = vector.extract_strided_slice %17 {offsets = [0, 128], sizes = [8, 128], strides = [1, 1]} : vector<8x384xf32> to vector<8x128xf32>
    %28 = arith.addf %26, %27 : vector<8x128xf32>
    %29 = arith.negf %28 : vector<8x128xf32>
    %30 = math.exp %29 : vector<8x128xf32>
    %cst_17 = arith.constant 1.000000e+00 : f32
    %31 = vector.broadcast %cst_17 : f32 to vector<8x128xf32>
    %32 = arith.addf %31, %30 : vector<8x128xf32>
    %33 = arith.divf %31, %32 : vector<8x128xf32>
    %34 = vector.extract_strided_slice %16 {offsets = [0, 256], sizes = [8, 128], strides = [1, 1]} : vector<8x384xf32> to vector<8x128xf32>
    %35 = vector.extract_strided_slice %17 {offsets = [0, 256], sizes = [8, 128], strides = [1, 1]} : vector<8x384xf32> to vector<8x128xf32>
    %36 = arith.addf %35, %10 : vector<8x128xf32>
    %37 = arith.mulf %25, %36 : vector<8x128xf32>
    %38 = arith.addf %34, %37 : vector<8x128xf32>
    %39 = math.tanh %38 : vector<8x128xf32>
    %cst_18 = arith.constant 1.000000e+00 : f32
    %40 = vector.broadcast %cst_18 : f32 to vector<8x128xf32>
    %41 = arith.subf %40, %33 : vector<8x128xf32>
    %42 = arith.mulf %41, %39 : vector<8x128xf32>
    %43 = arith.mulf %33, %12 : vector<8x128xf32>
    %44 = arith.addf %42, %43 : vector<8x128xf32>
    %45 = arith.index_cast %14 : i32 to index
    %c0_19 = arith.constant 0 : index
    %46 = vector.load %arg10[%45, %c0_19] : memref<64x128xf32, #tpu.memory_space<vmem>>, vector<8x128xf32>
    tpu.vector_store %arg10[%45, %c0_19], %44 {strides = array<i32>} : memref<64x128xf32, #tpu.memory_space<vmem>>, vector<8x128xf32>,
    %c1_i32 = arith.constant 1 : i32
    %c8_i32_20 = arith.constant 8 : i32
    %47 = arith.muli %c1_i32, %c8_i32_20 : i32
    %48 = tpu.assume_multiple %47, 8 : i32
    %49 = arith.index_cast %48 : i32 to index
    %c0_21 = arith.constant 0 : index
    %50 = vector.load %arg12[%49, %c0_21] : memref<64x384xf32, #tpu.memory_space<vmem>>, vector<8x384xf32>
    %cst_22 = arith.constant dense<0.000000e+00> : vector<8x384xf32>
    %51 = tpu.matmul %44, %7, %cst_22 {dimension_numbers = #tpu.dot_dimension_numbers<[1], [0], [0], [1], [0, 0, 1, 1], [], []>} : vector<8x128xf32>, vector<128x384xf32>, vector<8x384xf32> -> vector<8x384xf32>
    %52 = vector.extract_strided_slice %50 {offsets = [0, 0], sizes = [8, 128], strides = [1, 1]} : vector<8x384xf32> to vector<8x128xf32>
    %53 = vector.extract_strided_slice %51 {offsets = [0, 0], sizes = [8, 128], strides = [1, 1]} : vector<8x384xf32> to vector<8x128xf32>
    %54 = arith.addf %52, %53 : vector<8x128xf32>
    %55 = arith.negf %54 : vector<8x128xf32>
    %56 = math.exp %55 : vector<8x128xf32>
    %cst_23 = arith.constant 1.000000e+00 : f32
    %57 = vector.broadcast %cst_23 : f32 to vector<8x128xf32>
    %58 = arith.addf %57, %56 : vector<8x128xf32>
    %59 = arith.divf %57, %58 : vector<8x128xf32>
    %60 = vector.extract_strided_slice %50 {offsets = [0, 128], sizes = [8, 128], strides = [1, 1]} : vector<8x384xf32> to vector<8x128xf32>
    %61 = vector.extract_strided_slice %51 {offsets = [0, 128], sizes = [8, 128], strides = [1, 1]} : vector<8x384xf32> to vector<8x128xf32>
    %62 = arith.addf %60, %61 : vector<8x128xf32>
    %63 = arith.negf %62 : vector<8x128xf32>
    %64 = math.exp %63 : vector<8x128xf32>
    %cst_24 = arith.constant 1.000000e+00 : f32
    %65 = vector.broadcast %cst_24 : f32 to vector<8x128xf32>
    %66 = arith.addf %65, %64 : vector<8x128xf32>
    %67 = arith.divf %65, %66 : vector<8x128xf32>
    %68 = vector.extract_strided_slice %50 {offsets = [0, 256], sizes = [8, 128], strides = [1, 1]} : vector<8x384xf32> to vector<8x128xf32>
    %69 = vector.extract_strided_slice %51 {offsets = [0, 256], sizes = [8, 128], strides = [1, 1]} : vector<8x384xf32> to vector<8x128xf32>
    %70 = arith.addf %69, %10 : vector<8x128xf32>
    %71 = arith.mulf %59, %70 : vector<8x128xf32>
    %72 = arith.addf %68, %71 : vector<8x128xf32>
    %73 = math.tanh %72 : vector<8x128xf32>
    %cst_25 = arith.constant 1.000000e+00 : f32
    %74 = vector.broadcast %cst_25 : f32 to vector<8x128xf32>
    %75 = arith.subf %74, %67 : vector<8x128xf32>
    %76 = arith.mulf %75, %73 : vector<8x128xf32>
    %77 = arith.mulf %67, %44 : vector<8x128xf32>
    %78 = arith.addf %76, %77 : vector<8x128xf32>
    %79 = arith.index_cast %48 : i32 to index
    %c0_26 = arith.constant 0 : index
    %80 = vector.load %arg10[%79, %c0_26] : memref<64x128xf32, #tpu.memory_space<vmem>>, vector<8x128xf32>
    tpu.vector_store %arg10[%79, %c0_26], %78 {strides = array<i32>} : memref<64x128xf32, #tpu.memory_space<vmem>>, vector<8x128xf32>,
    %c2_i32 = arith.constant 2 : i32
    %c8_i32_27 = arith.constant 8 : i32
    %81 = arith.muli %c2_i32, %c8_i32_27 : i32
    %82 = tpu.assume_multiple %81, 8 : i32
    %83 = arith.index_cast %82 : i32 to index
    %c0_28 = arith.constant 0 : index
    %84 = vector.load %arg12[%83, %c0_28] : memref<64x384xf32, #tpu.memory_space<vmem>>, vector<8x384xf32>
    %cst_29 = arith.constant dense<0.000000e+00> : vector<8x384xf32>
    %85 = tpu.matmul %78, %7, %cst_29 {dimension_numbers = #tpu.dot_dimension_numbers<[1], [0], [0], [1], [0, 0, 1, 1], [], []>} : vector<8x128xf32>, vector<128x384xf32>, vector<8x384xf32> -> vector<8x384xf32>
    %86 = vector.extract_strided_slice %84 {offsets = [0, 0], sizes = [8, 128], strides = [1, 1]} : vector<8x384xf32> to vector<8x128xf32>
    %87 = vector.extract_strided_slice %85 {offsets = [0, 0], sizes = [8, 128], strides = [1, 1]} : vector<8x384xf32> to vector<8x128xf32>
    %88 = arith.addf %86, %87 : vector<8x128xf32>
    %89 = arith.negf %88 : vector<8x128xf32>
    %90 = math.exp %89 : vector<8x128xf32>
    %cst_30 = arith.constant 1.000000e+00 : f32
    %91 = vector.broadcast %cst_30 : f32 to vector<8x128xf32>
    %92 = arith.addf %91, %90 : vector<8x128xf32>
    %93 = arith.divf %91, %92 : vector<8x128xf32>
    %94 = vector.extract_strided_slice %84 {offsets = [0, 128], sizes = [8, 128], strides = [1, 1]} : vector<8x384xf32> to vector<8x128xf32>
    %95 = vector.extract_strided_slice %85 {offsets = [0, 128], sizes = [8, 128], strides = [1, 1]} : vector<8x384xf32> to vector<8x128xf32>
    %96 = arith.addf %94, %95 : vector<8x128xf32>
    %97 = arith.negf %96 : vector<8x128xf32>
    %98 = math.exp %97 : vector<8x128xf32>
    %cst_31 = arith.constant 1.000000e+00 : f32
    %99 = vector.broadcast %cst_31 : f32 to vector<8x128xf32>
    %100 = arith.addf %99, %98 : vector<8x128xf32>
    %101 = arith.divf %99, %100 : vector<8x128xf32>
    %102 = vector.extract_strided_slice %84 {offsets = [0, 256], sizes = [8, 128], strides = [1, 1]} : vector<8x384xf32> to vector<8x128xf32>
    %103 = vector.extract_strided_slice %85 {offsets = [0, 256], sizes = [8, 128], strides = [1, 1]} : vector<8x384xf32> to vector<8x128xf32>
    %104 = arith.addf %103, %10 : vector<8x128xf32>
    %105 = arith.mulf %93, %104 : vector<8x128xf32>
    %106 = arith.addf %102, %105 : vector<8x128xf32>
    %107 = math.tanh %106 : vector<8x128xf32>
    %cst_32 = arith.constant 1.000000e+00 : f32
    %108 = vector.broadcast %cst_32 : f32 to vector<8x128xf32>
    %109 = arith.subf %108, %101 : vector<8x128xf32>
    %110 = arith.mulf %109, %107 : vector<8x128xf32>
    %111 = arith.mulf %101, %78 : vector<8x128xf32>
    %112 = arith.addf %110, %111 : vector<8x128xf32>
    %113 = arith.index_cast %82 : i32 to index
    %c0_33 = arith.constant 0 : index
    %114 = vector.load %arg10[%113, %c0_33] : memref<64x128xf32, #tpu.memory_space<vmem>>, vector<8x128xf32>
    tpu.vector_store %arg10[%113, %c0_33], %112 {strides = array<i32>} : memref<64x128xf32, #tpu.memory_space<vmem>>, vector<8x128xf32>,
    %c3_i32 = arith.constant 3 : i32
    %c8_i32_34 = arith.constant 8 : i32
    %115 = arith.muli %c3_i32, %c8_i32_34 : i32
    %116 = tpu.assume_multiple %115, 8 : i32
    %117 = arith.index_cast %116 : i32 to index
    %c0_35 = arith.constant 0 : index
    %118 = vector.load %arg12[%117, %c0_35] : memref<64x384xf32, #tpu.memory_space<vmem>>, vector<8x384xf32>
    %cst_36 = arith.constant dense<0.000000e+00> : vector<8x384xf32>
    %119 = tpu.matmul %112, %7, %cst_36 {dimension_numbers = #tpu.dot_dimension_numbers<[1], [0], [0], [1], [0, 0, 1, 1], [], []>} : vector<8x128xf32>, vector<128x384xf32>, vector<8x384xf32> -> vector<8x384xf32>
    %120 = vector.extract_strided_slice %118 {offsets = [0, 0], sizes = [8, 128], strides = [1, 1]} : vector<8x384xf32> to vector<8x128xf32>
    %121 = vector.extract_strided_slice %119 {offsets = [0, 0], sizes = [8, 128], strides = [1, 1]} : vector<8x384xf32> to vector<8x128xf32>
    %122 = arith.addf %120, %121 : vector<8x128xf32>
    %123 = arith.negf %122 : vector<8x128xf32>
    %124 = math.exp %123 : vector<8x128xf32>
    %cst_37 = arith.constant 1.000000e+00 : f32
    %125 = vector.broadcast %cst_37 : f32 to vector<8x128xf32>
    %126 = arith.addf %125, %124 : vector<8x128xf32>
    %127 = arith.divf %125, %126 : vector<8x128xf32>
    %128 = vector.extract_strided_slice %118 {offsets = [0, 128], sizes = [8, 128], strides = [1, 1]} : vector<8x384xf32> to vector<8x128xf32>
    %129 = vector.extract_strided_slice %119 {offsets = [0, 128], sizes = [8, 128], strides = [1, 1]} : vector<8x384xf32> to vector<8x128xf32>
    %130 = arith.addf %128, %129 : vector<8x128xf32>
    %131 = arith.negf %130 : vector<8x128xf32>
    %132 = math.exp %131 : vector<8x128xf32>
    %cst_38 = arith.constant 1.000000e+00 : f32
    %133 = vector.broadcast %cst_38 : f32 to vector<8x128xf32>
    %134 = arith.addf %133, %132 : vector<8x128xf32>
    %135 = arith.divf %133, %134 : vector<8x128xf32>
    %136 = vector.extract_strided_slice %118 {offsets = [0, 256], sizes = [8, 128], strides = [1, 1]} : vector<8x384xf32> to vector<8x128xf32>
    %137 = vector.extract_strided_slice %119 {offsets = [0, 256], sizes = [8, 128], strides = [1, 1]} : vector<8x384xf32> to vector<8x128xf32>
    %138 = arith.addf %137, %10 : vector<8x128xf32>
    %139 = arith.mulf %127, %138 : vector<8x128xf32>
    %140 = arith.addf %136, %139 : vector<8x128xf32>
    %141 = math.tanh %140 : vector<8x128xf32>
    %cst_39 = arith.constant 1.000000e+00 : f32
    %142 = vector.broadcast %cst_39 : f32 to vector<8x128xf32>
    %143 = arith.subf %142, %135 : vector<8x128xf32>
    %144 = arith.mulf %143, %141 : vector<8x128xf32>
    %145 = arith.mulf %135, %112 : vector<8x128xf32>
    %146 = arith.addf %144, %145 : vector<8x128xf32>
    %147 = arith.index_cast %116 : i32 to index
    %c0_40 = arith.constant 0 : index
    %148 = vector.load %arg10[%147, %c0_40] : memref<64x128xf32, #tpu.memory_space<vmem>>, vector<8x128xf32>
    tpu.vector_store %arg10[%147, %c0_40], %146 {strides = array<i32>} : memref<64x128xf32, #tpu.memory_space<vmem>>, vector<8x128xf32>,
    %c4_i32 = arith.constant 4 : i32
    %c8_i32_41 = arith.constant 8 : i32
    %149 = arith.muli %c4_i32, %c8_i32_41 : i32
    %150 = tpu.assume_multiple %149, 8 : i32
    %151 = arith.index_cast %150 : i32 to index
    %c0_42 = arith.constant 0 : index
    %152 = vector.load %arg12[%151, %c0_42] : memref<64x384xf32, #tpu.memory_space<vmem>>, vector<8x384xf32>
    %cst_43 = arith.constant dense<0.000000e+00> : vector<8x384xf32>
    %153 = tpu.matmul %146, %7, %cst_43 {dimension_numbers = #tpu.dot_dimension_numbers<[1], [0], [0], [1], [0, 0, 1, 1], [], []>} : vector<8x128xf32>, vector<128x384xf32>, vector<8x384xf32> -> vector<8x384xf32>
    %154 = vector.extract_strided_slice %152 {offsets = [0, 0], sizes = [8, 128], strides = [1, 1]} : vector<8x384xf32> to vector<8x128xf32>
    %155 = vector.extract_strided_slice %153 {offsets = [0, 0], sizes = [8, 128], strides = [1, 1]} : vector<8x384xf32> to vector<8x128xf32>
    %156 = arith.addf %154, %155 : vector<8x128xf32>
    %157 = arith.negf %156 : vector<8x128xf32>
    %158 = math.exp %157 : vector<8x128xf32>
    %cst_44 = arith.constant 1.000000e+00 : f32
    %159 = vector.broadcast %cst_44 : f32 to vector<8x128xf32>
    %160 = arith.addf %159, %158 : vector<8x128xf32>
    %161 = arith.divf %159, %160 : vector<8x128xf32>
    %162 = vector.extract_strided_slice %152 {offsets = [0, 128], sizes = [8, 128], strides = [1, 1]} : vector<8x384xf32> to vector<8x128xf32>
    %163 = vector.extract_strided_slice %153 {offsets = [0, 128], sizes = [8, 128], strides = [1, 1]} : vector<8x384xf32> to vector<8x128xf32>
    %164 = arith.addf %162, %163 : vector<8x128xf32>
    %165 = arith.negf %164 : vector<8x128xf32>
    %166 = math.exp %165 : vector<8x128xf32>
    %cst_45 = arith.constant 1.000000e+00 : f32
    %167 = vector.broadcast %cst_45 : f32 to vector<8x128xf32>
    %168 = arith.addf %167, %166 : vector<8x128xf32>
    %169 = arith.divf %167, %168 : vector<8x128xf32>
    %170 = vector.extract_strided_slice %152 {offsets = [0, 256], sizes = [8, 128], strides = [1, 1]} : vector<8x384xf32> to vector<8x128xf32>
    %171 = vector.extract_strided_slice %153 {offsets = [0, 256], sizes = [8, 128], strides = [1, 1]} : vector<8x384xf32> to vector<8x128xf32>
    %172 = arith.addf %171, %10 : vector<8x128xf32>
    %173 = arith.mulf %161, %172 : vector<8x128xf32>
    %174 = arith.addf %170, %173 : vector<8x128xf32>
    %175 = math.tanh %174 : vector<8x128xf32>
    %cst_46 = arith.constant 1.000000e+00 : f32
    %176 = vector.broadcast %cst_46 : f32 to vector<8x128xf32>
    %177 = arith.subf %176, %169 : vector<8x128xf32>
    %178 = arith.mulf %177, %175 : vector<8x128xf32>
    %179 = arith.mulf %169, %146 : vector<8x128xf32>
    %180 = arith.addf %178, %179 : vector<8x128xf32>
    %181 = arith.index_cast %150 : i32 to index
    %c0_47 = arith.constant 0 : index
    %182 = vector.load %arg10[%181, %c0_47] : memref<64x128xf32, #tpu.memory_space<vmem>>, vector<8x128xf32>
    tpu.vector_store %arg10[%181, %c0_47], %180 {strides = array<i32>} : memref<64x128xf32, #tpu.memory_space<vmem>>, vector<8x128xf32>,
    %c5_i32 = arith.constant 5 : i32
    %c8_i32_48 = arith.constant 8 : i32
    %183 = arith.muli %c5_i32, %c8_i32_48 : i32
    %184 = tpu.assume_multiple %183, 8 : i32
    %185 = arith.index_cast %184 : i32 to index
    %c0_49 = arith.constant 0 : index
    %186 = vector.load %arg12[%185, %c0_49] : memref<64x384xf32, #tpu.memory_space<vmem>>, vector<8x384xf32>
    %cst_50 = arith.constant dense<0.000000e+00> : vector<8x384xf32>
    %187 = tpu.matmul %180, %7, %cst_50 {dimension_numbers = #tpu.dot_dimension_numbers<[1], [0], [0], [1], [0, 0, 1, 1], [], []>} : vector<8x128xf32>, vector<128x384xf32>, vector<8x384xf32> -> vector<8x384xf32>
    %188 = vector.extract_strided_slice %186 {offsets = [0, 0], sizes = [8, 128], strides = [1, 1]} : vector<8x384xf32> to vector<8x128xf32>
    %189 = vector.extract_strided_slice %187 {offsets = [0, 0], sizes = [8, 128], strides = [1, 1]} : vector<8x384xf32> to vector<8x128xf32>
    %190 = arith.addf %188, %189 : vector<8x128xf32>
    %191 = arith.negf %190 : vector<8x128xf32>
    %192 = math.exp %191 : vector<8x128xf32>
    %cst_51 = arith.constant 1.000000e+00 : f32
    %193 = vector.broadcast %cst_51 : f32 to vector<8x128xf32>
    %194 = arith.addf %193, %192 : vector<8x128xf32>
    %195 = arith.divf %193, %194 : vector<8x128xf32>
    %196 = vector.extract_strided_slice %186 {offsets = [0, 128], sizes = [8, 128], strides = [1, 1]} : vector<8x384xf32> to vector<8x128xf32>
    %197 = vector.extract_strided_slice %187 {offsets = [0, 128], sizes = [8, 128], strides = [1, 1]} : vector<8x384xf32> to vector<8x128xf32>
    %198 = arith.addf %196, %197 : vector<8x128xf32>
    %199 = arith.negf %198 : vector<8x128xf32>
    %200 = math.exp %199 : vector<8x128xf32>
    %cst_52 = arith.constant 1.000000e+00 : f32
    %201 = vector.broadcast %cst_52 : f32 to vector<8x128xf32>
    %202 = arith.addf %201, %200 : vector<8x128xf32>
    %203 = arith.divf %201, %202 : vector<8x128xf32>
    %204 = vector.extract_strided_slice %186 {offsets = [0, 256], sizes = [8, 128], strides = [1, 1]} : vector<8x384xf32> to vector<8x128xf32>
    %205 = vector.extract_strided_slice %187 {offsets = [0, 256], sizes = [8, 128], strides = [1, 1]} : vector<8x384xf32> to vector<8x128xf32>
    %206 = arith.addf %205, %10 : vector<8x128xf32>
    %207 = arith.mulf %195, %206 : vector<8x128xf32>
    %208 = arith.addf %204, %207 : vector<8x128xf32>
    %209 = math.tanh %208 : vector<8x128xf32>
    %cst_53 = arith.constant 1.000000e+00 : f32
    %210 = vector.broadcast %cst_53 : f32 to vector<8x128xf32>
    %211 = arith.subf %210, %203 : vector<8x128xf32>
    %212 = arith.mulf %211, %209 : vector<8x128xf32>
    %213 = arith.mulf %203, %180 : vector<8x128xf32>
    %214 = arith.addf %212, %213 : vector<8x128xf32>
    %215 = arith.index_cast %184 : i32 to index
    %c0_54 = arith.constant 0 : index
    %216 = vector.load %arg10[%215, %c0_54] : memref<64x128xf32, #tpu.memory_space<vmem>>, vector<8x128xf32>
    tpu.vector_store %arg10[%215, %c0_54], %214 {strides = array<i32>} : memref<64x128xf32, #tpu.memory_space<vmem>>, vector<8x128xf32>,
    %c6_i32 = arith.constant 6 : i32
    %c8_i32_55 = arith.constant 8 : i32
    %217 = arith.muli %c6_i32, %c8_i32_55 : i32
    %218 = tpu.assume_multiple %217, 8 : i32
    %219 = arith.index_cast %218 : i32 to index
    %c0_56 = arith.constant 0 : index
    %220 = vector.load %arg12[%219, %c0_56] : memref<64x384xf32, #tpu.memory_space<vmem>>, vector<8x384xf32>
    %cst_57 = arith.constant dense<0.000000e+00> : vector<8x384xf32>
    %221 = tpu.matmul %214, %7, %cst_57 {dimension_numbers = #tpu.dot_dimension_numbers<[1], [0], [0], [1], [0, 0, 1, 1], [], []>} : vector<8x128xf32>, vector<128x384xf32>, vector<8x384xf32> -> vector<8x384xf32>
    %222 = vector.extract_strided_slice %220 {offsets = [0, 0], sizes = [8, 128], strides = [1, 1]} : vector<8x384xf32> to vector<8x128xf32>
    %223 = vector.extract_strided_slice %221 {offsets = [0, 0], sizes = [8, 128], strides = [1, 1]} : vector<8x384xf32> to vector<8x128xf32>
    %224 = arith.addf %222, %223 : vector<8x128xf32>
    %225 = arith.negf %224 : vector<8x128xf32>
    %226 = math.exp %225 : vector<8x128xf32>
    %cst_58 = arith.constant 1.000000e+00 : f32
    %227 = vector.broadcast %cst_58 : f32 to vector<8x128xf32>
    %228 = arith.addf %227, %226 : vector<8x128xf32>
    %229 = arith.divf %227, %228 : vector<8x128xf32>
    %230 = vector.extract_strided_slice %220 {offsets = [0, 128], sizes = [8, 128], strides = [1, 1]} : vector<8x384xf32> to vector<8x128xf32>
    %231 = vector.extract_strided_slice %221 {offsets = [0, 128], sizes = [8, 128], strides = [1, 1]} : vector<8x384xf32> to vector<8x128xf32>
    %232 = arith.addf %230, %231 : vector<8x128xf32>
    %233 = arith.negf %232 : vector<8x128xf32>
    %234 = math.exp %233 : vector<8x128xf32>
    %cst_59 = arith.constant 1.000000e+00 : f32
    %235 = vector.broadcast %cst_59 : f32 to vector<8x128xf32>
    %236 = arith.addf %235, %234 : vector<8x128xf32>
    %237 = arith.divf %235, %236 : vector<8x128xf32>
    %238 = vector.extract_strided_slice %220 {offsets = [0, 256], sizes = [8, 128], strides = [1, 1]} : vector<8x384xf32> to vector<8x128xf32>
    %239 = vector.extract_strided_slice %221 {offsets = [0, 256], sizes = [8, 128], strides = [1, 1]} : vector<8x384xf32> to vector<8x128xf32>
    %240 = arith.addf %239, %10 : vector<8x128xf32>
    %241 = arith.mulf %229, %240 : vector<8x128xf32>
    %242 = arith.addf %238, %241 : vector<8x128xf32>
    %243 = math.tanh %242 : vector<8x128xf32>
    %cst_60 = arith.constant 1.000000e+00 : f32
    %244 = vector.broadcast %cst_60 : f32 to vector<8x128xf32>
    %245 = arith.subf %244, %237 : vector<8x128xf32>
    %246 = arith.mulf %245, %243 : vector<8x128xf32>
    %247 = arith.mulf %237, %214 : vector<8x128xf32>
    %248 = arith.addf %246, %247 : vector<8x128xf32>
    %249 = arith.index_cast %218 : i32 to index
    %c0_61 = arith.constant 0 : index
    %250 = vector.load %arg10[%249, %c0_61] : memref<64x128xf32, #tpu.memory_space<vmem>>, vector<8x128xf32>
    tpu.vector_store %arg10[%249, %c0_61], %248 {strides = array<i32>} : memref<64x128xf32, #tpu.memory_space<vmem>>, vector<8x128xf32>,
    %c7_i32 = arith.constant 7 : i32
    %c8_i32_62 = arith.constant 8 : i32
    %251 = arith.muli %c7_i32, %c8_i32_62 : i32
    %252 = tpu.assume_multiple %251, 8 : i32
    %253 = arith.index_cast %252 : i32 to index
    %c0_63 = arith.constant 0 : index
    %254 = vector.load %arg12[%253, %c0_63] : memref<64x384xf32, #tpu.memory_space<vmem>>, vector<8x384xf32>
    %cst_64 = arith.constant dense<0.000000e+00> : vector<8x384xf32>
    %255 = tpu.matmul %248, %7, %cst_64 {dimension_numbers = #tpu.dot_dimension_numbers<[1], [0], [0], [1], [0, 0, 1, 1], [], []>} : vector<8x128xf32>, vector<128x384xf32>, vector<8x384xf32> -> vector<8x384xf32>
    %256 = vector.extract_strided_slice %254 {offsets = [0, 0], sizes = [8, 128], strides = [1, 1]} : vector<8x384xf32> to vector<8x128xf32>
    %257 = vector.extract_strided_slice %255 {offsets = [0, 0], sizes = [8, 128], strides = [1, 1]} : vector<8x384xf32> to vector<8x128xf32>
    %258 = arith.addf %256, %257 : vector<8x128xf32>
    %259 = arith.negf %258 : vector<8x128xf32>
    %260 = math.exp %259 : vector<8x128xf32>
    %cst_65 = arith.constant 1.000000e+00 : f32
    %261 = vector.broadcast %cst_65 : f32 to vector<8x128xf32>
    %262 = arith.addf %261, %260 : vector<8x128xf32>
    %263 = arith.divf %261, %262 : vector<8x128xf32>
    %264 = vector.extract_strided_slice %254 {offsets = [0, 128], sizes = [8, 128], strides = [1, 1]} : vector<8x384xf32> to vector<8x128xf32>
    %265 = vector.extract_strided_slice %255 {offsets = [0, 128], sizes = [8, 128], strides = [1, 1]} : vector<8x384xf32> to vector<8x128xf32>
    %266 = arith.addf %264, %265 : vector<8x128xf32>
    %267 = arith.negf %266 : vector<8x128xf32>
    %268 = math.exp %267 : vector<8x128xf32>
    %cst_66 = arith.constant 1.000000e+00 : f32
    %269 = vector.broadcast %cst_66 : f32 to vector<8x128xf32>
    %270 = arith.addf %269, %268 : vector<8x128xf32>
    %271 = arith.divf %269, %270 : vector<8x128xf32>
    %272 = vector.extract_strided_slice %254 {offsets = [0, 256], sizes = [8, 128], strides = [1, 1]} : vector<8x384xf32> to vector<8x128xf32>
    %273 = vector.extract_strided_slice %255 {offsets = [0, 256], sizes = [8, 128], strides = [1, 1]} : vector<8x384xf32> to vector<8x128xf32>
    %274 = arith.addf %273, %10 : vector<8x128xf32>
    %275 = arith.mulf %263, %274 : vector<8x128xf32>
    %276 = arith.addf %272, %275 : vector<8x128xf32>
    %277 = math.tanh %276 : vector<8x128xf32>
    %cst_67 = arith.constant 1.000000e+00 : f32
    %278 = vector.broadcast %cst_67 : f32 to vector<8x128xf32>
    %279 = arith.subf %278, %271 : vector<8x128xf32>
    %280 = arith.mulf %279, %277 : vector<8x128xf32>
    %281 = arith.mulf %271, %248 : vector<8x128xf32>
    %282 = arith.addf %280, %281 : vector<8x128xf32>
    %283 = arith.index_cast %252 : i32 to index
    %c0_68 = arith.constant 0 : index
    %284 = vector.load %arg10[%283, %c0_68] : memref<64x128xf32, #tpu.memory_space<vmem>>, vector<8x128xf32>
    tpu.vector_store %arg10[%283, %c0_68], %282 {strides = array<i32>} : memref<64x128xf32, #tpu.memory_space<vmem>>, vector<8x128xf32>,
    %c8_i32_69 = arith.constant 8 : i32
    %c0_70 = arith.constant 0 : index
    %c0_71 = arith.constant 0 : index
    %c0_72 = arith.constant 0 : index
    %285 = vector.load %arg11[%c0_70, %c0_71, %c0_72] : memref<2x8x128xf32, #tpu.memory_space<vmem>>, vector<1x8x128xf32>
    %286 = vector.shape_cast %285 : vector<1x8x128xf32> to vector<8x128xf32>
    %287 = vector.shape_cast %282 : vector<8x128xf32> to vector<1x8x128xf32>
    tpu.vector_store %arg11[%c0_70, %c0_71, %c0_72], %287 {strides = array<i32>} : memref<2x8x128xf32, #tpu.memory_space<vmem>>, vector<1x8x128xf32>,
    %c0_73 = arith.constant 0 : index
    %c0_74 = arith.constant 0 : index
    %288 = vector.load %arg10[%c0_73, %c0_74] : memref<64x128xf32, #tpu.memory_space<vmem>>, vector<64x128xf32>
    %c0_75 = arith.constant 0 : index
    %c0_76 = arith.constant 0 : index
    %289 = vector.load %arg6[%c0_75, %c0_76] : memref<128x384xf32, #tpu.memory_space<vmem>>, vector<128x384xf32>
    %cst_77 = arith.constant dense<0.000000e+00> : vector<64x384xf32>
    %290 = tpu.matmul %288, %289, %cst_77 {dimension_numbers = #tpu.dot_dimension_numbers<[1], [0], [0], [1], [0, 0, 1, 1], [], []>} : vector<64x128xf32>, vector<128x384xf32>, vector<64x384xf32> -> vector<64x384xf32>
    %c0_78 = arith.constant 0 : index
    %c0_79 = arith.constant 0 : index
    %291 = vector.load %arg8[%c0_78, %c0_79] : memref<1x384xf32, #tpu.memory_space<vmem>>, vector<1x384xf32>
    %292 = vector.broadcast %291 : vector<1x384xf32> to vector<64x384xf32>
    %293 = arith.addf %290, %292 : vector<64x384xf32>
    %c0_80 = arith.constant 0 : index
    %c0_81 = arith.constant 0 : index
    %294 = vector.load %arg12[%c0_80, %c0_81] : memref<64x384xf32, #tpu.memory_space<vmem>>, vector<64x384xf32>
    tpu.vector_store %arg12[%c0_80, %c0_81], %293 {strides = array<i32>} : memref<64x384xf32, #tpu.memory_space<vmem>>, vector<64x384xf32>,
    %c0_82 = arith.constant 0 : index
    %c0_83 = arith.constant 0 : index
    %295 = vector.load %arg7[%c0_82, %c0_83] : memref<128x384xf32, #tpu.memory_space<vmem>>, vector<128x384xf32>
    %c0_84 = arith.constant 0 : index
    %c0_85 = arith.constant 0 : index
    %296 = vector.load %arg9[%c0_84, %c0_85] : memref<1x128xf32, #tpu.memory_space<vmem>>, vector<1x128xf32>
    %297 = vector.shape_cast %296 : vector<1x128xf32> to vector<1x128xf32>
    %298 = vector.broadcast %297 : vector<1x128xf32> to vector<8x128xf32>
    %c1 = arith.constant 1 : index
    %c0_86 = arith.constant 0 : index
    %c0_87 = arith.constant 0 : index
    %299 = vector.load %arg1[%c1, %c0_86, %c0_87] : memref<2x8x128xf32, #tpu.memory_space<vmem>>, vector<1x8x128xf32>
    %300 = vector.shape_cast %299 : vector<1x8x128xf32> to vector<8x128xf32>
    %c0_i32_88 = arith.constant 0 : i32
    %c8_i32_89 = arith.constant 8 : i32
    %301 = arith.muli %c0_i32_88, %c8_i32_89 : i32
    %302 = tpu.assume_multiple %301, 8 : i32
    %303 = arith.index_cast %302 : i32 to index
    %c0_90 = arith.constant 0 : index
    %304 = vector.load %arg12[%303, %c0_90] : memref<64x384xf32, #tpu.memory_space<vmem>>, vector<8x384xf32>
    %cst_91 = arith.constant dense<0.000000e+00> : vector<8x384xf32>
    %305 = tpu.matmul %300, %295, %cst_91 {dimension_numbers = #tpu.dot_dimension_numbers<[1], [0], [0], [1], [0, 0, 1, 1], [], []>} : vector<8x128xf32>, vector<128x384xf32>, vector<8x384xf32> -> vector<8x384xf32>
    %306 = vector.extract_strided_slice %304 {offsets = [0, 0], sizes = [8, 128], strides = [1, 1]} : vector<8x384xf32> to vector<8x128xf32>
    %307 = vector.extract_strided_slice %305 {offsets = [0, 0], sizes = [8, 128], strides = [1, 1]} : vector<8x384xf32> to vector<8x128xf32>
    %308 = arith.addf %306, %307 : vector<8x128xf32>
    %309 = arith.negf %308 : vector<8x128xf32>
    %310 = math.exp %309 : vector<8x128xf32>
    %cst_92 = arith.constant 1.000000e+00 : f32
    %311 = vector.broadcast %cst_92 : f32 to vector<8x128xf32>
    %312 = arith.addf %311, %310 : vector<8x128xf32>
    %313 = arith.divf %311, %312 : vector<8x128xf32>
    %314 = vector.extract_strided_slice %304 {offsets = [0, 128], sizes = [8, 128], strides = [1, 1]} : vector<8x384xf32> to vector<8x128xf32>
    %315 = vector.extract_strided_slice %305 {offsets = [0, 128], sizes = [8, 128], strides = [1, 1]} : vector<8x384xf32> to vector<8x128xf32>
    %316 = arith.addf %314, %315 : vector<8x128xf32>
    %317 = arith.negf %316 : vector<8x128xf32>
    %318 = math.exp %317 : vector<8x128xf32>
    %cst_93 = arith.constant 1.000000e+00 : f32
    %319 = vector.broadcast %cst_93 : f32 to vector<8x128xf32>
    %320 = arith.addf %319, %318 : vector<8x128xf32>
    %321 = arith.divf %319, %320 : vector<8x128xf32>
    %322 = vector.extract_strided_slice %304 {offsets = [0, 256], sizes = [8, 128], strides = [1, 1]} : vector<8x384xf32> to vector<8x128xf32>
    %323 = vector.extract_strided_slice %305 {offsets = [0, 256], sizes = [8, 128], strides = [1, 1]} : vector<8x384xf32> to vector<8x128xf32>
    %324 = arith.addf %323, %298 : vector<8x128xf32>
    %325 = arith.mulf %313, %324 : vector<8x128xf32>
    %326 = arith.addf %322, %325 : vector<8x128xf32>
    %327 = math.tanh %326 : vector<8x128xf32>
    %cst_94 = arith.constant 1.000000e+00 : f32
    %328 = vector.broadcast %cst_94 : f32 to vector<8x128xf32>
    %329 = arith.subf %328, %321 : vector<8x128xf32>
    %330 = arith.mulf %329, %327 : vector<8x128xf32>
    %331 = arith.mulf %321, %300 : vector<8x128xf32>
    %332 = arith.addf %330, %331 : vector<8x128xf32>
    %333 = arith.index_cast %302 : i32 to index
    %c0_95 = arith.constant 0 : index
    %334 = vector.load %arg10[%333, %c0_95] : memref<64x128xf32, #tpu.memory_space<vmem>>, vector<8x128xf32>
    tpu.vector_store %arg10[%333, %c0_95], %332 {strides = array<i32>} : memref<64x128xf32, #tpu.memory_space<vmem>>, vector<8x128xf32>,
    %c1_i32_96 = arith.constant 1 : i32
    %c8_i32_97 = arith.constant 8 : i32
    %335 = arith.muli %c1_i32_96, %c8_i32_97 : i32
    %336 = tpu.assume_multiple %335, 8 : i32
    %337 = arith.index_cast %336 : i32 to index
    %c0_98 = arith.constant 0 : index
    %338 = vector.load %arg12[%337, %c0_98] : memref<64x384xf32, #tpu.memory_space<vmem>>, vector<8x384xf32>
    %cst_99 = arith.constant dense<0.000000e+00> : vector<8x384xf32>
    %339 = tpu.matmul %332, %295, %cst_99 {dimension_numbers = #tpu.dot_dimension_numbers<[1], [0], [0], [1], [0, 0, 1, 1], [], []>} : vector<8x128xf32>, vector<128x384xf32>, vector<8x384xf32> -> vector<8x384xf32>
    %340 = vector.extract_strided_slice %338 {offsets = [0, 0], sizes = [8, 128], strides = [1, 1]} : vector<8x384xf32> to vector<8x128xf32>
    %341 = vector.extract_strided_slice %339 {offsets = [0, 0], sizes = [8, 128], strides = [1, 1]} : vector<8x384xf32> to vector<8x128xf32>
    %342 = arith.addf %340, %341 : vector<8x128xf32>
    %343 = arith.negf %342 : vector<8x128xf32>
    %344 = math.exp %343 : vector<8x128xf32>
    %cst_100 = arith.constant 1.000000e+00 : f32
    %345 = vector.broadcast %cst_100 : f32 to vector<8x128xf32>
    %346 = arith.addf %345, %344 : vector<8x128xf32>
    %347 = arith.divf %345, %346 : vector<8x128xf32>
    %348 = vector.extract_strided_slice %338 {offsets = [0, 128], sizes = [8, 128], strides = [1, 1]} : vector<8x384xf32> to vector<8x128xf32>
    %349 = vector.extract_strided_slice %339 {offsets = [0, 128], sizes = [8, 128], strides = [1, 1]} : vector<8x384xf32> to vector<8x128xf32>
    %350 = arith.addf %348, %349 : vector<8x128xf32>
    %351 = arith.negf %350 : vector<8x128xf32>
    %352 = math.exp %351 : vector<8x128xf32>
    %cst_101 = arith.constant 1.000000e+00 : f32
    %353 = vector.broadcast %cst_101 : f32 to vector<8x128xf32>
    %354 = arith.addf %353, %352 : vector<8x128xf32>
    %355 = arith.divf %353, %354 : vector<8x128xf32>
    %356 = vector.extract_strided_slice %338 {offsets = [0, 256], sizes = [8, 128], strides = [1, 1]} : vector<8x384xf32> to vector<8x128xf32>
    %357 = vector.extract_strided_slice %339 {offsets = [0, 256], sizes = [8, 128], strides = [1, 1]} : vector<8x384xf32> to vector<8x128xf32>
    %358 = arith.addf %357, %298 : vector<8x128xf32>
    %359 = arith.mulf %347, %358 : vector<8x128xf32>
    %360 = arith.addf %356, %359 : vector<8x128xf32>
    %361 = math.tanh %360 : vector<8x128xf32>
    %cst_102 = arith.constant 1.000000e+00 : f32
    %362 = vector.broadcast %cst_102 : f32 to vector<8x128xf32>
    %363 = arith.subf %362, %355 : vector<8x128xf32>
    %364 = arith.mulf %363, %361 : vector<8x128xf32>
    %365 = arith.mulf %355, %332 : vector<8x128xf32>
    %366 = arith.addf %364, %365 : vector<8x128xf32>
    %367 = arith.index_cast %336 : i32 to index
    %c0_103 = arith.constant 0 : index
    %368 = vector.load %arg10[%367, %c0_103] : memref<64x128xf32, #tpu.memory_space<vmem>>, vector<8x128xf32>
    tpu.vector_store %arg10[%367, %c0_103], %366 {strides = array<i32>} : memref<64x128xf32, #tpu.memory_space<vmem>>, vector<8x128xf32>,
    %c2_i32_104 = arith.constant 2 : i32
    %c8_i32_105 = arith.constant 8 : i32
    %369 = arith.muli %c2_i32_104, %c8_i32_105 : i32
    %370 = tpu.assume_multiple %369, 8 : i32
    %371 = arith.index_cast %370 : i32 to index
    %c0_106 = arith.constant 0 : index
    %372 = vector.load %arg12[%371, %c0_106] : memref<64x384xf32, #tpu.memory_space<vmem>>, vector<8x384xf32>
    %cst_107 = arith.constant dense<0.000000e+00> : vector<8x384xf32>
    %373 = tpu.matmul %366, %295, %cst_107 {dimension_numbers = #tpu.dot_dimension_numbers<[1], [0], [0], [1], [0, 0, 1, 1], [], []>} : vector<8x128xf32>, vector<128x384xf32>, vector<8x384xf32> -> vector<8x384xf32>
    %374 = vector.extract_strided_slice %372 {offsets = [0, 0], sizes = [8, 128], strides = [1, 1]} : vector<8x384xf32> to vector<8x128xf32>
    %375 = vector.extract_strided_slice %373 {offsets = [0, 0], sizes = [8, 128], strides = [1, 1]} : vector<8x384xf32> to vector<8x128xf32>
    %376 = arith.addf %374, %375 : vector<8x128xf32>
    %377 = arith.negf %376 : vector<8x128xf32>
    %378 = math.exp %377 : vector<8x128xf32>
    %cst_108 = arith.constant 1.000000e+00 : f32
    %379 = vector.broadcast %cst_108 : f32 to vector<8x128xf32>
    %380 = arith.addf %379, %378 : vector<8x128xf32>
    %381 = arith.divf %379, %380 : vector<8x128xf32>
    %382 = vector.extract_strided_slice %372 {offsets = [0, 128], sizes = [8, 128], strides = [1, 1]} : vector<8x384xf32> to vector<8x128xf32>
    %383 = vector.extract_strided_slice %373 {offsets = [0, 128], sizes = [8, 128], strides = [1, 1]} : vector<8x384xf32> to vector<8x128xf32>
    %384 = arith.addf %382, %383 : vector<8x128xf32>
    %385 = arith.negf %384 : vector<8x128xf32>
    %386 = math.exp %385 : vector<8x128xf32>
    %cst_109 = arith.constant 1.000000e+00 : f32
    %387 = vector.broadcast %cst_109 : f32 to vector<8x128xf32>
    %388 = arith.addf %387, %386 : vector<8x128xf32>
    %389 = arith.divf %387, %388 : vector<8x128xf32>
    %390 = vector.extract_strided_slice %372 {offsets = [0, 256], sizes = [8, 128], strides = [1, 1]} : vector<8x384xf32> to vector<8x128xf32>
    %391 = vector.extract_strided_slice %373 {offsets = [0, 256], sizes = [8, 128], strides = [1, 1]} : vector<8x384xf32> to vector<8x128xf32>
    %392 = arith.addf %391, %298 : vector<8x128xf32>
    %393 = arith.mulf %381, %392 : vector<8x128xf32>
    %394 = arith.addf %390, %393 : vector<8x128xf32>
    %395 = math.tanh %394 : vector<8x128xf32>
    %cst_110 = arith.constant 1.000000e+00 : f32
    %396 = vector.broadcast %cst_110 : f32 to vector<8x128xf32>
    %397 = arith.subf %396, %389 : vector<8x128xf32>
    %398 = arith.mulf %397, %395 : vector<8x128xf32>
    %399 = arith.mulf %389, %366 : vector<8x128xf32>
    %400 = arith.addf %398, %399 : vector<8x128xf32>
    %401 = arith.index_cast %370 : i32 to index
    %c0_111 = arith.constant 0 : index
    %402 = vector.load %arg10[%401, %c0_111] : memref<64x128xf32, #tpu.memory_space<vmem>>, vector<8x128xf32>
    tpu.vector_store %arg10[%401, %c0_111], %400 {strides = array<i32>} : memref<64x128xf32, #tpu.memory_space<vmem>>, vector<8x128xf32>,
    %c3_i32_112 = arith.constant 3 : i32
    %c8_i32_113 = arith.constant 8 : i32
    %403 = arith.muli %c3_i32_112, %c8_i32_113 : i32
    %404 = tpu.assume_multiple %403, 8 : i32
    %405 = arith.index_cast %404 : i32 to index
    %c0_114 = arith.constant 0 : index
    %406 = vector.load %arg12[%405, %c0_114] : memref<64x384xf32, #tpu.memory_space<vmem>>, vector<8x384xf32>
    %cst_115 = arith.constant dense<0.000000e+00> : vector<8x384xf32>
    %407 = tpu.matmul %400, %295, %cst_115 {dimension_numbers = #tpu.dot_dimension_numbers<[1], [0], [0], [1], [0, 0, 1, 1], [], []>} : vector<8x128xf32>, vector<128x384xf32>, vector<8x384xf32> -> vector<8x384xf32>
    %408 = vector.extract_strided_slice %406 {offsets = [0, 0], sizes = [8, 128], strides = [1, 1]} : vector<8x384xf32> to vector<8x128xf32>
    %409 = vector.extract_strided_slice %407 {offsets = [0, 0], sizes = [8, 128], strides = [1, 1]} : vector<8x384xf32> to vector<8x128xf32>
    %410 = arith.addf %408, %409 : vector<8x128xf32>
    %411 = arith.negf %410 : vector<8x128xf32>
    %412 = math.exp %411 : vector<8x128xf32>
    %cst_116 = arith.constant 1.000000e+00 : f32
    %413 = vector.broadcast %cst_116 : f32 to vector<8x128xf32>
    %414 = arith.addf %413, %412 : vector<8x128xf32>
    %415 = arith.divf %413, %414 : vector<8x128xf32>
    %416 = vector.extract_strided_slice %406 {offsets = [0, 128], sizes = [8, 128], strides = [1, 1]} : vector<8x384xf32> to vector<8x128xf32>
    %417 = vector.extract_strided_slice %407 {offsets = [0, 128], sizes = [8, 128], strides = [1, 1]} : vector<8x384xf32> to vector<8x128xf32>
    %418 = arith.addf %416, %417 : vector<8x128xf32>
    %419 = arith.negf %418 : vector<8x128xf32>
    %420 = math.exp %419 : vector<8x128xf32>
    %cst_117 = arith.constant 1.000000e+00 : f32
    %421 = vector.broadcast %cst_117 : f32 to vector<8x128xf32>
    %422 = arith.addf %421, %420 : vector<8x128xf32>
    %423 = arith.divf %421, %422 : vector<8x128xf32>
    %424 = vector.extract_strided_slice %406 {offsets = [0, 256], sizes = [8, 128], strides = [1, 1]} : vector<8x384xf32> to vector<8x128xf32>
    %425 = vector.extract_strided_slice %407 {offsets = [0, 256], sizes = [8, 128], strides = [1, 1]} : vector<8x384xf32> to vector<8x128xf32>
    %426 = arith.addf %425, %298 : vector<8x128xf32>
    %427 = arith.mulf %415, %426 : vector<8x128xf32>
    %428 = arith.addf %424, %427 : vector<8x128xf32>
    %429 = math.tanh %428 : vector<8x128xf32>
    %cst_118 = arith.constant 1.000000e+00 : f32
    %430 = vector.broadcast %cst_118 : f32 to vector<8x128xf32>
    %431 = arith.subf %430, %423 : vector<8x128xf32>
    %432 = arith.mulf %431, %429 : vector<8x128xf32>
    %433 = arith.mulf %423, %400 : vector<8x128xf32>
    %434 = arith.addf %432, %433 : vector<8x128xf32>
    %435 = arith.index_cast %404 : i32 to index
    %c0_119 = arith.constant 0 : index
    %436 = vector.load %arg10[%435, %c0_119] : memref<64x128xf32, #tpu.memory_space<vmem>>, vector<8x128xf32>
    tpu.vector_store %arg10[%435, %c0_119], %434 {strides = array<i32>} : memref<64x128xf32, #tpu.memory_space<vmem>>, vector<8x128xf32>,
    %c4_i32_120 = arith.constant 4 : i32
    %c8_i32_121 = arith.constant 8 : i32
    %437 = arith.muli %c4_i32_120, %c8_i32_121 : i32
    %438 = tpu.assume_multiple %437, 8 : i32
    %439 = arith.index_cast %438 : i32 to index
    %c0_122 = arith.constant 0 : index
    %440 = vector.load %arg12[%439, %c0_122] : memref<64x384xf32, #tpu.memory_space<vmem>>, vector<8x384xf32>
    %cst_123 = arith.constant dense<0.000000e+00> : vector<8x384xf32>
    %441 = tpu.matmul %434, %295, %cst_123 {dimension_numbers = #tpu.dot_dimension_numbers<[1], [0], [0], [1], [0, 0, 1, 1], [], []>} : vector<8x128xf32>, vector<128x384xf32>, vector<8x384xf32> -> vector<8x384xf32>
    %442 = vector.extract_strided_slice %440 {offsets = [0, 0], sizes = [8, 128], strides = [1, 1]} : vector<8x384xf32> to vector<8x128xf32>
    %443 = vector.extract_strided_slice %441 {offsets = [0, 0], sizes = [8, 128], strides = [1, 1]} : vector<8x384xf32> to vector<8x128xf32>
    %444 = arith.addf %442, %443 : vector<8x128xf32>
    %445 = arith.negf %444 : vector<8x128xf32>
    %446 = math.exp %445 : vector<8x128xf32>
    %cst_124 = arith.constant 1.000000e+00 : f32
    %447 = vector.broadcast %cst_124 : f32 to vector<8x128xf32>
    %448 = arith.addf %447, %446 : vector<8x128xf32>
    %449 = arith.divf %447, %448 : vector<8x128xf32>
    %450 = vector.extract_strided_slice %440 {offsets = [0, 128], sizes = [8, 128], strides = [1, 1]} : vector<8x384xf32> to vector<8x128xf32>
    %451 = vector.extract_strided_slice %441 {offsets = [0, 128], sizes = [8, 128], strides = [1, 1]} : vector<8x384xf32> to vector<8x128xf32>
    %452 = arith.addf %450, %451 : vector<8x128xf32>
    %453 = arith.negf %452 : vector<8x128xf32>
    %454 = math.exp %453 : vector<8x128xf32>
    %cst_125 = arith.constant 1.000000e+00 : f32
    %455 = vector.broadcast %cst_125 : f32 to vector<8x128xf32>
    %456 = arith.addf %455, %454 : vector<8x128xf32>
    %457 = arith.divf %455, %456 : vector<8x128xf32>
    %458 = vector.extract_strided_slice %440 {offsets = [0, 256], sizes = [8, 128], strides = [1, 1]} : vector<8x384xf32> to vector<8x128xf32>
    %459 = vector.extract_strided_slice %441 {offsets = [0, 256], sizes = [8, 128], strides = [1, 1]} : vector<8x384xf32> to vector<8x128xf32>
    %460 = arith.addf %459, %298 : vector<8x128xf32>
    %461 = arith.mulf %449, %460 : vector<8x128xf32>
    %462 = arith.addf %458, %461 : vector<8x128xf32>
    %463 = math.tanh %462 : vector<8x128xf32>
    %cst_126 = arith.constant 1.000000e+00 : f32
    %464 = vector.broadcast %cst_126 : f32 to vector<8x128xf32>
    %465 = arith.subf %464, %457 : vector<8x128xf32>
    %466 = arith.mulf %465, %463 : vector<8x128xf32>
    %467 = arith.mulf %457, %434 : vector<8x128xf32>
    %468 = arith.addf %466, %467 : vector<8x128xf32>
    %469 = arith.index_cast %438 : i32 to index
    %c0_127 = arith.constant 0 : index
    %470 = vector.load %arg10[%469, %c0_127] : memref<64x128xf32, #tpu.memory_space<vmem>>, vector<8x128xf32>
    tpu.vector_store %arg10[%469, %c0_127], %468 {strides = array<i32>} : memref<64x128xf32, #tpu.memory_space<vmem>>, vector<8x128xf32>,
    %c5_i32_128 = arith.constant 5 : i32
    %c8_i32_129 = arith.constant 8 : i32
    %471 = arith.muli %c5_i32_128, %c8_i32_129 : i32
    %472 = tpu.assume_multiple %471, 8 : i32
    %473 = arith.index_cast %472 : i32 to index
    %c0_130 = arith.constant 0 : index
    %474 = vector.load %arg12[%473, %c0_130] : memref<64x384xf32, #tpu.memory_space<vmem>>, vector<8x384xf32>
    %cst_131 = arith.constant dense<0.000000e+00> : vector<8x384xf32>
    %475 = tpu.matmul %468, %295, %cst_131 {dimension_numbers = #tpu.dot_dimension_numbers<[1], [0], [0], [1], [0, 0, 1, 1], [], []>} : vector<8x128xf32>, vector<128x384xf32>, vector<8x384xf32> -> vector<8x384xf32>
    %476 = vector.extract_strided_slice %474 {offsets = [0, 0], sizes = [8, 128], strides = [1, 1]} : vector<8x384xf32> to vector<8x128xf32>
    %477 = vector.extract_strided_slice %475 {offsets = [0, 0], sizes = [8, 128], strides = [1, 1]} : vector<8x384xf32> to vector<8x128xf32>
    %478 = arith.addf %476, %477 : vector<8x128xf32>
    %479 = arith.negf %478 : vector<8x128xf32>
    %480 = math.exp %479 : vector<8x128xf32>
    %cst_132 = arith.constant 1.000000e+00 : f32
    %481 = vector.broadcast %cst_132 : f32 to vector<8x128xf32>
    %482 = arith.addf %481, %480 : vector<8x128xf32>
    %483 = arith.divf %481, %482 : vector<8x128xf32>
    %484 = vector.extract_strided_slice %474 {offsets = [0, 128], sizes = [8, 128], strides = [1, 1]} : vector<8x384xf32> to vector<8x128xf32>
    %485 = vector.extract_strided_slice %475 {offsets = [0, 128], sizes = [8, 128], strides = [1, 1]} : vector<8x384xf32> to vector<8x128xf32>
    %486 = arith.addf %484, %485 : vector<8x128xf32>
    %487 = arith.negf %486 : vector<8x128xf32>
    %488 = math.exp %487 : vector<8x128xf32>
    %cst_133 = arith.constant 1.000000e+00 : f32
    %489 = vector.broadcast %cst_133 : f32 to vector<8x128xf32>
    %490 = arith.addf %489, %488 : vector<8x128xf32>
    %491 = arith.divf %489, %490 : vector<8x128xf32>
    %492 = vector.extract_strided_slice %474 {offsets = [0, 256], sizes = [8, 128], strides = [1, 1]} : vector<8x384xf32> to vector<8x128xf32>
    %493 = vector.extract_strided_slice %475 {offsets = [0, 256], sizes = [8, 128], strides = [1, 1]} : vector<8x384xf32> to vector<8x128xf32>
    %494 = arith.addf %493, %298 : vector<8x128xf32>
    %495 = arith.mulf %483, %494 : vector<8x128xf32>
    %496 = arith.addf %492, %495 : vector<8x128xf32>
    %497 = math.tanh %496 : vector<8x128xf32>
    %cst_134 = arith.constant 1.000000e+00 : f32
    %498 = vector.broadcast %cst_134 : f32 to vector<8x128xf32>
    %499 = arith.subf %498, %491 : vector<8x128xf32>
    %500 = arith.mulf %499, %497 : vector<8x128xf32>
    %501 = arith.mulf %491, %468 : vector<8x128xf32>
    %502 = arith.addf %500, %501 : vector<8x128xf32>
    %503 = arith.index_cast %472 : i32 to index
    %c0_135 = arith.constant 0 : index
    %504 = vector.load %arg10[%503, %c0_135] : memref<64x128xf32, #tpu.memory_space<vmem>>, vector<8x128xf32>
    tpu.vector_store %arg10[%503, %c0_135], %502 {strides = array<i32>} : memref<64x128xf32, #tpu.memory_space<vmem>>, vector<8x128xf32>,
    %c6_i32_136 = arith.constant 6 : i32
    %c8_i32_137 = arith.constant 8 : i32
    %505 = arith.muli %c6_i32_136, %c8_i32_137 : i32
    %506 = tpu.assume_multiple %505, 8 : i32
    %507 = arith.index_cast %506 : i32 to index
    %c0_138 = arith.constant 0 : index
    %508 = vector.load %arg12[%507, %c0_138] : memref<64x384xf32, #tpu.memory_space<vmem>>, vector<8x384xf32>
    %cst_139 = arith.constant dense<0.000000e+00> : vector<8x384xf32>
    %509 = tpu.matmul %502, %295, %cst_139 {dimension_numbers = #tpu.dot_dimension_numbers<[1], [0], [0], [1], [0, 0, 1, 1], [], []>} : vector<8x128xf32>, vector<128x384xf32>, vector<8x384xf32> -> vector<8x384xf32>
    %510 = vector.extract_strided_slice %508 {offsets = [0, 0], sizes = [8, 128], strides = [1, 1]} : vector<8x384xf32> to vector<8x128xf32>
    %511 = vector.extract_strided_slice %509 {offsets = [0, 0], sizes = [8, 128], strides = [1, 1]} : vector<8x384xf32> to vector<8x128xf32>
    %512 = arith.addf %510, %511 : vector<8x128xf32>
    %513 = arith.negf %512 : vector<8x128xf32>
    %514 = math.exp %513 : vector<8x128xf32>
    %cst_140 = arith.constant 1.000000e+00 : f32
    %515 = vector.broadcast %cst_140 : f32 to vector<8x128xf32>
    %516 = arith.addf %515, %514 : vector<8x128xf32>
    %517 = arith.divf %515, %516 : vector<8x128xf32>
    %518 = vector.extract_strided_slice %508 {offsets = [0, 128], sizes = [8, 128], strides = [1, 1]} : vector<8x384xf32> to vector<8x128xf32>
    %519 = vector.extract_strided_slice %509 {offsets = [0, 128], sizes = [8, 128], strides = [1, 1]} : vector<8x384xf32> to vector<8x128xf32>
    %520 = arith.addf %518, %519 : vector<8x128xf32>
    %521 = arith.negf %520 : vector<8x128xf32>
    %522 = math.exp %521 : vector<8x128xf32>
    %cst_141 = arith.constant 1.000000e+00 : f32
    %523 = vector.broadcast %cst_141 : f32 to vector<8x128xf32>
    %524 = arith.addf %523, %522 : vector<8x128xf32>
    %525 = arith.divf %523, %524 : vector<8x128xf32>
    %526 = vector.extract_strided_slice %508 {offsets = [0, 256], sizes = [8, 128], strides = [1, 1]} : vector<8x384xf32> to vector<8x128xf32>
    %527 = vector.extract_strided_slice %509 {offsets = [0, 256], sizes = [8, 128], strides = [1, 1]} : vector<8x384xf32> to vector<8x128xf32>
    %528 = arith.addf %527, %298 : vector<8x128xf32>
    %529 = arith.mulf %517, %528 : vector<8x128xf32>
    %530 = arith.addf %526, %529 : vector<8x128xf32>
    %531 = math.tanh %530 : vector<8x128xf32>
    %cst_142 = arith.constant 1.000000e+00 : f32
    %532 = vector.broadcast %cst_142 : f32 to vector<8x128xf32>
    %533 = arith.subf %532, %525 : vector<8x128xf32>
    %534 = arith.mulf %533, %531 : vector<8x128xf32>
    %535 = arith.mulf %525, %502 : vector<8x128xf32>
    %536 = arith.addf %534, %535 : vector<8x128xf32>
    %537 = arith.index_cast %506 : i32 to index
    %c0_143 = arith.constant 0 : index
    %538 = vector.load %arg10[%537, %c0_143] : memref<64x128xf32, #tpu.memory_space<vmem>>, vector<8x128xf32>
    tpu.vector_store %arg10[%537, %c0_143], %536 {strides = array<i32>} : memref<64x128xf32, #tpu.memory_space<vmem>>, vector<8x128xf32>,
    %c7_i32_144 = arith.constant 7 : i32
    %c8_i32_145 = arith.constant 8 : i32
    %539 = arith.muli %c7_i32_144, %c8_i32_145 : i32
    %540 = tpu.assume_multiple %539, 8 : i32
    %541 = arith.index_cast %540 : i32 to index
    %c0_146 = arith.constant 0 : index
    %542 = vector.load %arg12[%541, %c0_146] : memref<64x384xf32, #tpu.memory_space<vmem>>, vector<8x384xf32>
    %cst_147 = arith.constant dense<0.000000e+00> : vector<8x384xf32>
    %543 = tpu.matmul %536, %295, %cst_147 {dimension_numbers = #tpu.dot_dimension_numbers<[1], [0], [0], [1], [0, 0, 1, 1], [], []>} : vector<8x128xf32>, vector<128x384xf32>, vector<8x384xf32> -> vector<8x384xf32>
    %544 = vector.extract_strided_slice %542 {offsets = [0, 0], sizes = [8, 128], strides = [1, 1]} : vector<8x384xf32> to vector<8x128xf32>
    %545 = vector.extract_strided_slice %543 {offsets = [0, 0], sizes = [8, 128], strides = [1, 1]} : vector<8x384xf32> to vector<8x128xf32>
    %546 = arith.addf %544, %545 : vector<8x128xf32>
    %547 = arith.negf %546 : vector<8x128xf32>
    %548 = math.exp %547 : vector<8x128xf32>
    %cst_148 = arith.constant 1.000000e+00 : f32
    %549 = vector.broadcast %cst_148 : f32 to vector<8x128xf32>
    %550 = arith.addf %549, %548 : vector<8x128xf32>
    %551 = arith.divf %549, %550 : vector<8x128xf32>
    %552 = vector.extract_strided_slice %542 {offsets = [0, 128], sizes = [8, 128], strides = [1, 1]} : vector<8x384xf32> to vector<8x128xf32>
    %553 = vector.extract_strided_slice %543 {offsets = [0, 128], sizes = [8, 128], strides = [1, 1]} : vector<8x384xf32> to vector<8x128xf32>
    %554 = arith.addf %552, %553 : vector<8x128xf32>
    %555 = arith.negf %554 : vector<8x128xf32>
    %556 = math.exp %555 : vector<8x128xf32>
    %cst_149 = arith.constant 1.000000e+00 : f32
    %557 = vector.broadcast %cst_149 : f32 to vector<8x128xf32>
    %558 = arith.addf %557, %556 : vector<8x128xf32>
    %559 = arith.divf %557, %558 : vector<8x128xf32>
    %560 = vector.extract_strided_slice %542 {offsets = [0, 256], sizes = [8, 128], strides = [1, 1]} : vector<8x384xf32> to vector<8x128xf32>
    %561 = vector.extract_strided_slice %543 {offsets = [0, 256], sizes = [8, 128], strides = [1, 1]} : vector<8x384xf32> to vector<8x128xf32>
    %562 = arith.addf %561, %298 : vector<8x128xf32>
    %563 = arith.mulf %551, %562 : vector<8x128xf32>
    %564 = arith.addf %560, %563 : vector<8x128xf32>
    %565 = math.tanh %564 : vector<8x128xf32>
    %cst_150 = arith.constant 1.000000e+00 : f32
    %566 = vector.broadcast %cst_150 : f32 to vector<8x128xf32>
    %567 = arith.subf %566, %559 : vector<8x128xf32>
    %568 = arith.mulf %567, %565 : vector<8x128xf32>
    %569 = arith.mulf %559, %536 : vector<8x128xf32>
    %570 = arith.addf %568, %569 : vector<8x128xf32>
    %571 = arith.index_cast %540 : i32 to index
    %c0_151 = arith.constant 0 : index
    %572 = vector.load %arg10[%571, %c0_151] : memref<64x128xf32, #tpu.memory_space<vmem>>, vector<8x128xf32>
    tpu.vector_store %arg10[%571, %c0_151], %570 {strides = array<i32>} : memref<64x128xf32, #tpu.memory_space<vmem>>, vector<8x128xf32>,
    %c8_i32_152 = arith.constant 8 : i32
    %c1_153 = arith.constant 1 : index
    %c0_154 = arith.constant 0 : index
    %c0_155 = arith.constant 0 : index
    %573 = vector.load %arg11[%c1_153, %c0_154, %c0_155] : memref<2x8x128xf32, #tpu.memory_space<vmem>>, vector<1x8x128xf32>
    %574 = vector.shape_cast %573 : vector<1x8x128xf32> to vector<8x128xf32>
    %575 = vector.shape_cast %570 : vector<8x128xf32> to vector<1x8x128xf32>
    tpu.vector_store %arg11[%c1_153, %c0_154, %c0_155], %575 {strides = array<i32>} : memref<2x8x128xf32, #tpu.memory_space<vmem>>, vector<1x8x128xf32>,
    return
  }
}

</mosaic_0001>

<llo_original>
// kernel: rnn_model_forward.1
$region0: #{rnn_model_forward.1}
  #allocation0 [shape = 'u32[]', space=smem, size = 0x4, offset = 0x4, fixed_abs, tag = 'smem constant byte address 0x4 - core index']
  #allocation1 [shape = 'u32[144,128]{1,0:T(1,128)}', space=vmem, size = 0x12000, scoped, tag = 'internal scratch']
  #allocation2 [shape = 'f32[64,384]{1,0:T(8,128)}', space=vmem, size = 0x18000, scoped, tag = 'scratch operand']
  %s0 = inlined_call_operand.vmem [shape: f32[64,128], index: 0, kind: input, shape index: {}]
  %s1 = inlined_call_operand.vmem [shape: f32[2,8,128], index: 1, kind: input, shape index: {}]
  %s2 = inlined_call_operand.hbm [shape: f32[128,384], index: 2, kind: input, shape index: {}]
  %s3 = inlined_call_operand.hbm [shape: f32[128,384], index: 3, kind: input, shape index: {}]
  %s4 = inlined_call_operand.vmem [shape: f32[1,384], index: 4, kind: input, shape index: {}]
  %s5 = inlined_call_operand.vmem [shape: f32[1,128], index: 5, kind: input, shape index: {}]
  %s6 = inlined_call_operand.hbm [shape: f32[128,384], index: 6, kind: input, shape index: {}]
  %s7 = inlined_call_operand.hbm [shape: f32[128,384], index: 7, kind: input, shape index: {}]
  %s8 = inlined_call_operand.vmem [shape: f32[1,384], index: 8, kind: input, shape index: {}]
  %s9 = inlined_call_operand.vmem [shape: f32[1,128], index: 9, kind: input, shape index: {}]
  %s10 = inlined_call_operand.vmem [shape: f32[64,128], index: 10, kind: output, shape index: {0}]
  %s11 = inlined_call_operand.vmem [shape: f32[2,8,128], index: 11, kind: output, shape index: {1}]
  %12 = xla_tuple %s10, %s11
  %s13 = sld [smem:[#allocation0]]
  $region74: #{rnn_model_forward.1} parent=0
    _
  %s15 = ssub.s32 1, %s13
  %s16 = scalar_select 0, %s15, %s13
  $region1: #{rnn_model_forward.1} parent=0
    #allocation3 [shape = 'u8[196608]{0}', space=vmem, size = 0x30000, scoped, tag = 'input window, operand 2, single buffered']
    #allocation4 [shape = 's32[1]{0}', space=sflag, size = 0x4, scoped, tag = 'scoped memory for rnn_model_forward.1']
    #allocation5 [shape = 'u8[196608]{0}', space=vmem, size = 0x30000, scoped, tag = 'input window, operand 3, single buffered']
    #allocation6 [shape = 's32[1]{0}', space=sflag, size = 0x4, scoped, tag = 'scoped memory for rnn_model_forward.1']
    #allocation7 [shape = 'u8[196608]{0}', space=vmem, size = 0x30000, scoped, tag = 'input window, operand 6, single buffered']
    #allocation8 [shape = 'u8[196608]{0}', space=vmem, size = 0x30000, scoped, tag = 'input window, operand 7, single buffered']
    #allocation9 [shape = 's32[1]{0}', space=sflag, size = 0x4, scoped, tag = 'scoped memory for rnn_model_forward.1']
    %17 = vsyncpa [#allocation4], 0
    %18 = vsyncpa [#allocation6], 0
    %19 = vsyncpa [#allocation9], 0
    // Predicated region
    $region2: #{rnn_model_forward.1} parent=1 // pred_check
      _
    $region3: #{rnn_model_forward.1} parent=1 // pred_check_branch
      %21 = sbr.rel (0) target = $region5
    $region4: #{rnn_model_forward.1} parent=1 // pred_region
      _
    $region5: #{rnn_model_forward.1} parent=1 // pred_fallthru
      _
    // Predicated region
    $region6: #{rnn_model_forward.1} parent=1 // pred_check
      _
    $region7: #{rnn_model_forward.1} parent=1 // pred_check_branch
      %23 = sbr.rel (0) target = $region9
    $region8: #{rnn_model_forward.1} parent=1 // pred_region
      _
    $region9: #{rnn_model_forward.1} parent=1 // pred_fallthru
      _
    // Predicated region
    $region10: #{rnn_model_forward.1} parent=1 // pred_check
      _
    $region11: #{rnn_model_forward.1} parent=1 // pred_check_branch
      %25 = sbr.rel (0) target = $region13
    $region12: #{rnn_model_forward.1} parent=1 // pred_region
      %s27 = ssub.s32 6144, 6144
      %28 = vsyncadd [#allocation4], %s27
      %s29 = sshll.u32 [#allocation3], 4
      %s30 = int_to_ptr.vmem [resolvable:$true] %s29
      %35 = dma.hbm_to_vmem [thread:$0]  %s2, 6144, %s30, [#allocation4], 384, 384, 24
    $region13: #{rnn_model_forward.1} parent=1 // pred_fallthru
      _
    // Predicated region
    $region14: #{rnn_model_forward.1} parent=1 // pred_check
      _
    $region15: #{rnn_model_forward.1} parent=1 // pred_check_branch
      %37 = sbr.rel (0) target = $region17
    $region16: #{rnn_model_forward.1} parent=1 // pred_region
      %s39 = ssub.s32 6144, 6144
      %40 = vsyncadd [#allocation6], %s39
      %s41 = sshll.u32 [#allocation5], 4
      %s42 = int_to_ptr.vmem [resolvable:$true] %s41
      %47 = dma.hbm_to_vmem [thread:$0]  %s3, 6144, %s42, [#allocation6], 384, 384, 24
    $region17: #{rnn_model_forward.1} parent=1 // pred_fallthru
      _
    // Predicated region
    $region18: #{rnn_model_forward.1} parent=1 // pred_check
      _
    $region19: #{rnn_model_forward.1} parent=1 // pred_check_branch
      %49 = sbr.rel (0) target = $region21
    $region20: #{rnn_model_forward.1} parent=1 // pred_region
      _
    $region21: #{rnn_model_forward.1} parent=1 // pred_fallthru
      _
    // Predicated region
    $region22: #{rnn_model_forward.1} parent=1 // pred_check
      _
    $region23: #{rnn_model_forward.1} parent=1 // pred_check_branch
      %51 = sbr.rel (0) target = $region25
    $region24: #{rnn_model_forward.1} parent=1 // pred_region
      _
    $region25: #{rnn_model_forward.1} parent=1 // pred_fallthru
      _
    // Predicated region
    $region26: #{rnn_model_forward.1} parent=1 // pred_check
      _
    $region27: #{rnn_model_forward.1} parent=1 // pred_check_branch
      %53 = sbr.rel (0) target = $region29
    $region28: #{rnn_model_forward.1} parent=1 // pred_region
      %s55 = ssub.s32 6144, 6144
      %56 = vsyncadd [#allocation6], %s55
      %s57 = sshll.u32 [#allocation7], 4
      %s58 = int_to_ptr.vmem [resolvable:$true] %s57
      %63 = dma.hbm_to_vmem [thread:$0]  %s6, 6144, %s58, [#allocation6], 384, 384, 24
    $region29: #{rnn_model_forward.1} parent=1 // pred_fallthru
      _
    // Predicated region
    $region30: #{rnn_model_forward.1} parent=1 // pred_check
      _
    $region31: #{rnn_model_forward.1} parent=1 // pred_check_branch
      %65 = sbr.rel (0) target = $region33
    $region32: #{rnn_model_forward.1} parent=1 // pred_region
      %s67 = ssub.s32 6144, 6144
      %68 = vsyncadd [#allocation9], %s67
      %s69 = sshll.u32 [#allocation8], 4
      %s70 = int_to_ptr.vmem [resolvable:$true] %s69
      %75 = dma.hbm_to_vmem [thread:$0]  %s7, 6144, %s70, [#allocation9], 384, 384, 24
    $region33: #{rnn_model_forward.1} parent=1 // pred_fallthru
      _
    // Predicated region
    $region34: #{rnn_model_forward.1} parent=1 // pred_check
      _
    $region35: #{rnn_model_forward.1} parent=1 // pred_check_branch
      %77 = sbr.rel (0) target = $region37
    $region36: #{rnn_model_forward.1} parent=1 // pred_region
      _
    $region37: #{rnn_model_forward.1} parent=1 // pred_fallthru
      _
    // Predicated region
    $region38: #{rnn_model_forward.1} parent=1 // pred_check
      _
    $region39: #{rnn_model_forward.1} parent=1 // pred_check_branch
      %79 = sbr.rel (0) target = $region41
    $region40: #{rnn_model_forward.1} parent=1 // pred_region
      _
    $region41: #{rnn_model_forward.1} parent=1 // pred_fallthru
      _
    // Predicated region
    $region42: #{rnn_model_forward.1} parent=1 // pred_check
      _
    $region43: #{rnn_model_forward.1} parent=1 // pred_check_branch
      %81 = sbr.rel (0) target = $region45
    $region44: #{rnn_model_forward.1} parent=1 // pred_region
      %82 = dma.done [#allocation4], 6144
    $region45: #{rnn_model_forward.1} parent=1 // pred_fallthru
      _
    // Predicated region
    $region46: #{rnn_model_forward.1} parent=1 // pred_check
      _
    $region47: #{rnn_model_forward.1} parent=1 // pred_check_branch
      %84 = sbr.rel (0) target = $region49
    $region48: #{rnn_model_forward.1} parent=1 // pred_region
      %85 = dma.done [#allocation6], 6144
    $region49: #{rnn_model_forward.1} parent=1 // pred_fallthru
      _
    // Predicated region
    $region50: #{rnn_model_forward.1} parent=1 // pred_check
      _
    $region51: #{rnn_model_forward.1} parent=1 // pred_check_branch
      %87 = sbr.rel (0) target = $region53
    $region52: #{rnn_model_forward.1} parent=1 // pred_region
      %88 = dma.done [#allocation6], 6144
    $region53: #{rnn_model_forward.1} parent=1 // pred_fallthru
      _
    // Predicated region
    $region54: #{rnn_model_forward.1} parent=1 // pred_check
      _
    $region55: #{rnn_model_forward.1} parent=1 // pred_check_branch
      %90 = sbr.rel (0) target = $region57
    $region56: #{rnn_model_forward.1} parent=1 // pred_region
      %91 = dma.done [#allocation9], 6144
    $region57: #{rnn_model_forward.1} parent=1 // pred_fallthru
      _
    %v92 = vld [vmem:[%s0] sm:$0xff]
    %v93 = vld [vmem:[%s0 + $0x8] sm:$0xff]
    %v94 = vld [vmem:[%s0 + $0x10] sm:$0xff]
    %v95 = vld [vmem:[%s0 + $0x18] sm:$0xff]
    %v96 = vld [vmem:[%s0 + $0x20] sm:$0xff]
    %v97 = vld [vmem:[%s0 + $0x28] sm:$0xff]
    %v98 = vld [vmem:[%s0 + $0x30] sm:$0xff]
    %v99 = vld [vmem:[%s0 + $0x38] sm:$0xff]
    %v100 = vld [vmem:[#allocation3] sm:$0xff]
    %v101 = vld [vmem:[#allocation3 + $0x8] sm:$0xff]
    %v102 = vld [vmem:[#allocation3 + $0x10] sm:$0xff]
    %v103 = vld [vmem:[#allocation3 + $0x18] sm:$0xff]
    %v104 = vld [vmem:[#allocation3 + $0x20] sm:$0xff]
    %v105 = vld [vmem:[#allocation3 + $0x28] sm:$0xff]
    %v106 = vld [vmem:[#allocation3 + $0x30] sm:$0xff]
    %v107 = vld [vmem:[#allocation3 + $0x38] sm:$0xff]
    %v108 = vld [vmem:[#allocation3 + $0x40] sm:$0xff]
    %v109 = vld [vmem:[#allocation3 + $0x48] sm:$0xff]
    %v110 = vld [vmem:[#allocation3 + $0x50] sm:$0xff]
    %v111 = vld [vmem:[#allocation3 + $0x58] sm:$0xff]
    %v112 = vld [vmem:[#allocation3 + $0x60] sm:$0xff]
    %v113 = vld [vmem:[#allocation3 + $0x68] sm:$0xff]
    %v114 = vld [vmem:[#allocation3 + $0x70] sm:$0xff]
    %v115 = vld [vmem:[#allocation3 + $0x78] sm:$0xff]
    %v116 = vld [vmem:[#allocation3 + $0x80] sm:$0xff]
    %v117 = vld [vmem:[#allocation3 + $0x88] sm:$0xff]
    %v118 = vld [vmem:[#allocation3 + $0x90] sm:$0xff]
    %v119 = vld [vmem:[#allocation3 + $0x98] sm:$0xff]
    %v120 = vld [vmem:[#allocation3 + $0xa0] sm:$0xff]
    %v121 = vld [vmem:[#allocation3 + $0xa8] sm:$0xff]
    %v122 = vld [vmem:[#allocation3 + $0xb0] sm:$0xff]
    %v123 = vld [vmem:[#allocation3 + $0xb8] sm:$0xff]
    %v124 = vld [vmem:[#allocation3 + $0xc0] sm:$0xff]
    %v125 = vld [vmem:[#allocation3 + $0xc8] sm:$0xff]
    %v126 = vld [vmem:[#allocation3 + $0xd0] sm:$0xff]
    %v127 = vld [vmem:[#allocation3 + $0xd8] sm:$0xff]
    %v128 = vld [vmem:[#allocation3 + $0xe0] sm:$0xff]
    %v129 = vld [vmem:[#allocation3 + $0xe8] sm:$0xff]
    %v130 = vld [vmem:[#allocation3 + $0xf0] sm:$0xff]
    %v131 = vld [vmem:[#allocation3 + $0xf8] sm:$0xff]
    %v132 = vld [vmem:[#allocation3 + $0x100] sm:$0xff]
    %v133 = vld [vmem:[#allocation3 + $0x108] sm:$0xff]
    %v134 = vld [vmem:[#allocation3 + $0x110] sm:$0xff]
    %v135 = vld [vmem:[#allocation3 + $0x118] sm:$0xff]
    %v136 = vld [vmem:[#allocation3 + $0x120] sm:$0xff]
    %v137 = vld [vmem:[#allocation3 + $0x128] sm:$0xff]
    %v138 = vld [vmem:[#allocation3 + $0x130] sm:$0xff]
    %v139 = vld [vmem:[#allocation3 + $0x138] sm:$0xff]
    %v140 = vld [vmem:[#allocation3 + $0x140] sm:$0xff]
    %v141 = vld [vmem:[#allocation3 + $0x148] sm:$0xff]
    %v142 = vld [vmem:[#allocation3 + $0x150] sm:$0xff]
    %v143 = vld [vmem:[#allocation3 + $0x158] sm:$0xff]
    %v144 = vld [vmem:[#allocation3 + $0x160] sm:$0xff]
    %v145 = vld [vmem:[#allocation3 + $0x168] sm:$0xff]
    %v146 = vld [vmem:[#allocation3 + $0x170] sm:$0xff]
    %v147 = vld [vmem:[#allocation3 + $0x178] sm:$0xff]
    %v148 = vld [vmem:[%s4] sm:$0x7]
    %v150 = vlaneseq
    %v151 = vshrl.u32 %v150, 7
    %v152 = vsub.s32 0, %v151
    %v153 = vrot.slane %v148, %v152
    %v154 = vlaneseq
    %v155 = vshrl.u32 %v154, 7
    %v156 = vsub.s32 1, %v155
    %v157 = vrot.slane %v148, %v156
    %v158 = vlaneseq
    %v159 = vshrl.u32 %v158, 7
    %v160 = vsub.s32 2, %v159
    %v161 = vrot.slane %v148, %v160
    %165 = vmatprep.subr.mxu0 %v146
    %166 = vmatpush1.msra.mxu0 %v145
    %167 = vmatprep.subr.mxu0 %v143
    %168 = vmatpush1.msra.mxu0 %v142
    %169 = vmatprep.subr.mxu0 %v140
    %170 = vmatpush1.msra.mxu0 %v139
    %171 = vmatprep.subr.mxu0 %v137
    %172 = vmatpush1.msra.mxu0 %v136
    %173 = vmatprep.subr.mxu0 %v134
    %174 = vmatpush1.msra.mxu0 %v133
    %175 = vmatprep.subr.mxu0 %v131
    %176 = vmatpush1.msra.mxu0 %v130
    %177 = vmatprep.subr.mxu0 %v128
    %178 = vmatpush1.msra.mxu0 %v127
    %179 = vmatprep.subr.mxu0 %v125
    %180 = vmatpush1.msra.mxu0 %v124
    %181 = vmatprep.subr.mxu0 %v122
    %182 = vmatpush1.msra.mxu0 %v121
    %183 = vmatprep.subr.mxu0 %v119
    %184 = vmatpush1.msra.mxu0 %v118
    %185 = vmatprep.subr.mxu0 %v116
    %186 = vmatpush1.msra.mxu0 %v115
    %187 = vmatprep.subr.mxu0 %v113
    %188 = vmatpush1.msra.mxu0 %v112
    %189 = vmatprep.subr.mxu0 %v110
    %190 = vmatpush1.msra.mxu0 %v109
    %191 = vmatprep.subr.mxu0 %v107
    %192 = vmatpush1.msra.mxu0 %v106
    %193 = vmatprep.subr.mxu0 %v104
    %194 = vmatpush1.msra.mxu0 %v103
    %195 = vmatprep.subr.mxu0 %v101
    %196 = vmatpush1.msra.mxu0 %v100
    %197 = vmatprep.subr.mxu0 0.0
    %198 = vmatpush2.msra.mxu0 0.0
    %199 = vmatprep.subr.mxu0 0.0
    %200 = vmatpush2.msra.mxu0 0.0
    %201 = vmatprep.subr.mxu0 0.0
    %202 = vmatpush2.msra.mxu0 0.0
    %203 = vmatprep.subr.mxu0 0.0
    %204 = vmatpush2.msra.mxu0 0.0
    %205 = vmatprep.subr.mxu0 0.0
    %206 = vmatpush2.msra.mxu0 0.0
    %207 = vmatprep.subr.mxu0 0.0
    %208 = vmatpush2.msra.mxu0 0.0
    %209 = vmatprep.subr.mxu0 0.0
    %210 = vmatpush2.msra.mxu0 0.0
    %211 = vmatprep.subr.mxu0 0.0
    %212 = vmatpush2.msra.mxu0 0.0
    %213 = vmatprep.subr.mxu0 0.0
    %214 = vmatpush2.msra.mxu0 0.0
    %215 = vmatprep.subr.mxu0 0.0
    %216 = vmatpush2.msra.mxu0 0.0
    %217 = vmatprep.subr.mxu0 0.0
    %218 = vmatpush2.msra.mxu0 0.0
    %219 = vmatprep.subr.mxu0 0.0
    %220 = vmatpush2.msra.mxu0 0.0
    %221 = vmatprep.subr.mxu0 0.0
    %222 = vmatpush2.msra.mxu0 0.0
    %223 = vmatprep.subr.mxu0 0.0
    %224 = vmatpush2.msra.mxu0 0.0
    %225 = vmatprep.subr.mxu0 0.0
    %226 = vmatpush2.msra.mxu0 0.0
    %227 = vmatprep.subr.mxu0 0.0
    %228 = vmatpush2.msra.mxu0 0.0
    %229 = vmatprep.mubr.f32.mxu0 0.0
    %230 = vmatmul.mubr.f32.gmra.mxu0 %v92
    %v231 = vpop.f32.mrf.mxu0
    %v232 = vadd.f32 %v153, %v231
    %v233 = vpop.f32.mrf.mxu0
    %v234 = vadd.f32 %v157, %v233
    %235 = vmatprep.mubr.f32.mxu0 0.0
    %236 = vmatmul.mubr.f32.gmra.mxu0 %v93
    %v237 = vpop.f32.mrf.mxu0
    %v238 = vadd.f32 %v153, %v237
    %v239 = vpop.f32.mrf.mxu0
    %v240 = vadd.f32 %v157, %v239
    %241 = vmatprep.mubr.f32.mxu0 0.0
    %242 = vmatmul.mubr.f32.gmra.mxu0 %v94
    %v243 = vpop.f32.mrf.mxu0
    %v244 = vadd.f32 %v153, %v243
    %v245 = vpop.f32.mrf.mxu0
    %v246 = vadd.f32 %v157, %v245
    %247 = vmatprep.mubr.f32.mxu0 0.0
    %248 = vmatmul.mubr.f32.gmra.mxu0 %v95
    %v249 = vpop.f32.mrf.mxu0
    %v250 = vadd.f32 %v153, %v249
    %v251 = vpop.f32.mrf.mxu0
    %v252 = vadd.f32 %v157, %v251
    %253 = vmatprep.mubr.f32.mxu0 0.0
    %254 = vmatmul.mubr.f32.gmra.mxu0 %v96
    %v255 = vpop.f32.mrf.mxu0
    %v256 = vadd.f32 %v153, %v255
    %v257 = vpop.f32.mrf.mxu0
    %v258 = vadd.f32 %v157, %v257
    %259 = vmatprep.mubr.f32.mxu0 0.0
    %260 = vmatmul.mubr.f32.gmra.mxu0 %v97
    %v261 = vpop.f32.mrf.mxu0
    %v262 = vadd.f32 %v153, %v261
    %v263 = vpop.f32.mrf.mxu0
    %v264 = vadd.f32 %v157, %v263
    %265 = vmatprep.mubr.f32.mxu0 0.0
    %266 = vmatmul.mubr.f32.gmra.mxu0 %v98
    %v267 = vpop.f32.mrf.mxu0
    %v268 = vadd.f32 %v153, %v267
    %v269 = vpop.f32.mrf.mxu0
    %v270 = vadd.f32 %v157, %v269
    %271 = vmatprep.mubr.f32.mxu0 0.0
    %272 = vmatmul.mubr.f32.gmra.mxu0 %v99
    %v273 = vpop.f32.mrf.mxu0
    %v274 = vadd.f32 %v153, %v273
    %v275 = vpop.f32.mrf.mxu0
    %v276 = vadd.f32 %v157, %v275
    %277 = vdwg.mxu0
    %278 = vmatprep.subr.mxu0 0.0
    %279 = vmatpush1.msra.mxu0 %v147
    %280 = vmatprep.subr.mxu0 0.0
    %281 = vmatpush1.msra.mxu0 %v144
    %282 = vmatprep.subr.mxu0 0.0
    %283 = vmatpush1.msra.mxu0 %v141
    %284 = vmatprep.subr.mxu0 0.0
    %285 = vmatpush1.msra.mxu0 %v138
    %286 = vmatprep.subr.mxu0 0.0
    %287 = vmatpush1.msra.mxu0 %v135
    %288 = vmatprep.subr.mxu0 0.0
    %289 = vmatpush1.msra.mxu0 %v132
    %290 = vmatprep.subr.mxu0 0.0
    %291 = vmatpush1.msra.mxu0 %v129
    %292 = vmatprep.subr.mxu0 0.0
    %293 = vmatpush1.msra.mxu0 %v126
    %294 = vmatprep.subr.mxu0 0.0
    %295 = vmatpush1.msra.mxu0 %v123
    %296 = vmatprep.subr.mxu0 0.0
    %297 = vmatpush1.msra.mxu0 %v120
    %298 = vmatprep.subr.mxu0 0.0
    %299 = vmatpush1.msra.mxu0 %v117
    %300 = vmatprep.subr.mxu0 0.0
    %301 = vmatpush1.msra.mxu0 %v114
    %302 = vmatprep.subr.mxu0 0.0
    %303 = vmatpush1.msra.mxu0 %v111
    %304 = vmatprep.subr.mxu0 0.0
    %305 = vmatpush1.msra.mxu0 %v108
    %306 = vmatprep.subr.mxu0 0.0
    %307 = vmatpush1.msra.mxu0 %v105
    %308 = vmatprep.subr.mxu0 0.0
    %309 = vmatpush1.msra.mxu0 %v102
    %310 = vmatprep.subr.mxu0 0.0
    %311 = vmatpush2.msra.mxu0 0.0
    %312 = vmatprep.subr.mxu0 0.0
    %313 = vmatpush2.msra.mxu0 0.0
    %314 = vmatprep.subr.mxu0 0.0
    %315 = vmatpush2.msra.mxu0 0.0
    %316 = vmatprep.subr.mxu0 0.0
    %317 = vmatpush2.msra.mxu0 0.0
    %318 = vmatprep.subr.mxu0 0.0
    %319 = vmatpush2.msra.mxu0 0.0
    %320 = vmatprep.subr.mxu0 0.0
    %321 = vmatpush2.msra.mxu0 0.0
    %322 = vmatprep.subr.mxu0 0.0
    %323 = vmatpush2.msra.mxu0 0.0
    %324 = vmatprep.subr.mxu0 0.0
    %325 = vmatpush2.msra.mxu0 0.0
    %326 = vmatprep.subr.mxu0 0.0
    %327 = vmatpush2.msra.mxu0 0.0
    %328 = vmatprep.subr.mxu0 0.0
    %329 = vmatpush2.msra.mxu0 0.0
    %330 = vmatprep.subr.mxu0 0.0
    %331 = vmatpush2.msra.mxu0 0.0
    %332 = vmatprep.subr.mxu0 0.0
    %333 = vmatpush2.msra.mxu0 0.0
    %334 = vmatprep.subr.mxu0 0.0
    %335 = vmatpush2.msra.mxu0 0.0
    %336 = vmatprep.subr.mxu0 0.0
    %337 = vmatpush2.msra.mxu0 0.0
    %338 = vmatprep.subr.mxu0 0.0
    %339 = vmatpush2.msra.mxu0 0.0
    %340 = vmatprep.subr.mxu0 0.0
    %341 = vmatpush2.msra.mxu0 0.0
    %342 = vmatprep.mubr.f32.mxu0 0.0
    %343 = vmatmul.mubr.f32.gmra.mxu0 %v92
    %v344 = vpop.f32.mrf.mxu0
    %v345 = vadd.f32 %v161, %v344
    %v346 = vpop.f32.mrf.mxu0
    %347 = vmatprep.mubr.f32.mxu0 0.0
    %348 = vmatmul.mubr.f32.gmra.mxu0 %v93
    %v349 = vpop.f32.mrf.mxu0
    %v350 = vadd.f32 %v161, %v349
    %v351 = vpop.f32.mrf.mxu0
    %352 = vmatprep.mubr.f32.mxu0 0.0
    %353 = vmatmul.mubr.f32.gmra.mxu0 %v94
    %v354 = vpop.f32.mrf.mxu0
    %v355 = vadd.f32 %v161, %v354
    %v356 = vpop.f32.mrf.mxu0
    %357 = vmatprep.mubr.f32.mxu0 0.0
    %358 = vmatmul.mubr.f32.gmra.mxu0 %v95
    %v359 = vpop.f32.mrf.mxu0
    %v360 = vadd.f32 %v161, %v359
    %v361 = vpop.f32.mrf.mxu0
    %362 = vmatprep.mubr.f32.mxu0 0.0
    %363 = vmatmul.mubr.f32.gmra.mxu0 %v96
    %v364 = vpop.f32.mrf.mxu0
    %v365 = vadd.f32 %v161, %v364
    %v366 = vpop.f32.mrf.mxu0
    %367 = vmatprep.mubr.f32.mxu0 0.0
    %368 = vmatmul.mubr.f32.gmra.mxu0 %v97
    %v369 = vpop.f32.mrf.mxu0
    %v370 = vadd.f32 %v161, %v369
    %v371 = vpop.f32.mrf.mxu0
    %372 = vmatprep.mubr.f32.mxu0 0.0
    %373 = vmatmul.mubr.f32.gmra.mxu0 %v98
    %v374 = vpop.f32.mrf.mxu0
    %v375 = vadd.f32 %v161, %v374
    %v376 = vpop.f32.mrf.mxu0
    %377 = vmatprep.mubr.f32.mxu0 0.0
    %378 = vmatmul.mubr.f32.gmra.mxu0 %v99
    %v379 = vpop.f32.mrf.mxu0
    %v380 = vadd.f32 %v161, %v379
    %v381 = vpop.f32.mrf.mxu0
    %382 = vdwg.mxu0
    %383 = vst [vmem:[#allocation2] sm:$0xff] %v232
    %384 = vst [vmem:[#allocation2 + $0x8] sm:$0xff] %v234
    %385 = vst [vmem:[#allocation2 + $0x10] sm:$0xff] %v345
    %386 = vst [vmem:[#allocation2 + $0x18] sm:$0xff] %v238
    %387 = vst [vmem:[#allocation2 + $0x20] sm:$0xff] %v240
    %388 = vst [vmem:[#allocation2 + $0x28] sm:$0xff] %v350
    %389 = vst [vmem:[#allocation2 + $0x30] sm:$0xff] %v244
    %390 = vst [vmem:[#allocation2 + $0x38] sm:$0xff] %v246
    %391 = vst [vmem:[#allocation2 + $0x40] sm:$0xff] %v355
    %392 = vst [vmem:[#allocation2 + $0x48] sm:$0xff] %v250
    %393 = vst [vmem:[#allocation2 + $0x50] sm:$0xff] %v252
    %394 = vst [vmem:[#allocation2 + $0x58] sm:$0xff] %v360
    %395 = vst [vmem:[#allocation2 + $0x60] sm:$0xff] %v256
    %396 = vst [vmem:[#allocation2 + $0x68] sm:$0xff] %v258
    %397 = vst [vmem:[#allocation2 + $0x70] sm:$0xff] %v365
    %398 = vst [vmem:[#allocation2 + $0x78] sm:$0xff] %v262
    %399 = vst [vmem:[#allocation2 + $0x80] sm:$0xff] %v264
    %400 = vst [vmem:[#allocation2 + $0x88] sm:$0xff] %v370
    %401 = vst [vmem:[#allocation2 + $0x90] sm:$0xff] %v268
    %402 = vst [vmem:[#allocation2 + $0x98] sm:$0xff] %v270
    %403 = vst [vmem:[#allocation2 + $0xa0] sm:$0xff] %v375
    %404 = vst [vmem:[#allocation2 + $0xa8] sm:$0xff] %v274
    %405 = vst [vmem:[#allocation2 + $0xb0] sm:$0xff] %v276
    %406 = vst [vmem:[#allocation2 + $0xb8] sm:$0xff] %v380
    %v407 = vld [vmem:[#allocation5] sm:$0xff]
    %v408 = vld [vmem:[#allocation5 + $0x8] sm:$0xff]
    %v409 = vld [vmem:[#allocation5 + $0x10] sm:$0xff]
    %v410 = vld [vmem:[#allocation5 + $0x18] sm:$0xff]
    %v411 = vld [vmem:[#allocation5 + $0x20] sm:$0xff]
    %v412 = vld [vmem:[#allocation5 + $0x28] sm:$0xff]
    %v413 = vld [vmem:[#allocation5 + $0x30] sm:$0xff]
    %v414 = vld [vmem:[#allocation5 + $0x38] sm:$0xff]
    %v415 = vld [vmem:[#allocation5 + $0x40] sm:$0xff]
    %v416 = vld [vmem:[#allocation5 + $0x48] sm:$0xff]
    %v417 = vld [vmem:[#allocation5 + $0x50] sm:$0xff]
    %v418 = vld [vmem:[#allocation5 + $0x58] sm:$0xff]
    %v419 = vld [vmem:[#allocation5 + $0x60] sm:$0xff]
    %v420 = vld [vmem:[#allocation5 + $0x68] sm:$0xff]
    %v421 = vld [vmem:[#allocation5 + $0x70] sm:$0xff]
    %v422 = vld [vmem:[#allocation5 + $0x78] sm:$0xff]
    %v423 = vld [vmem:[#allocation5 + $0x80] sm:$0xff]
    %v424 = vld [vmem:[#allocation5 + $0x88] sm:$0xff]
    %v425 = vld [vmem:[#allocation5 + $0x90] sm:$0xff]
    %v426 = vld [vmem:[#allocation5 + $0x98] sm:$0xff]
    %v427 = vld [vmem:[#allocation5 + $0xa0] sm:$0xff]
    %v428 = vld [vmem:[#allocation5 + $0xa8] sm:$0xff]
    %v429 = vld [vmem:[#allocation5 + $0xb0] sm:$0xff]
    %v430 = vld [vmem:[#allocation5 + $0xb8] sm:$0xff]
    %v431 = vld [vmem:[#allocation5 + $0xc0] sm:$0xff]
    %v432 = vld [vmem:[#allocation5 + $0xc8] sm:$0xff]
    %v433 = vld [vmem:[#allocation5 + $0xd0] sm:$0xff]
    %v434 = vld [vmem:[#allocation5 + $0xd8] sm:$0xff]
    %v435 = vld [vmem:[#allocation5 + $0xe0] sm:$0xff]
    %v436 = vld [vmem:[#allocation5 + $0xe8] sm:$0xff]
    %v437 = vld [vmem:[#allocation5 + $0xf0] sm:$0xff]
    %v438 = vld [vmem:[#allocation5 + $0xf8] sm:$0xff]
    %v439 = vld [vmem:[#allocation5 + $0x100] sm:$0xff]
    %v440 = vld [vmem:[#allocation5 + $0x108] sm:$0xff]
    %v441 = vld [vmem:[#allocation5 + $0x110] sm:$0xff]
    %v442 = vld [vmem:[#allocation5 + $0x118] sm:$0xff]
    %v443 = vld [vmem:[#allocation5 + $0x120] sm:$0xff]
    %v444 = vld [vmem:[#allocation5 + $0x128] sm:$0xff]
    %v445 = vld [vmem:[#allocation5 + $0x130] sm:$0xff]
    %v446 = vld [vmem:[#allocation5 + $0x138] sm:$0xff]
    %v447 = vld [vmem:[#allocation5 + $0x140] sm:$0xff]
    %v448 = vld [vmem:[#allocation5 + $0x148] sm:$0xff]
    %v449 = vld [vmem:[#allocation5 + $0x150] sm:$0xff]
    %v450 = vld [vmem:[#allocation5 + $0x158] sm:$0xff]
    %v451 = vld [vmem:[#allocation5 + $0x160] sm:$0xff]
    %v452 = vld [vmem:[#allocation5 + $0x168] sm:$0xff]
    %v453 = vld [vmem:[#allocation5 + $0x170] sm:$0xff]
    %v454 = vld [vmem:[#allocation5 + $0x178] sm:$0xff]
    %v455 = vld [vmem:[%s5] sm:$0x1]
    %v457 = vlaneseq
    %v458 = vshrl.u32 %v457, 7
    %v459 = vsub.s32 0, %v458
    %v460 = vrot.slane %v455, %v459
    %v462 = vld [vmem:[%s1] sm:$0xff]
    %s463 = smul.u32 0, 3
    %s464 = smul.addr %s463, 8
    %s465 = scalar_lea.vmem [#allocation2], %s464
    %v466 = vld [vmem:[%s465] sm:$0xff]
    %v467 = vld [vmem:[%s465 + $0x8] sm:$0xff]
    %v468 = vld [vmem:[%s465 + $0x10] sm:$0xff]
    %469 = vmatprep.subr.mxu0 %v453
    %470 = vmatpush1.msra.mxu0 %v452
    %471 = vmatprep.subr.mxu0 %v450
    %472 = vmatpush1.msra.mxu0 %v449
    %473 = vmatprep.subr.mxu0 %v447
    %474 = vmatpush1.msra.mxu0 %v446
    %475 = vmatprep.subr.mxu0 %v444
    %476 = vmatpush1.msra.mxu0 %v443
    %477 = vmatprep.subr.mxu0 %v441
    %478 = vmatpush1.msra.mxu0 %v440
    %479 = vmatprep.subr.mxu0 %v438
    %480 = vmatpush1.msra.mxu0 %v437
    %481 = vmatprep.subr.mxu0 %v435
    %482 = vmatpush1.msra.mxu0 %v434
    %483 = vmatprep.subr.mxu0 %v432
    %484 = vmatpush1.msra.mxu0 %v431
    %485 = vmatprep.subr.mxu0 %v429
    %486 = vmatpush1.msra.mxu0 %v428
    %487 = vmatprep.subr.mxu0 %v426
    %488 = vmatpush1.msra.mxu0 %v425
    %489 = vmatprep.subr.mxu0 %v423
    %490 = vmatpush1.msra.mxu0 %v422
    %491 = vmatprep.subr.mxu0 %v420
    %492 = vmatpush1.msra.mxu0 %v419
    %493 = vmatprep.subr.mxu0 %v417
    %494 = vmatpush1.msra.mxu0 %v416
    %495 = vmatprep.subr.mxu0 %v414
    %496 = vmatpush1.msra.mxu0 %v413
    %497 = vmatprep.subr.mxu0 %v411
    %498 = vmatpush1.msra.mxu0 %v410
    %499 = vmatprep.subr.mxu0 %v408
    %500 = vmatpush1.msra.mxu0 %v407
    %501 = vmatprep.subr.mxu0 0.0
    %502 = vmatpush2.msra.mxu0 0.0
    %503 = vmatprep.subr.mxu0 0.0
    %504 = vmatpush2.msra.mxu0 0.0
    %505 = vmatprep.subr.mxu0 0.0
    %506 = vmatpush2.msra.mxu0 0.0
    %507 = vmatprep.subr.mxu0 0.0
    %508 = vmatpush2.msra.mxu0 0.0
    %509 = vmatprep.subr.mxu0 0.0
    %510 = vmatpush2.msra.mxu0 0.0
    %511 = vmatprep.subr.mxu0 0.0
    %512 = vmatpush2.msra.mxu0 0.0
    %513 = vmatprep.subr.mxu0 0.0
    %514 = vmatpush2.msra.mxu0 0.0
    %515 = vmatprep.subr.mxu0 0.0
    %516 = vmatpush2.msra.mxu0 0.0
    %517 = vmatprep.subr.mxu0 0.0
    %518 = vmatpush2.msra.mxu0 0.0
    %519 = vmatprep.subr.mxu0 0.0
    %520 = vmatpush2.msra.mxu0 0.0
    %521 = vmatprep.subr.mxu0 0.0
    %522 = vmatpush2.msra.mxu0 0.0
    %523 = vmatprep.subr.mxu0 0.0
    %524 = vmatpush2.msra.mxu0 0.0
    %525 = vmatprep.subr.mxu0 0.0
    %526 = vmatpush2.msra.mxu0 0.0
    %527 = vmatprep.subr.mxu0 0.0
    %528 = vmatpush2.msra.mxu0 0.0
    %529 = vmatprep.subr.mxu0 0.0
    %530 = vmatpush2.msra.mxu0 0.0
    %531 = vmatprep.subr.mxu0 0.0
    %532 = vmatpush2.msra.mxu0 0.0
    %533 = vmatprep.mubr.f32.mxu0 0.0
    %534 = vmatmul.mubr.f32.gmra.mxu0 %v462
    %v535 = vpop.f32.mrf.mxu0
    %v536 = vadd.f32 0.0, %v535
    %v537 = vpop.f32.mrf.mxu0
    %v538 = vadd.f32 0.0, %v537
    %539 = vdwg.mxu0
    %540 = vmatprep.subr.mxu0 0.0
    %541 = vmatpush1.msra.mxu0 %v454
    %542 = vmatprep.subr.mxu0 0.0
    %543 = vmatpush1.msra.mxu0 %v451
    %544 = vmatprep.subr.mxu0 0.0
    %545 = vmatpush1.msra.mxu0 %v448
    %546 = vmatprep.subr.mxu0 0.0
    %547 = vmatpush1.msra.mxu0 %v445
    %548 = vmatprep.subr.mxu0 0.0
    %549 = vmatpush1.msra.mxu0 %v442
    %550 = vmatprep.subr.mxu0 0.0
    %551 = vmatpush1.msra.mxu0 %v439
    %552 = vmatprep.subr.mxu0 0.0
    %553 = vmatpush1.msra.mxu0 %v436
    %554 = vmatprep.subr.mxu0 0.0
    %555 = vmatpush1.msra.mxu0 %v433
    %556 = vmatprep.subr.mxu0 0.0
    %557 = vmatpush1.msra.mxu0 %v430
    %558 = vmatprep.subr.mxu0 0.0
    %559 = vmatpush1.msra.mxu0 %v427
    %560 = vmatprep.subr.mxu0 0.0
    %561 = vmatpush1.msra.mxu0 %v424
    %562 = vmatprep.subr.mxu0 0.0
    %563 = vmatpush1.msra.mxu0 %v421
    %564 = vmatprep.subr.mxu0 0.0
    %565 = vmatpush1.msra.mxu0 %v418
    %566 = vmatprep.subr.mxu0 0.0
    %567 = vmatpush1.msra.mxu0 %v415
    %568 = vmatprep.subr.mxu0 0.0
    %569 = vmatpush1.msra.mxu0 %v412
    %570 = vmatprep.subr.mxu0 0.0
    %571 = vmatpush1.msra.mxu0 %v409
    %572 = vmatprep.subr.mxu0 0.0
    %573 = vmatpush2.msra.mxu0 0.0
    %574 = vmatprep.subr.mxu0 0.0
    %575 = vmatpush2.msra.mxu0 0.0
    %576 = vmatprep.subr.mxu0 0.0
    %577 = vmatpush2.msra.mxu0 0.0
    %578 = vmatprep.subr.mxu0 0.0
    %579 = vmatpush2.msra.mxu0 0.0
    %580 = vmatprep.subr.mxu0 0.0
    %581 = vmatpush2.msra.mxu0 0.0
    %582 = vmatprep.subr.mxu0 0.0
    %583 = vmatpush2.msra.mxu0 0.0
    %584 = vmatprep.subr.mxu0 0.0
    %585 = vmatpush2.msra.mxu0 0.0
    %586 = vmatprep.subr.mxu0 0.0
    %587 = vmatpush2.msra.mxu0 0.0
    %588 = vmatprep.subr.mxu0 0.0
    %589 = vmatpush2.msra.mxu0 0.0
    %590 = vmatprep.subr.mxu0 0.0
    %591 = vmatpush2.msra.mxu0 0.0
    %592 = vmatprep.subr.mxu0 0.0
    %593 = vmatpush2.msra.mxu0 0.0
    %594 = vmatprep.subr.mxu0 0.0
    %595 = vmatpush2.msra.mxu0 0.0
    %596 = vmatprep.subr.mxu0 0.0
    %597 = vmatpush2.msra.mxu0 0.0
    %598 = vmatprep.subr.mxu0 0.0
    %599 = vmatpush2.msra.mxu0 0.0
    %600 = vmatprep.subr.mxu0 0.0
    %601 = vmatpush2.msra.mxu0 0.0
    %602 = vmatprep.subr.mxu0 0.0
    %603 = vmatpush2.msra.mxu0 0.0
    %604 = vmatprep.mubr.f32.mxu0 0.0
    %605 = vmatmul.mubr.f32.gmra.mxu0 %v462
    %v606 = vpop.f32.mrf.mxu0
    %v607 = vadd.f32 0.0, %v606
    %v608 = vpop.f32.mrf.mxu0
    %609 = vdwg.mxu0
    %v610 = vadd.f32 %v466, %v536
    %v611 = vxor.u32 %v610, 2147483648
    %v612 = vmul.f32 %v611, 1.442695
    %v613 = vpow.pop %v612
    %v614 = vadd.f32 %v613, 1.0
    %v615 = vrcp.pop %v614
    %v616 = vmul.f32 1.0, %v615
    %v617 = vadd.f32 %v467, %v538
    %v618 = vxor.u32 %v617, 2147483648
    %v619 = vmul.f32 %v618, 1.442695
    %v620 = vpow.pop %v619
    %v621 = vadd.f32 %v620, 1.0
    %v622 = vrcp.pop %v621
    %v623 = vmul.f32 1.0, %v622
    %v624 = vadd.f32 %v607, %v460
    %v625 = vmul.f32 %v616, %v624
    %v626 = vadd.f32 %v468, %v625
    %v627 = vtanh.pop %v626
    %v628 = vsub.f32 1.0, %v623
    %v629 = vmul.f32 %v628, %v627
    %v630 = vmul.f32 %v623, %v462
    %v631 = vadd.f32 %v629, %v630
    %632 = vst [vmem:[%s10] sm:$0xff] %v631
    %s633 = smul.u32 1, 3
    %s634 = smul.addr %s633, 8
    %s635 = scalar_lea.vmem [#allocation2], %s634
    %v636 = vld [vmem:[%s635] sm:$0xff]
    %v637 = vld [vmem:[%s635 + $0x8] sm:$0xff]
    %v638 = vld [vmem:[%s635 + $0x10] sm:$0xff]
    %639 = vmatprep.subr.mxu0 %v453
    %640 = vmatpush1.msra.mxu0 %v452
    %641 = vmatprep.subr.mxu0 %v450
    %642 = vmatpush1.msra.mxu0 %v449
    %643 = vmatprep.subr.mxu0 %v447
    %644 = vmatpush1.msra.mxu0 %v446
    %645 = vmatprep.subr.mxu0 %v444
    %646 = vmatpush1.msra.mxu0 %v443
    %647 = vmatprep.subr.mxu0 %v441
    %648 = vmatpush1.msra.mxu0 %v440
    %649 = vmatprep.subr.mxu0 %v438
    %650 = vmatpush1.msra.mxu0 %v437
    %651 = vmatprep.subr.mxu0 %v435
    %652 = vmatpush1.msra.mxu0 %v434
    %653 = vmatprep.subr.mxu0 %v432
    %654 = vmatpush1.msra.mxu0 %v431
    %655 = vmatprep.subr.mxu0 %v429
    %656 = vmatpush1.msra.mxu0 %v428
    %657 = vmatprep.subr.mxu0 %v426
    %658 = vmatpush1.msra.mxu0 %v425
    %659 = vmatprep.subr.mxu0 %v423
    %660 = vmatpush1.msra.mxu0 %v422
    %661 = vmatprep.subr.mxu0 %v420
    %662 = vmatpush1.msra.mxu0 %v419
    %663 = vmatprep.subr.mxu0 %v417
    %664 = vmatpush1.msra.mxu0 %v416
    %665 = vmatprep.subr.mxu0 %v414
    %666 = vmatpush1.msra.mxu0 %v413
    %667 = vmatprep.subr.mxu0 %v411
    %668 = vmatpush1.msra.mxu0 %v410
    %669 = vmatprep.subr.mxu0 %v408
    %670 = vmatpush1.msra.mxu0 %v407
    %671 = vmatprep.subr.mxu0 0.0
    %672 = vmatpush2.msra.mxu0 0.0
    %673 = vmatprep.subr.mxu0 0.0
    %674 = vmatpush2.msra.mxu0 0.0
    %675 = vmatprep.subr.mxu0 0.0
    %676 = vmatpush2.msra.mxu0 0.0
    %677 = vmatprep.subr.mxu0 0.0
    %678 = vmatpush2.msra.mxu0 0.0
    %679 = vmatprep.subr.mxu0 0.0
    %680 = vmatpush2.msra.mxu0 0.0
    %681 = vmatprep.subr.mxu0 0.0
    %682 = vmatpush2.msra.mxu0 0.0
    %683 = vmatprep.subr.mxu0 0.0
    %684 = vmatpush2.msra.mxu0 0.0
    %685 = vmatprep.subr.mxu0 0.0
    %686 = vmatpush2.msra.mxu0 0.0
    %687 = vmatprep.subr.mxu0 0.0
    %688 = vmatpush2.msra.mxu0 0.0
    %689 = vmatprep.subr.mxu0 0.0
    %690 = vmatpush2.msra.mxu0 0.0
    %691 = vmatprep.subr.mxu0 0.0
    %692 = vmatpush2.msra.mxu0 0.0
    %693 = vmatprep.subr.mxu0 0.0
    %694 = vmatpush2.msra.mxu0 0.0
    %695 = vmatprep.subr.mxu0 0.0
    %696 = vmatpush2.msra.mxu0 0.0
    %697 = vmatprep.subr.mxu0 0.0
    %698 = vmatpush2.msra.mxu0 0.0
    %699 = vmatprep.subr.mxu0 0.0
    %700 = vmatpush2.msra.mxu0 0.0
    %701 = vmatprep.subr.mxu0 0.0
    %702 = vmatpush2.msra.mxu0 0.0
    %703 = vmatprep.mubr.f32.mxu0 0.0
    %704 = vmatmul.mubr.f32.gmra.mxu0 %v631
    %v705 = vpop.f32.mrf.mxu0
    %v706 = vadd.f32 0.0, %v705
    %v707 = vpop.f32.mrf.mxu0
    %v708 = vadd.f32 0.0, %v707
    %709 = vdwg.mxu0
    %710 = vmatprep.subr.mxu0 0.0
    %711 = vmatpush1.msra.mxu0 %v454
    %712 = vmatprep.subr.mxu0 0.0
    %713 = vmatpush1.msra.mxu0 %v451
    %714 = vmatprep.subr.mxu0 0.0
    %715 = vmatpush1.msra.mxu0 %v448
    %716 = vmatprep.subr.mxu0 0.0
    %717 = vmatpush1.msra.mxu0 %v445
    %718 = vmatprep.subr.mxu0 0.0
    %719 = vmatpush1.msra.mxu0 %v442
    %720 = vmatprep.subr.mxu0 0.0
    %721 = vmatpush1.msra.mxu0 %v439
    %722 = vmatprep.subr.mxu0 0.0
    %723 = vmatpush1.msra.mxu0 %v436
    %724 = vmatprep.subr.mxu0 0.0
    %725 = vmatpush1.msra.mxu0 %v433
    %726 = vmatprep.subr.mxu0 0.0
    %727 = vmatpush1.msra.mxu0 %v430
    %728 = vmatprep.subr.mxu0 0.0
    %729 = vmatpush1.msra.mxu0 %v427
    %730 = vmatprep.subr.mxu0 0.0
    %731 = vmatpush1.msra.mxu0 %v424
    %732 = vmatprep.subr.mxu0 0.0
    %733 = vmatpush1.msra.mxu0 %v421
    %734 = vmatprep.subr.mxu0 0.0
    %735 = vmatpush1.msra.mxu0 %v418
    %736 = vmatprep.subr.mxu0 0.0
    %737 = vmatpush1.msra.mxu0 %v415
    %738 = vmatprep.subr.mxu0 0.0
    %739 = vmatpush1.msra.mxu0 %v412
    %740 = vmatprep.subr.mxu0 0.0
    %741 = vmatpush1.msra.mxu0 %v409
    %742 = vmatprep.subr.mxu0 0.0
    %743 = vmatpush2.msra.mxu0 0.0
    %744 = vmatprep.subr.mxu0 0.0
    %745 = vmatpush2.msra.mxu0 0.0
    %746 = vmatprep.subr.mxu0 0.0
    %747 = vmatpush2.msra.mxu0 0.0
    %748 = vmatprep.subr.mxu0 0.0
    %749 = vmatpush2.msra.mxu0 0.0
    %750 = vmatprep.subr.mxu0 0.0
    %751 = vmatpush2.msra.mxu0 0.0
    %752 = vmatprep.subr.mxu0 0.0
    %753 = vmatpush2.msra.mxu0 0.0
    %754 = vmatprep.subr.mxu0 0.0
    %755 = vmatpush2.msra.mxu0 0.0
    %756 = vmatprep.subr.mxu0 0.0
    %757 = vmatpush2.msra.mxu0 0.0
    %758 = vmatprep.subr.mxu0 0.0
    %759 = vmatpush2.msra.mxu0 0.0
    %760 = vmatprep.subr.mxu0 0.0
    %761 = vmatpush2.msra.mxu0 0.0
    %762 = vmatprep.subr.mxu0 0.0
    %763 = vmatpush2.msra.mxu0 0.0
    %764 = vmatprep.subr.mxu0 0.0
    %765 = vmatpush2.msra.mxu0 0.0
    %766 = vmatprep.subr.mxu0 0.0
    %767 = vmatpush2.msra.mxu0 0.0
    %768 = vmatprep.subr.mxu0 0.0
    %769 = vmatpush2.msra.mxu0 0.0
    %770 = vmatprep.subr.mxu0 0.0
    %771 = vmatpush2.msra.mxu0 0.0
    %772 = vmatprep.subr.mxu0 0.0
    %773 = vmatpush2.msra.mxu0 0.0
    %774 = vmatprep.mubr.f32.mxu0 0.0
    %775 = vmatmul.mubr.f32.gmra.mxu0 %v631
    %v776 = vpop.f32.mrf.mxu0
    %v777 = vadd.f32 0.0, %v776
    %v778 = vpop.f32.mrf.mxu0
    %779 = vdwg.mxu0
    %v780 = vadd.f32 %v636, %v706
    %v781 = vxor.u32 %v780, 2147483648
    %v782 = vmul.f32 %v781, 1.442695
    %v783 = vpow.pop %v782
    %v784 = vadd.f32 %v783, 1.0
    %v785 = vrcp.pop %v784
    %v786 = vmul.f32 1.0, %v785
    %v787 = vadd.f32 %v637, %v708
    %v788 = vxor.u32 %v787, 2147483648
    %v789 = vmul.f32 %v788, 1.442695
    %v790 = vpow.pop %v789
    %v791 = vadd.f32 %v790, 1.0
    %v792 = vrcp.pop %v791
    %v793 = vmul.f32 1.0, %v792
    %v794 = vadd.f32 %v777, %v460
    %v795 = vmul.f32 %v786, %v794
    %v796 = vadd.f32 %v638, %v795
    %v797 = vtanh.pop %v796
    %v798 = vsub.f32 1.0, %v793
    %v799 = vmul.f32 %v798, %v797
    %v800 = vmul.f32 %v793, %v631
    %v801 = vadd.f32 %v799, %v800
    %s802 = scalar_lea.vmem %s10, 8
    %803 = vst [vmem:[%s802] sm:$0xff] %v801
    %s804 = smul.u32 2, 3
    %s805 = smul.addr %s804, 8
    %s806 = scalar_lea.vmem [#allocation2], %s805
    %v807 = vld [vmem:[%s806] sm:$0xff]
    %v808 = vld [vmem:[%s806 + $0x8] sm:$0xff]
    %v809 = vld [vmem:[%s806 + $0x10] sm:$0xff]
    %810 = vmatprep.subr.mxu0 %v453
    %811 = vmatpush1.msra.mxu0 %v452
    %812 = vmatprep.subr.mxu0 %v450
    %813 = vmatpush1.msra.mxu0 %v449
    %814 = vmatprep.subr.mxu0 %v447
    %815 = vmatpush1.msra.mxu0 %v446
    %816 = vmatprep.subr.mxu0 %v444
    %817 = vmatpush1.msra.mxu0 %v443
    %818 = vmatprep.subr.mxu0 %v441
    %819 = vmatpush1.msra.mxu0 %v440
    %820 = vmatprep.subr.mxu0 %v438
    %821 = vmatpush1.msra.mxu0 %v437
    %822 = vmatprep.subr.mxu0 %v435
    %823 = vmatpush1.msra.mxu0 %v434
    %824 = vmatprep.subr.mxu0 %v432
    %825 = vmatpush1.msra.mxu0 %v431
    %826 = vmatprep.subr.mxu0 %v429
    %827 = vmatpush1.msra.mxu0 %v428
    %828 = vmatprep.subr.mxu0 %v426
    %829 = vmatpush1.msra.mxu0 %v425
    %830 = vmatprep.subr.mxu0 %v423
    %831 = vmatpush1.msra.mxu0 %v422
    %832 = vmatprep.subr.mxu0 %v420
    %833 = vmatpush1.msra.mxu0 %v419
    %834 = vmatprep.subr.mxu0 %v417
    %835 = vmatpush1.msra.mxu0 %v416
    %836 = vmatprep.subr.mxu0 %v414
    %837 = vmatpush1.msra.mxu0 %v413
    %838 = vmatprep.subr.mxu0 %v411
    %839 = vmatpush1.msra.mxu0 %v410
    %840 = vmatprep.subr.mxu0 %v408
    %841 = vmatpush1.msra.mxu0 %v407
    %842 = vmatprep.subr.mxu0 0.0
    %843 = vmatpush2.msra.mxu0 0.0
    %844 = vmatprep.subr.mxu0 0.0
    %845 = vmatpush2.msra.mxu0 0.0
    %846 = vmatprep.subr.mxu0 0.0
    %847 = vmatpush2.msra.mxu0 0.0
    %848 = vmatprep.subr.mxu0 0.0
    %849 = vmatpush2.msra.mxu0 0.0
    %850 = vmatprep.subr.mxu0 0.0
    %851 = vmatpush2.msra.mxu0 0.0
    %852 = vmatprep.subr.mxu0 0.0
    %853 = vmatpush2.msra.mxu0 0.0
    %854 = vmatprep.subr.mxu0 0.0
    %855 = vmatpush2.msra.mxu0 0.0
    %856 = vmatprep.subr.mxu0 0.0
    %857 = vmatpush2.msra.mxu0 0.0
    %858 = vmatprep.subr.mxu0 0.0
    %859 = vmatpush2.msra.mxu0 0.0
    %860 = vmatprep.subr.mxu0 0.0
    %861 = vmatpush2.msra.mxu0 0.0
    %862 = vmatprep.subr.mxu0 0.0
    %863 = vmatpush2.msra.mxu0 0.0
    %864 = vmatprep.subr.mxu0 0.0
    %865 = vmatpush2.msra.mxu0 0.0
    %866 = vmatprep.subr.mxu0 0.0
    %867 = vmatpush2.msra.mxu0 0.0
    %868 = vmatprep.subr.mxu0 0.0
    %869 = vmatpush2.msra.mxu0 0.0
    %870 = vmatprep.subr.mxu0 0.0
    %871 = vmatpush2.msra.mxu0 0.0
    %872 = vmatprep.subr.mxu0 0.0
    %873 = vmatpush2.msra.mxu0 0.0
    %874 = vmatprep.mubr.f32.mxu0 0.0
    %875 = vmatmul.mubr.f32.gmra.mxu0 %v801
    %v876 = vpop.f32.mrf.mxu0
    %v877 = vadd.f32 0.0, %v876
    %v878 = vpop.f32.mrf.mxu0
    %v879 = vadd.f32 0.0, %v878
    %880 = vdwg.mxu0
    %881 = vmatprep.subr.mxu0 0.0
    %882 = vmatpush1.msra.mxu0 %v454
    %883 = vmatprep.subr.mxu0 0.0
    %884 = vmatpush1.msra.mxu0 %v451
    %885 = vmatprep.subr.mxu0 0.0
    %886 = vmatpush1.msra.mxu0 %v448
    %887 = vmatprep.subr.mxu0 0.0
    %888 = vmatpush1.msra.mxu0 %v445
    %889 = vmatprep.subr.mxu0 0.0
    %890 = vmatpush1.msra.mxu0 %v442
    %891 = vmatprep.subr.mxu0 0.0
    %892 = vmatpush1.msra.mxu0 %v439
    %893 = vmatprep.subr.mxu0 0.0
    %894 = vmatpush1.msra.mxu0 %v436
    %895 = vmatprep.subr.mxu0 0.0
    %896 = vmatpush1.msra.mxu0 %v433
    %897 = vmatprep.subr.mxu0 0.0
    %898 = vmatpush1.msra.mxu0 %v430
    %899 = vmatprep.subr.mxu0 0.0
    %900 = vmatpush1.msra.mxu0 %v427
    %901 = vmatprep.subr.mxu0 0.0
    %902 = vmatpush1.msra.mxu0 %v424
    %903 = vmatprep.subr.mxu0 0.0
    %904 = vmatpush1.msra.mxu0 %v421
    %905 = vmatprep.subr.mxu0 0.0
    %906 = vmatpush1.msra.mxu0 %v418
    %907 = vmatprep.subr.mxu0 0.0
    %908 = vmatpush1.msra.mxu0 %v415
    %909 = vmatprep.subr.mxu0 0.0
    %910 = vmatpush1.msra.mxu0 %v412
    %911 = vmatprep.subr.mxu0 0.0
    %912 = vmatpush1.msra.mxu0 %v409
    %913 = vmatprep.subr.mxu0 0.0
    %914 = vmatpush2.msra.mxu0 0.0
    %915 = vmatprep.subr.mxu0 0.0
    %916 = vmatpush2.msra.mxu0 0.0
    %917 = vmatprep.subr.mxu0 0.0
    %918 = vmatpush2.msra.mxu0 0.0
    %919 = vmatprep.subr.mxu0 0.0
    %920 = vmatpush2.msra.mxu0 0.0
    %921 = vmatprep.subr.mxu0 0.0
    %922 = vmatpush2.msra.mxu0 0.0
    %923 = vmatprep.subr.mxu0 0.0
    %924 = vmatpush2.msra.mxu0 0.0
    %925 = vmatprep.subr.mxu0 0.0
    %926 = vmatpush2.msra.mxu0 0.0
    %927 = vmatprep.subr.mxu0 0.0
    %928 = vmatpush2.msra.mxu0 0.0
    %929 = vmatprep.subr.mxu0 0.0
    %930 = vmatpush2.msra.mxu0 0.0
    %931 = vmatprep.subr.mxu0 0.0
    %932 = vmatpush2.msra.mxu0 0.0
    %933 = vmatprep.subr.mxu0 0.0
    %934 = vmatpush2.msra.mxu0 0.0
    %935 = vmatprep.subr.mxu0 0.0
    %936 = vmatpush2.msra.mxu0 0.0
    %937 = vmatprep.subr.mxu0 0.0
    %938 = vmatpush2.msra.mxu0 0.0
    %939 = vmatprep.subr.mxu0 0.0
    %940 = vmatpush2.msra.mxu0 0.0
    %941 = vmatprep.subr.mxu0 0.0
    %942 = vmatpush2.msra.mxu0 0.0
    %943 = vmatprep.subr.mxu0 0.0
    %944 = vmatpush2.msra.mxu0 0.0
    %945 = vmatprep.mubr.f32.mxu0 0.0
    %946 = vmatmul.mubr.f32.gmra.mxu0 %v801
    %v947 = vpop.f32.mrf.mxu0
    %v948 = vadd.f32 0.0, %v947
    %v949 = vpop.f32.mrf.mxu0
    %950 = vdwg.mxu0
    %v951 = vadd.f32 %v807, %v877
    %v952 = vxor.u32 %v951, 2147483648
    %v953 = vmul.f32 %v952, 1.442695
    %v954 = vpow.pop %v953
    %v955 = vadd.f32 %v954, 1.0
    %v956 = vrcp.pop %v955
    %v957 = vmul.f32 1.0, %v956
    %v958 = vadd.f32 %v808, %v879
    %v959 = vxor.u32 %v958, 2147483648
    %v960 = vmul.f32 %v959, 1.442695
    %v961 = vpow.pop %v960
    %v962 = vadd.f32 %v961, 1.0
    %v963 = vrcp.pop %v962
    %v964 = vmul.f32 1.0, %v963
    %v965 = vadd.f32 %v948, %v460
    %v966 = vmul.f32 %v957, %v965
    %v967 = vadd.f32 %v809, %v966
    %v968 = vtanh.pop %v967
    %v969 = vsub.f32 1.0, %v964
    %v970 = vmul.f32 %v969, %v968
    %v971 = vmul.f32 %v964, %v801
    %v972 = vadd.f32 %v970, %v971
    %s973 = scalar_lea.vmem %s10, 16
    %974 = vst [vmem:[%s973] sm:$0xff] %v972
    %s975 = smul.u32 3, 3
    %s976 = smul.addr %s975, 8
    %s977 = scalar_lea.vmem [#allocation2], %s976
    %v978 = vld [vmem:[%s977] sm:$0xff]
    %v979 = vld [vmem:[%s977 + $0x8] sm:$0xff]
    %v980 = vld [vmem:[%s977 + $0x10] sm:$0xff]
    %981 = vmatprep.subr.mxu0 %v453
    %982 = vmatpush1.msra.mxu0 %v452
    %983 = vmatprep.subr.mxu0 %v450
    %984 = vmatpush1.msra.mxu0 %v449
    %985 = vmatprep.subr.mxu0 %v447
    %986 = vmatpush1.msra.mxu0 %v446
    %987 = vmatprep.subr.mxu0 %v444
    %988 = vmatpush1.msra.mxu0 %v443
    %989 = vmatprep.subr.mxu0 %v441
    %990 = vmatpush1.msra.mxu0 %v440
    %991 = vmatprep.subr.mxu0 %v438
    %992 = vmatpush1.msra.mxu0 %v437
    %993 = vmatprep.subr.mxu0 %v435
    %994 = vmatpush1.msra.mxu0 %v434
    %995 = vmatprep.subr.mxu0 %v432
    %996 = vmatpush1.msra.mxu0 %v431
    %997 = vmatprep.subr.mxu0 %v429
    %998 = vmatpush1.msra.mxu0 %v428
    %999 = vmatprep.subr.mxu0 %v426
    %1000 = vmatpush1.msra.mxu0 %v425
    %1001 = vmatprep.subr.mxu0 %v423
    %1002 = vmatpush1.msra.mxu0 %v422
    %1003 = vmatprep.subr.mxu0 %v420
    %1004 = vmatpush1.msra.mxu0 %v419
    %1005 = vmatprep.subr.mxu0 %v417
    %1006 = vmatpush1.msra.mxu0 %v416
    %1007 = vmatprep.subr.mxu0 %v414
    %1008 = vmatpush1.msra.mxu0 %v413
    %1009 = vmatprep.subr.mxu0 %v411
    %1010 = vmatpush1.msra.mxu0 %v410
    %1011 = vmatprep.subr.mxu0 %v408
    %1012 = vmatpush1.msra.mxu0 %v407
    %1013 = vmatprep.subr.mxu0 0.0
    %1014 = vmatpush2.msra.mxu0 0.0
    %1015 = vmatprep.subr.mxu0 0.0
    %1016 = vmatpush2.msra.mxu0 0.0
    %1017 = vmatprep.subr.mxu0 0.0
    %1018 = vmatpush2.msra.mxu0 0.0
    %1019 = vmatprep.subr.mxu0 0.0
    %1020 = vmatpush2.msra.mxu0 0.0
    %1021 = vmatprep.subr.mxu0 0.0
    %1022 = vmatpush2.msra.mxu0 0.0
    %1023 = vmatprep.subr.mxu0 0.0
    %1024 = vmatpush2.msra.mxu0 0.0
    %1025 = vmatprep.subr.mxu0 0.0
    %1026 = vmatpush2.msra.mxu0 0.0
    %1027 = vmatprep.subr.mxu0 0.0
    %1028 = vmatpush2.msra.mxu0 0.0
    %1029 = vmatprep.subr.mxu0 0.0
    %1030 = vmatpush2.msra.mxu0 0.0
    %1031 = vmatprep.subr.mxu0 0.0
    %1032 = vmatpush2.msra.mxu0 0.0
    %1033 = vmatprep.subr.mxu0 0.0
    %1034 = vmatpush2.msra.mxu0 0.0
    %1035 = vmatprep.subr.mxu0 0.0
    %1036 = vmatpush2.msra.mxu0 0.0
    %1037 = vmatprep.subr.mxu0 0.0
    %1038 = vmatpush2.msra.mxu0 0.0
    %1039 = vmatprep.subr.mxu0 0.0
    %1040 = vmatpush2.msra.mxu0 0.0
    %1041 = vmatprep.subr.mxu0 0.0
    %1042 = vmatpush2.msra.mxu0 0.0
    %1043 = vmatprep.subr.mxu0 0.0
    %1044 = vmatpush2.msra.mxu0 0.0
    %1045 = vmatprep.mubr.f32.mxu0 0.0
    %1046 = vmatmul.mubr.f32.gmra.mxu0 %v972
    %v1047 = vpop.f32.mrf.mxu0
    %v1048 = vadd.f32 0.0, %v1047
    %v1049 = vpop.f32.mrf.mxu0
    %v1050 = vadd.f32 0.0, %v1049
    %1051 = vdwg.mxu0
    %1052 = vmatprep.subr.mxu0 0.0
    %1053 = vmatpush1.msra.mxu0 %v454
    %1054 = vmatprep.subr.mxu0 0.0
    %1055 = vmatpush1.msra.mxu0 %v451
    %1056 = vmatprep.subr.mxu0 0.0
    %1057 = vmatpush1.msra.mxu0 %v448
    %1058 = vmatprep.subr.mxu0 0.0
    %1059 = vmatpush1.msra.mxu0 %v445
    %1060 = vmatprep.subr.mxu0 0.0
    %1061 = vmatpush1.msra.mxu0 %v442
    %1062 = vmatprep.subr.mxu0 0.0
    %1063 = vmatpush1.msra.mxu0 %v439
    %1064 = vmatprep.subr.mxu0 0.0
    %1065 = vmatpush1.msra.mxu0 %v436
    %1066 = vmatprep.subr.mxu0 0.0
    %1067 = vmatpush1.msra.mxu0 %v433
    %1068 = vmatprep.subr.mxu0 0.0
    %1069 = vmatpush1.msra.mxu0 %v430
    %1070 = vmatprep.subr.mxu0 0.0
    %1071 = vmatpush1.msra.mxu0 %v427
    %1072 = vmatprep.subr.mxu0 0.0
    %1073 = vmatpush1.msra.mxu0 %v424
    %1074 = vmatprep.subr.mxu0 0.0
    %1075 = vmatpush1.msra.mxu0 %v421
    %1076 = vmatprep.subr.mxu0 0.0
    %1077 = vmatpush1.msra.mxu0 %v418
    %1078 = vmatprep.subr.mxu0 0.0
    %1079 = vmatpush1.msra.mxu0 %v415
    %1080 = vmatprep.subr.mxu0 0.0
    %1081 = vmatpush1.msra.mxu0 %v412
    %1082 = vmatprep.subr.mxu0 0.0
    %1083 = vmatpush1.msra.mxu0 %v409
    %1084 = vmatprep.subr.mxu0 0.0
    %1085 = vmatpush2.msra.mxu0 0.0
    %1086 = vmatprep.subr.mxu0 0.0
    %1087 = vmatpush2.msra.mxu0 0.0
    %1088 = vmatprep.subr.mxu0 0.0
    %1089 = vmatpush2.msra.mxu0 0.0
    %1090 = vmatprep.subr.mxu0 0.0
    %1091 = vmatpush2.msra.mxu0 0.0
    %1092 = vmatprep.subr.mxu0 0.0
    %1093 = vmatpush2.msra.mxu0 0.0
    %1094 = vmatprep.subr.mxu0 0.0
    %1095 = vmatpush2.msra.mxu0 0.0
    %1096 = vmatprep.subr.mxu0 0.0
    %1097 = vmatpush2.msra.mxu0 0.0
    %1098 = vmatprep.subr.mxu0 0.0
    %1099 = vmatpush2.msra.mxu0 0.0
    %1100 = vmatprep.subr.mxu0 0.0
    %1101 = vmatpush2.msra.mxu0 0.0
    %1102 = vmatprep.subr.mxu0 0.0
    %1103 = vmatpush2.msra.mxu0 0.0
    %1104 = vmatprep.subr.mxu0 0.0
    %1105 = vmatpush2.msra.mxu0 0.0
    %1106 = vmatprep.subr.mxu0 0.0
    %1107 = vmatpush2.msra.mxu0 0.0
    %1108 = vmatprep.subr.mxu0 0.0
    %1109 = vmatpush2.msra.mxu0 0.0
    %1110 = vmatprep.subr.mxu0 0.0
    %1111 = vmatpush2.msra.mxu0 0.0
    %1112 = vmatprep.subr.mxu0 0.0
    %1113 = vmatpush2.msra.mxu0 0.0
    %1114 = vmatprep.subr.mxu0 0.0
    %1115 = vmatpush2.msra.mxu0 0.0
    %1116 = vmatprep.mubr.f32.mxu0 0.0
    %1117 = vmatmul.mubr.f32.gmra.mxu0 %v972
    %v1118 = vpop.f32.mrf.mxu0
    %v1119 = vadd.f32 0.0, %v1118
    %v1120 = vpop.f32.mrf.mxu0
    %1121 = vdwg.mxu0
    %v1122 = vadd.f32 %v978, %v1048
    %v1123 = vxor.u32 %v1122, 2147483648
    %v1124 = vmul.f32 %v1123, 1.442695
    %v1125 = vpow.pop %v1124
    %v1126 = vadd.f32 %v1125, 1.0
    %v1127 = vrcp.pop %v1126
    %v1128 = vmul.f32 1.0, %v1127
    %v1129 = vadd.f32 %v979, %v1050
    %v1130 = vxor.u32 %v1129, 2147483648
    %v1131 = vmul.f32 %v1130, 1.442695
    %v1132 = vpow.pop %v1131
    %v1133 = vadd.f32 %v1132, 1.0
    %v1134 = vrcp.pop %v1133
    %v1135 = vmul.f32 1.0, %v1134
    %v1136 = vadd.f32 %v1119, %v460
    %v1137 = vmul.f32 %v1128, %v1136
    %v1138 = vadd.f32 %v980, %v1137
    %v1139 = vtanh.pop %v1138
    %v1140 = vsub.f32 1.0, %v1135
    %v1141 = vmul.f32 %v1140, %v1139
    %v1142 = vmul.f32 %v1135, %v972
    %v1143 = vadd.f32 %v1141, %v1142
    %s1144 = scalar_lea.vmem %s10, 24
    %1145 = vst [vmem:[%s1144] sm:$0xff] %v1143
    %s1146 = smul.u32 4, 3
    %s1147 = smul.addr %s1146, 8
    %s1148 = scalar_lea.vmem [#allocation2], %s1147
    %v1149 = vld [vmem:[%s1148] sm:$0xff]
    %v1150 = vld [vmem:[%s1148 + $0x8] sm:$0xff]
    %v1151 = vld [vmem:[%s1148 + $0x10] sm:$0xff]
    %1152 = vmatprep.subr.mxu0 %v453
    %1153 = vmatpush1.msra.mxu0 %v452
    %1154 = vmatprep.subr.mxu0 %v450
    %1155 = vmatpush1.msra.mxu0 %v449
    %1156 = vmatprep.subr.mxu0 %v447
    %1157 = vmatpush1.msra.mxu0 %v446
    %1158 = vmatprep.subr.mxu0 %v444
    %1159 = vmatpush1.msra.mxu0 %v443
    %1160 = vmatprep.subr.mxu0 %v441
    %1161 = vmatpush1.msra.mxu0 %v440
    %1162 = vmatprep.subr.mxu0 %v438
    %1163 = vmatpush1.msra.mxu0 %v437
    %1164 = vmatprep.subr.mxu0 %v435
    %1165 = vmatpush1.msra.mxu0 %v434
    %1166 = vmatprep.subr.mxu0 %v432
    %1167 = vmatpush1.msra.mxu0 %v431
    %1168 = vmatprep.subr.mxu0 %v429
    %1169 = vmatpush1.msra.mxu0 %v428
    %1170 = vmatprep.subr.mxu0 %v426
    %1171 = vmatpush1.msra.mxu0 %v425
    %1172 = vmatprep.subr.mxu0 %v423
    %1173 = vmatpush1.msra.mxu0 %v422
    %1174 = vmatprep.subr.mxu0 %v420
    %1175 = vmatpush1.msra.mxu0 %v419
    %1176 = vmatprep.subr.mxu0 %v417
    %1177 = vmatpush1.msra.mxu0 %v416
    %1178 = vmatprep.subr.mxu0 %v414
    %1179 = vmatpush1.msra.mxu0 %v413
    %1180 = vmatprep.subr.mxu0 %v411
    %1181 = vmatpush1.msra.mxu0 %v410
    %1182 = vmatprep.subr.mxu0 %v408
    %1183 = vmatpush1.msra.mxu0 %v407
    %1184 = vmatprep.subr.mxu0 0.0
    %1185 = vmatpush2.msra.mxu0 0.0
    %1186 = vmatprep.subr.mxu0 0.0
    %1187 = vmatpush2.msra.mxu0 0.0
    %1188 = vmatprep.subr.mxu0 0.0
    %1189 = vmatpush2.msra.mxu0 0.0
    %1190 = vmatprep.subr.mxu0 0.0
    %1191 = vmatpush2.msra.mxu0 0.0
    %1192 = vmatprep.subr.mxu0 0.0
    %1193 = vmatpush2.msra.mxu0 0.0
    %1194 = vmatprep.subr.mxu0 0.0
    %1195 = vmatpush2.msra.mxu0 0.0
    %1196 = vmatprep.subr.mxu0 0.0
    %1197 = vmatpush2.msra.mxu0 0.0
    %1198 = vmatprep.subr.mxu0 0.0
    %1199 = vmatpush2.msra.mxu0 0.0
    %1200 = vmatprep.subr.mxu0 0.0
    %1201 = vmatpush2.msra.mxu0 0.0
    %1202 = vmatprep.subr.mxu0 0.0
    %1203 = vmatpush2.msra.mxu0 0.0
    %1204 = vmatprep.subr.mxu0 0.0
    %1205 = vmatpush2.msra.mxu0 0.0
    %1206 = vmatprep.subr.mxu0 0.0
    %1207 = vmatpush2.msra.mxu0 0.0
    %1208 = vmatprep.subr.mxu0 0.0
    %1209 = vmatpush2.msra.mxu0 0.0
    %1210 = vmatprep.subr.mxu0 0.0
    %1211 = vmatpush2.msra.mxu0 0.0
    %1212 = vmatprep.subr.mxu0 0.0
    %1213 = vmatpush2.msra.mxu0 0.0
    %1214 = vmatprep.subr.mxu0 0.0
    %1215 = vmatpush2.msra.mxu0 0.0
    %1216 = vmatprep.mubr.f32.mxu0 0.0
    %1217 = vmatmul.mubr.f32.gmra.mxu0 %v1143
    %v1218 = vpop.f32.mrf.mxu0
    %v1219 = vadd.f32 0.0, %v1218
    %v1220 = vpop.f32.mrf.mxu0
    %v1221 = vadd.f32 0.0, %v1220
    %1222 = vdwg.mxu0
    %1223 = vmatprep.subr.mxu0 0.0
    %1224 = vmatpush1.msra.mxu0 %v454
    %1225 = vmatprep.subr.mxu0 0.0
    %1226 = vmatpush1.msra.mxu0 %v451
    %1227 = vmatprep.subr.mxu0 0.0
    %1228 = vmatpush1.msra.mxu0 %v448
    %1229 = vmatprep.subr.mxu0 0.0
    %1230 = vmatpush1.msra.mxu0 %v445
    %1231 = vmatprep.subr.mxu0 0.0
    %1232 = vmatpush1.msra.mxu0 %v442
    %1233 = vmatprep.subr.mxu0 0.0
    %1234 = vmatpush1.msra.mxu0 %v439
    %1235 = vmatprep.subr.mxu0 0.0
    %1236 = vmatpush1.msra.mxu0 %v436
    %1237 = vmatprep.subr.mxu0 0.0
    %1238 = vmatpush1.msra.mxu0 %v433
    %1239 = vmatprep.subr.mxu0 0.0
    %1240 = vmatpush1.msra.mxu0 %v430
    %1241 = vmatprep.subr.mxu0 0.0
    %1242 = vmatpush1.msra.mxu0 %v427
    %1243 = vmatprep.subr.mxu0 0.0
    %1244 = vmatpush1.msra.mxu0 %v424
    %1245 = vmatprep.subr.mxu0 0.0
    %1246 = vmatpush1.msra.mxu0 %v421
    %1247 = vmatprep.subr.mxu0 0.0
    %1248 = vmatpush1.msra.mxu0 %v418
    %1249 = vmatprep.subr.mxu0 0.0
    %1250 = vmatpush1.msra.mxu0 %v415
    %1251 = vmatprep.subr.mxu0 0.0
    %1252 = vmatpush1.msra.mxu0 %v412
    %1253 = vmatprep.subr.mxu0 0.0
    %1254 = vmatpush1.msra.mxu0 %v409
    %1255 = vmatprep.subr.mxu0 0.0
    %1256 = vmatpush2.msra.mxu0 0.0
    %1257 = vmatprep.subr.mxu0 0.0
    %1258 = vmatpush2.msra.mxu0 0.0
    %1259 = vmatprep.subr.mxu0 0.0
    %1260 = vmatpush2.msra.mxu0 0.0
    %1261 = vmatprep.subr.mxu0 0.0
    %1262 = vmatpush2.msra.mxu0 0.0
    %1263 = vmatprep.subr.mxu0 0.0
    %1264 = vmatpush2.msra.mxu0 0.0
    %1265 = vmatprep.subr.mxu0 0.0
    %1266 = vmatpush2.msra.mxu0 0.0
    %1267 = vmatprep.subr.mxu0 0.0
    %1268 = vmatpush2.msra.mxu0 0.0
    %1269 = vmatprep.subr.mxu0 0.0
    %1270 = vmatpush2.msra.mxu0 0.0
    %1271 = vmatprep.subr.mxu0 0.0
    %1272 = vmatpush2.msra.mxu0 0.0
    %1273 = vmatprep.subr.mxu0 0.0
    %1274 = vmatpush2.msra.mxu0 0.0
    %1275 = vmatprep.subr.mxu0 0.0
    %1276 = vmatpush2.msra.mxu0 0.0
    %1277 = vmatprep.subr.mxu0 0.0
    %1278 = vmatpush2.msra.mxu0 0.0
    %1279 = vmatprep.subr.mxu0 0.0
    %1280 = vmatpush2.msra.mxu0 0.0
    %1281 = vmatprep.subr.mxu0 0.0
    %1282 = vmatpush2.msra.mxu0 0.0
    %1283 = vmatprep.subr.mxu0 0.0
    %1284 = vmatpush2.msra.mxu0 0.0
    %1285 = vmatprep.subr.mxu0 0.0
    %1286 = vmatpush2.msra.mxu0 0.0
    %1287 = vmatprep.mubr.f32.mxu0 0.0
    %1288 = vmatmul.mubr.f32.gmra.mxu0 %v1143
    %v1289 = vpop.f32.mrf.mxu0
    %v1290 = vadd.f32 0.0, %v1289
    %v1291 = vpop.f32.mrf.mxu0
    %1292 = vdwg.mxu0
    %v1293 = vadd.f32 %v1149, %v1219
    %v1294 = vxor.u32 %v1293, 2147483648
    %v1295 = vmul.f32 %v1294, 1.442695
    %v1296 = vpow.pop %v1295
    %v1297 = vadd.f32 %v1296, 1.0
    %v1298 = vrcp.pop %v1297
    %v1299 = vmul.f32 1.0, %v1298
    %v1300 = vadd.f32 %v1150, %v1221
    %v1301 = vxor.u32 %v1300, 2147483648
    %v1302 = vmul.f32 %v1301, 1.442695
    %v1303 = vpow.pop %v1302
    %v1304 = vadd.f32 %v1303, 1.0
    %v1305 = vrcp.pop %v1304
    %v1306 = vmul.f32 1.0, %v1305
    %v1307 = vadd.f32 %v1290, %v460
    %v1308 = vmul.f32 %v1299, %v1307
    %v1309 = vadd.f32 %v1151, %v1308
    %v1310 = vtanh.pop %v1309
    %v1311 = vsub.f32 1.0, %v1306
    %v1312 = vmul.f32 %v1311, %v1310
    %v1313 = vmul.f32 %v1306, %v1143
    %v1314 = vadd.f32 %v1312, %v1313
    %s1315 = scalar_lea.vmem %s10, 32
    %1316 = vst [vmem:[%s1315] sm:$0xff] %v1314
    %s1317 = smul.u32 5, 3
    %s1318 = smul.addr %s1317, 8
    %s1319 = scalar_lea.vmem [#allocation2], %s1318
    %v1320 = vld [vmem:[%s1319] sm:$0xff]
    %v1321 = vld [vmem:[%s1319 + $0x8] sm:$0xff]
    %v1322 = vld [vmem:[%s1319 + $0x10] sm:$0xff]
    %1323 = vmatprep.subr.mxu0 %v453
    %1324 = vmatpush1.msra.mxu0 %v452
    %1325 = vmatprep.subr.mxu0 %v450
    %1326 = vmatpush1.msra.mxu0 %v449
    %1327 = vmatprep.subr.mxu0 %v447
    %1328 = vmatpush1.msra.mxu0 %v446
    %1329 = vmatprep.subr.mxu0 %v444
    %1330 = vmatpush1.msra.mxu0 %v443
    %1331 = vmatprep.subr.mxu0 %v441
    %1332 = vmatpush1.msra.mxu0 %v440
    %1333 = vmatprep.subr.mxu0 %v438
    %1334 = vmatpush1.msra.mxu0 %v437
    %1335 = vmatprep.subr.mxu0 %v435
    %1336 = vmatpush1.msra.mxu0 %v434
    %1337 = vmatprep.subr.mxu0 %v432
    %1338 = vmatpush1.msra.mxu0 %v431
    %1339 = vmatprep.subr.mxu0 %v429
    %1340 = vmatpush1.msra.mxu0 %v428
    %1341 = vmatprep.subr.mxu0 %v426
    %1342 = vmatpush1.msra.mxu0 %v425
    %1343 = vmatprep.subr.mxu0 %v423
    %1344 = vmatpush1.msra.mxu0 %v422
    %1345 = vmatprep.subr.mxu0 %v420
    %1346 = vmatpush1.msra.mxu0 %v419
    %1347 = vmatprep.subr.mxu0 %v417
    %1348 = vmatpush1.msra.mxu0 %v416
    %1349 = vmatprep.subr.mxu0 %v414
    %1350 = vmatpush1.msra.mxu0 %v413
    %1351 = vmatprep.subr.mxu0 %v411
    %1352 = vmatpush1.msra.mxu0 %v410
    %1353 = vmatprep.subr.mxu0 %v408
    %1354 = vmatpush1.msra.mxu0 %v407
    %1355 = vmatprep.subr.mxu0 0.0
    %1356 = vmatpush2.msra.mxu0 0.0
    %1357 = vmatprep.subr.mxu0 0.0
    %1358 = vmatpush2.msra.mxu0 0.0
    %1359 = vmatprep.subr.mxu0 0.0
    %1360 = vmatpush2.msra.mxu0 0.0
    %1361 = vmatprep.subr.mxu0 0.0
    %1362 = vmatpush2.msra.mxu0 0.0
    %1363 = vmatprep.subr.mxu0 0.0
    %1364 = vmatpush2.msra.mxu0 0.0
    %1365 = vmatprep.subr.mxu0 0.0
    %1366 = vmatpush2.msra.mxu0 0.0
    %1367 = vmatprep.subr.mxu0 0.0
    %1368 = vmatpush2.msra.mxu0 0.0
    %1369 = vmatprep.subr.mxu0 0.0
    %1370 = vmatpush2.msra.mxu0 0.0
    %1371 = vmatprep.subr.mxu0 0.0
    %1372 = vmatpush2.msra.mxu0 0.0
    %1373 = vmatprep.subr.mxu0 0.0
    %1374 = vmatpush2.msra.mxu0 0.0
    %1375 = vmatprep.subr.mxu0 0.0
    %1376 = vmatpush2.msra.mxu0 0.0
    %1377 = vmatprep.subr.mxu0 0.0
    %1378 = vmatpush2.msra.mxu0 0.0
    %1379 = vmatprep.subr.mxu0 0.0
    %1380 = vmatpush2.msra.mxu0 0.0
    %1381 = vmatprep.subr.mxu0 0.0
    %1382 = vmatpush2.msra.mxu0 0.0
    %1383 = vmatprep.subr.mxu0 0.0
    %1384 = vmatpush2.msra.mxu0 0.0
    %1385 = vmatprep.subr.mxu0 0.0
    %1386 = vmatpush2.msra.mxu0 0.0
    %1387 = vmatprep.mubr.f32.mxu0 0.0
    %1388 = vmatmul.mubr.f32.gmra.mxu0 %v1314
    %v1389 = vpop.f32.mrf.mxu0
    %v1390 = vadd.f32 0.0, %v1389
    %v1391 = vpop.f32.mrf.mxu0
    %v1392 = vadd.f32 0.0, %v1391
    %1393 = vdwg.mxu0
    %1394 = vmatprep.subr.mxu0 0.0
    %1395 = vmatpush1.msra.mxu0 %v454
    %1396 = vmatprep.subr.mxu0 0.0
    %1397 = vmatpush1.msra.mxu0 %v451
    %1398 = vmatprep.subr.mxu0 0.0
    %1399 = vmatpush1.msra.mxu0 %v448
    %1400 = vmatprep.subr.mxu0 0.0
    %1401 = vmatpush1.msra.mxu0 %v445
    %1402 = vmatprep.subr.mxu0 0.0
    %1403 = vmatpush1.msra.mxu0 %v442
    %1404 = vmatprep.subr.mxu0 0.0
    %1405 = vmatpush1.msra.mxu0 %v439
    %1406 = vmatprep.subr.mxu0 0.0
    %1407 = vmatpush1.msra.mxu0 %v436
    %1408 = vmatprep.subr.mxu0 0.0
    %1409 = vmatpush1.msra.mxu0 %v433
    %1410 = vmatprep.subr.mxu0 0.0
    %1411 = vmatpush1.msra.mxu0 %v430
    %1412 = vmatprep.subr.mxu0 0.0
    %1413 = vmatpush1.msra.mxu0 %v427
    %1414 = vmatprep.subr.mxu0 0.0
    %1415 = vmatpush1.msra.mxu0 %v424
    %1416 = vmatprep.subr.mxu0 0.0
    %1417 = vmatpush1.msra.mxu0 %v421
    %1418 = vmatprep.subr.mxu0 0.0
    %1419 = vmatpush1.msra.mxu0 %v418
    %1420 = vmatprep.subr.mxu0 0.0
    %1421 = vmatpush1.msra.mxu0 %v415
    %1422 = vmatprep.subr.mxu0 0.0
    %1423 = vmatpush1.msra.mxu0 %v412
    %1424 = vmatprep.subr.mxu0 0.0
    %1425 = vmatpush1.msra.mxu0 %v409
    %1426 = vmatprep.subr.mxu0 0.0
    %1427 = vmatpush2.msra.mxu0 0.0
    %1428 = vmatprep.subr.mxu0 0.0
    %1429 = vmatpush2.msra.mxu0 0.0
    %1430 = vmatprep.subr.mxu0 0.0
    %1431 = vmatpush2.msra.mxu0 0.0
    %1432 = vmatprep.subr.mxu0 0.0
    %1433 = vmatpush2.msra.mxu0 0.0
    %1434 = vmatprep.subr.mxu0 0.0
    %1435 = vmatpush2.msra.mxu0 0.0
    %1436 = vmatprep.subr.mxu0 0.0
    %1437 = vmatpush2.msra.mxu0 0.0
    %1438 = vmatprep.subr.mxu0 0.0
    %1439 = vmatpush2.msra.mxu0 0.0
    %1440 = vmatprep.subr.mxu0 0.0
    %1441 = vmatpush2.msra.mxu0 0.0
    %1442 = vmatprep.subr.mxu0 0.0
    %1443 = vmatpush2.msra.mxu0 0.0
    %1444 = vmatprep.subr.mxu0 0.0
    %1445 = vmatpush2.msra.mxu0 0.0
    %1446 = vmatprep.subr.mxu0 0.0
    %1447 = vmatpush2.msra.mxu0 0.0
    %1448 = vmatprep.subr.mxu0 0.0
    %1449 = vmatpush2.msra.mxu0 0.0
    %1450 = vmatprep.subr.mxu0 0.0
    %1451 = vmatpush2.msra.mxu0 0.0
    %1452 = vmatprep.subr.mxu0 0.0
    %1453 = vmatpush2.msra.mxu0 0.0
    %1454 = vmatprep.subr.mxu0 0.0
    %1455 = vmatpush2.msra.mxu0 0.0
    %1456 = vmatprep.subr.mxu0 0.0
    %1457 = vmatpush2.msra.mxu0 0.0
    %1458 = vmatprep.mubr.f32.mxu0 0.0
    %1459 = vmatmul.mubr.f32.gmra.mxu0 %v1314
    %v1460 = vpop.f32.mrf.mxu0
    %v1461 = vadd.f32 0.0, %v1460
    %v1462 = vpop.f32.mrf.mxu0
    %1463 = vdwg.mxu0
    %v1464 = vadd.f32 %v1320, %v1390
    %v1465 = vxor.u32 %v1464, 2147483648
    %v1466 = vmul.f32 %v1465, 1.442695
    %v1467 = vpow.pop %v1466
    %v1468 = vadd.f32 %v1467, 1.0
    %v1469 = vrcp.pop %v1468
    %v1470 = vmul.f32 1.0, %v1469
    %v1471 = vadd.f32 %v1321, %v1392
    %v1472 = vxor.u32 %v1471, 2147483648
    %v1473 = vmul.f32 %v1472, 1.442695
    %v1474 = vpow.pop %v1473
    %v1475 = vadd.f32 %v1474, 1.0
    %v1476 = vrcp.pop %v1475
    %v1477 = vmul.f32 1.0, %v1476
    %v1478 = vadd.f32 %v1461, %v460
    %v1479 = vmul.f32 %v1470, %v1478
    %v1480 = vadd.f32 %v1322, %v1479
    %v1481 = vtanh.pop %v1480
    %v1482 = vsub.f32 1.0, %v1477
    %v1483 = vmul.f32 %v1482, %v1481
    %v1484 = vmul.f32 %v1477, %v1314
    %v1485 = vadd.f32 %v1483, %v1484
    %s1486 = scalar_lea.vmem %s10, 40
    %1487 = vst [vmem:[%s1486] sm:$0xff] %v1485
    %s1488 = smul.u32 6, 3
    %s1489 = smul.addr %s1488, 8
    %s1490 = scalar_lea.vmem [#allocation2], %s1489
    %v1491 = vld [vmem:[%s1490] sm:$0xff]
    %v1492 = vld [vmem:[%s1490 + $0x8] sm:$0xff]
    %v1493 = vld [vmem:[%s1490 + $0x10] sm:$0xff]
    %1494 = vmatprep.subr.mxu0 %v453
    %1495 = vmatpush1.msra.mxu0 %v452
    %1496 = vmatprep.subr.mxu0 %v450
    %1497 = vmatpush1.msra.mxu0 %v449
    %1498 = vmatprep.subr.mxu0 %v447
    %1499 = vmatpush1.msra.mxu0 %v446
    %1500 = vmatprep.subr.mxu0 %v444
    %1501 = vmatpush1.msra.mxu0 %v443
    %1502 = vmatprep.subr.mxu0 %v441
    %1503 = vmatpush1.msra.mxu0 %v440
    %1504 = vmatprep.subr.mxu0 %v438
    %1505 = vmatpush1.msra.mxu0 %v437
    %1506 = vmatprep.subr.mxu0 %v435
    %1507 = vmatpush1.msra.mxu0 %v434
    %1508 = vmatprep.subr.mxu0 %v432
    %1509 = vmatpush1.msra.mxu0 %v431
    %1510 = vmatprep.subr.mxu0 %v429
    %1511 = vmatpush1.msra.mxu0 %v428
    %1512 = vmatprep.subr.mxu0 %v426
    %1513 = vmatpush1.msra.mxu0 %v425
    %1514 = vmatprep.subr.mxu0 %v423
    %1515 = vmatpush1.msra.mxu0 %v422
    %1516 = vmatprep.subr.mxu0 %v420
    %1517 = vmatpush1.msra.mxu0 %v419
    %1518 = vmatprep.subr.mxu0 %v417
    %1519 = vmatpush1.msra.mxu0 %v416
    %1520 = vmatprep.subr.mxu0 %v414
    %1521 = vmatpush1.msra.mxu0 %v413
    %1522 = vmatprep.subr.mxu0 %v411
    %1523 = vmatpush1.msra.mxu0 %v410
    %1524 = vmatprep.subr.mxu0 %v408
    %1525 = vmatpush1.msra.mxu0 %v407
    %1526 = vmatprep.subr.mxu0 0.0
    %1527 = vmatpush2.msra.mxu0 0.0
    %1528 = vmatprep.subr.mxu0 0.0
    %1529 = vmatpush2.msra.mxu0 0.0
    %1530 = vmatprep.subr.mxu0 0.0
    %1531 = vmatpush2.msra.mxu0 0.0
    %1532 = vmatprep.subr.mxu0 0.0
    %1533 = vmatpush2.msra.mxu0 0.0
    %1534 = vmatprep.subr.mxu0 0.0
    %1535 = vmatpush2.msra.mxu0 0.0
    %1536 = vmatprep.subr.mxu0 0.0
    %1537 = vmatpush2.msra.mxu0 0.0
    %1538 = vmatprep.subr.mxu0 0.0
    %1539 = vmatpush2.msra.mxu0 0.0
    %1540 = vmatprep.subr.mxu0 0.0
    %1541 = vmatpush2.msra.mxu0 0.0
    %1542 = vmatprep.subr.mxu0 0.0
    %1543 = vmatpush2.msra.mxu0 0.0
    %1544 = vmatprep.subr.mxu0 0.0
    %1545 = vmatpush2.msra.mxu0 0.0
    %1546 = vmatprep.subr.mxu0 0.0
    %1547 = vmatpush2.msra.mxu0 0.0
    %1548 = vmatprep.subr.mxu0 0.0
    %1549 = vmatpush2.msra.mxu0 0.0
    %1550 = vmatprep.subr.mxu0 0.0
    %1551 = vmatpush2.msra.mxu0 0.0
    %1552 = vmatprep.subr.mxu0 0.0
    %1553 = vmatpush2.msra.mxu0 0.0
    %1554 = vmatprep.subr.mxu0 0.0
    %1555 = vmatpush2.msra.mxu0 0.0
    %1556 = vmatprep.subr.mxu0 0.0
    %1557 = vmatpush2.msra.mxu0 0.0
    %1558 = vmatprep.mubr.f32.mxu0 0.0
    %1559 = vmatmul.mubr.f32.gmra.mxu0 %v1485
    %v1560 = vpop.f32.mrf.mxu0
    %v1561 = vadd.f32 0.0, %v1560
    %v1562 = vpop.f32.mrf.mxu0
    %v1563 = vadd.f32 0.0, %v1562
    %1564 = vdwg.mxu0
    %1565 = vmatprep.subr.mxu0 0.0
    %1566 = vmatpush1.msra.mxu0 %v454
    %1567 = vmatprep.subr.mxu0 0.0
    %1568 = vmatpush1.msra.mxu0 %v451
    %1569 = vmatprep.subr.mxu0 0.0
    %1570 = vmatpush1.msra.mxu0 %v448
    %1571 = vmatprep.subr.mxu0 0.0
    %1572 = vmatpush1.msra.mxu0 %v445
    %1573 = vmatprep.subr.mxu0 0.0
    %1574 = vmatpush1.msra.mxu0 %v442
    %1575 = vmatprep.subr.mxu0 0.0
    %1576 = vmatpush1.msra.mxu0 %v439
    %1577 = vmatprep.subr.mxu0 0.0
    %1578 = vmatpush1.msra.mxu0 %v436
    %1579 = vmatprep.subr.mxu0 0.0
    %1580 = vmatpush1.msra.mxu0 %v433
    %1581 = vmatprep.subr.mxu0 0.0
    %1582 = vmatpush1.msra.mxu0 %v430
    %1583 = vmatprep.subr.mxu0 0.0
    %1584 = vmatpush1.msra.mxu0 %v427
    %1585 = vmatprep.subr.mxu0 0.0
    %1586 = vmatpush1.msra.mxu0 %v424
    %1587 = vmatprep.subr.mxu0 0.0
    %1588 = vmatpush1.msra.mxu0 %v421
    %1589 = vmatprep.subr.mxu0 0.0
    %1590 = vmatpush1.msra.mxu0 %v418
    %1591 = vmatprep.subr.mxu0 0.0
    %1592 = vmatpush1.msra.mxu0 %v415
    %1593 = vmatprep.subr.mxu0 0.0
    %1594 = vmatpush1.msra.mxu0 %v412
    %1595 = vmatprep.subr.mxu0 0.0
    %1596 = vmatpush1.msra.mxu0 %v409
    %1597 = vmatprep.subr.mxu0 0.0
    %1598 = vmatpush2.msra.mxu0 0.0
    %1599 = vmatprep.subr.mxu0 0.0
    %1600 = vmatpush2.msra.mxu0 0.0
    %1601 = vmatprep.subr.mxu0 0.0
    %1602 = vmatpush2.msra.mxu0 0.0
    %1603 = vmatprep.subr.mxu0 0.0
    %1604 = vmatpush2.msra.mxu0 0.0
    %1605 = vmatprep.subr.mxu0 0.0
    %1606 = vmatpush2.msra.mxu0 0.0
    %1607 = vmatprep.subr.mxu0 0.0
    %1608 = vmatpush2.msra.mxu0 0.0
    %1609 = vmatprep.subr.mxu0 0.0
    %1610 = vmatpush2.msra.mxu0 0.0
    %1611 = vmatprep.subr.mxu0 0.0
    %1612 = vmatpush2.msra.mxu0 0.0
    %1613 = vmatprep.subr.mxu0 0.0
    %1614 = vmatpush2.msra.mxu0 0.0
    %1615 = vmatprep.subr.mxu0 0.0
    %1616 = vmatpush2.msra.mxu0 0.0
    %1617 = vmatprep.subr.mxu0 0.0
    %1618 = vmatpush2.msra.mxu0 0.0
    %1619 = vmatprep.subr.mxu0 0.0
    %1620 = vmatpush2.msra.mxu0 0.0
    %1621 = vmatprep.subr.mxu0 0.0
    %1622 = vmatpush2.msra.mxu0 0.0
    %1623 = vmatprep.subr.mxu0 0.0
    %1624 = vmatpush2.msra.mxu0 0.0
    %1625 = vmatprep.subr.mxu0 0.0
    %1626 = vmatpush2.msra.mxu0 0.0
    %1627 = vmatprep.subr.mxu0 0.0
    %1628 = vmatpush2.msra.mxu0 0.0
    %1629 = vmatprep.mubr.f32.mxu0 0.0
    %1630 = vmatmul.mubr.f32.gmra.mxu0 %v1485
    %v1631 = vpop.f32.mrf.mxu0
    %v1632 = vadd.f32 0.0, %v1631
    %v1633 = vpop.f32.mrf.mxu0
    %1634 = vdwg.mxu0
    %v1635 = vadd.f32 %v1491, %v1561
    %v1636 = vxor.u32 %v1635, 2147483648
    %v1637 = vmul.f32 %v1636, 1.442695
    %v1638 = vpow.pop %v1637
    %v1639 = vadd.f32 %v1638, 1.0
    %v1640 = vrcp.pop %v1639
    %v1641 = vmul.f32 1.0, %v1640
    %v1642 = vadd.f32 %v1492, %v1563
    %v1643 = vxor.u32 %v1642, 2147483648
    %v1644 = vmul.f32 %v1643, 1.442695
    %v1645 = vpow.pop %v1644
    %v1646 = vadd.f32 %v1645, 1.0
    %v1647 = vrcp.pop %v1646
    %v1648 = vmul.f32 1.0, %v1647
    %v1649 = vadd.f32 %v1632, %v460
    %v1650 = vmul.f32 %v1641, %v1649
    %v1651 = vadd.f32 %v1493, %v1650
    %v1652 = vtanh.pop %v1651
    %v1653 = vsub.f32 1.0, %v1648
    %v1654 = vmul.f32 %v1653, %v1652
    %v1655 = vmul.f32 %v1648, %v1485
    %v1656 = vadd.f32 %v1654, %v1655
    %s1657 = scalar_lea.vmem %s10, 48
    %1658 = vst [vmem:[%s1657] sm:$0xff] %v1656
    %s1659 = smul.u32 7, 3
    %s1660 = smul.addr %s1659, 8
    %s1661 = scalar_lea.vmem [#allocation2], %s1660
    %v1662 = vld [vmem:[%s1661] sm:$0xff]
    %v1663 = vld [vmem:[%s1661 + $0x8] sm:$0xff]
    %v1664 = vld [vmem:[%s1661 + $0x10] sm:$0xff]
    %1665 = vmatprep.subr.mxu0 %v453
    %1666 = vmatpush1.msra.mxu0 %v452
    %1667 = vmatprep.subr.mxu0 %v450
    %1668 = vmatpush1.msra.mxu0 %v449
    %1669 = vmatprep.subr.mxu0 %v447
    %1670 = vmatpush1.msra.mxu0 %v446
    %1671 = vmatprep.subr.mxu0 %v444
    %1672 = vmatpush1.msra.mxu0 %v443
    %1673 = vmatprep.subr.mxu0 %v441
    %1674 = vmatpush1.msra.mxu0 %v440
    %1675 = vmatprep.subr.mxu0 %v438
    %1676 = vmatpush1.msra.mxu0 %v437
    %1677 = vmatprep.subr.mxu0 %v435
    %1678 = vmatpush1.msra.mxu0 %v434
    %1679 = vmatprep.subr.mxu0 %v432
    %1680 = vmatpush1.msra.mxu0 %v431
    %1681 = vmatprep.subr.mxu0 %v429
    %1682 = vmatpush1.msra.mxu0 %v428
    %1683 = vmatprep.subr.mxu0 %v426
    %1684 = vmatpush1.msra.mxu0 %v425
    %1685 = vmatprep.subr.mxu0 %v423
    %1686 = vmatpush1.msra.mxu0 %v422
    %1687 = vmatprep.subr.mxu0 %v420
    %1688 = vmatpush1.msra.mxu0 %v419
    %1689 = vmatprep.subr.mxu0 %v417
    %1690 = vmatpush1.msra.mxu0 %v416
    %1691 = vmatprep.subr.mxu0 %v414
    %1692 = vmatpush1.msra.mxu0 %v413
    %1693 = vmatprep.subr.mxu0 %v411
    %1694 = vmatpush1.msra.mxu0 %v410
    %1695 = vmatprep.subr.mxu0 %v408
    %1696 = vmatpush1.msra.mxu0 %v407
    %1697 = vmatprep.subr.mxu0 0.0
    %1698 = vmatpush2.msra.mxu0 0.0
    %1699 = vmatprep.subr.mxu0 0.0
    %1700 = vmatpush2.msra.mxu0 0.0
    %1701 = vmatprep.subr.mxu0 0.0
    %1702 = vmatpush2.msra.mxu0 0.0
    %1703 = vmatprep.subr.mxu0 0.0
    %1704 = vmatpush2.msra.mxu0 0.0
    %1705 = vmatprep.subr.mxu0 0.0
    %1706 = vmatpush2.msra.mxu0 0.0
    %1707 = vmatprep.subr.mxu0 0.0
    %1708 = vmatpush2.msra.mxu0 0.0
    %1709 = vmatprep.subr.mxu0 0.0
    %1710 = vmatpush2.msra.mxu0 0.0
    %1711 = vmatprep.subr.mxu0 0.0
    %1712 = vmatpush2.msra.mxu0 0.0
    %1713 = vmatprep.subr.mxu0 0.0
    %1714 = vmatpush2.msra.mxu0 0.0
    %1715 = vmatprep.subr.mxu0 0.0
    %1716 = vmatpush2.msra.mxu0 0.0
    %1717 = vmatprep.subr.mxu0 0.0
    %1718 = vmatpush2.msra.mxu0 0.0
    %1719 = vmatprep.subr.mxu0 0.0
    %1720 = vmatpush2.msra.mxu0 0.0
    %1721 = vmatprep.subr.mxu0 0.0
    %1722 = vmatpush2.msra.mxu0 0.0
    %1723 = vmatprep.subr.mxu0 0.0
    %1724 = vmatpush2.msra.mxu0 0.0
    %1725 = vmatprep.subr.mxu0 0.0
    %1726 = vmatpush2.msra.mxu0 0.0
    %1727 = vmatprep.subr.mxu0 0.0
    %1728 = vmatpush2.msra.mxu0 0.0
    %1729 = vmatprep.mubr.f32.mxu0 0.0
    %1730 = vmatmul.mubr.f32.gmra.mxu0 %v1656
    %v1731 = vpop.f32.mrf.mxu0
    %v1732 = vadd.f32 0.0, %v1731
    %v1733 = vpop.f32.mrf.mxu0
    %v1734 = vadd.f32 0.0, %v1733
    %1735 = vdwg.mxu0
    %1736 = vmatprep.subr.mxu0 0.0
    %1737 = vmatpush1.msra.mxu0 %v454
    %1738 = vmatprep.subr.mxu0 0.0
    %1739 = vmatpush1.msra.mxu0 %v451
    %1740 = vmatprep.subr.mxu0 0.0
    %1741 = vmatpush1.msra.mxu0 %v448
    %1742 = vmatprep.subr.mxu0 0.0
    %1743 = vmatpush1.msra.mxu0 %v445
    %1744 = vmatprep.subr.mxu0 0.0
    %1745 = vmatpush1.msra.mxu0 %v442
    %1746 = vmatprep.subr.mxu0 0.0
    %1747 = vmatpush1.msra.mxu0 %v439
    %1748 = vmatprep.subr.mxu0 0.0
    %1749 = vmatpush1.msra.mxu0 %v436
    %1750 = vmatprep.subr.mxu0 0.0
    %1751 = vmatpush1.msra.mxu0 %v433
    %1752 = vmatprep.subr.mxu0 0.0
    %1753 = vmatpush1.msra.mxu0 %v430
    %1754 = vmatprep.subr.mxu0 0.0
    %1755 = vmatpush1.msra.mxu0 %v427
    %1756 = vmatprep.subr.mxu0 0.0
    %1757 = vmatpush1.msra.mxu0 %v424
    %1758 = vmatprep.subr.mxu0 0.0
    %1759 = vmatpush1.msra.mxu0 %v421
    %1760 = vmatprep.subr.mxu0 0.0
    %1761 = vmatpush1.msra.mxu0 %v418
    %1762 = vmatprep.subr.mxu0 0.0
    %1763 = vmatpush1.msra.mxu0 %v415
    %1764 = vmatprep.subr.mxu0 0.0
    %1765 = vmatpush1.msra.mxu0 %v412
    %1766 = vmatprep.subr.mxu0 0.0
    %1767 = vmatpush1.msra.mxu0 %v409
    %1768 = vmatprep.subr.mxu0 0.0
    %1769 = vmatpush2.msra.mxu0 0.0
    %1770 = vmatprep.subr.mxu0 0.0
    %1771 = vmatpush2.msra.mxu0 0.0
    %1772 = vmatprep.subr.mxu0 0.0
    %1773 = vmatpush2.msra.mxu0 0.0
    %1774 = vmatprep.subr.mxu0 0.0
    %1775 = vmatpush2.msra.mxu0 0.0
    %1776 = vmatprep.subr.mxu0 0.0
    %1777 = vmatpush2.msra.mxu0 0.0
    %1778 = vmatprep.subr.mxu0 0.0
    %1779 = vmatpush2.msra.mxu0 0.0
    %1780 = vmatprep.subr.mxu0 0.0
    %1781 = vmatpush2.msra.mxu0 0.0
    %1782 = vmatprep.subr.mxu0 0.0
    %1783 = vmatpush2.msra.mxu0 0.0
    %1784 = vmatprep.subr.mxu0 0.0
    %1785 = vmatpush2.msra.mxu0 0.0
    %1786 = vmatprep.subr.mxu0 0.0
    %1787 = vmatpush2.msra.mxu0 0.0
    %1788 = vmatprep.subr.mxu0 0.0
    %1789 = vmatpush2.msra.mxu0 0.0
    %1790 = vmatprep.subr.mxu0 0.0
    %1791 = vmatpush2.msra.mxu0 0.0
    %1792 = vmatprep.subr.mxu0 0.0
    %1793 = vmatpush2.msra.mxu0 0.0
    %1794 = vmatprep.subr.mxu0 0.0
    %1795 = vmatpush2.msra.mxu0 0.0
    %1796 = vmatprep.subr.mxu0 0.0
    %1797 = vmatpush2.msra.mxu0 0.0
    %1798 = vmatprep.subr.mxu0 0.0
    %1799 = vmatpush2.msra.mxu0 0.0
    %1800 = vmatprep.mubr.f32.mxu0 0.0
    %1801 = vmatmul.mubr.f32.gmra.mxu0 %v1656
    %v1802 = vpop.f32.mrf.mxu0
    %v1803 = vadd.f32 0.0, %v1802
    %v1804 = vpop.f32.mrf.mxu0
    %1805 = vdwg.mxu0
    %v1806 = vadd.f32 %v1662, %v1732
    %v1807 = vxor.u32 %v1806, 2147483648
    %v1808 = vmul.f32 %v1807, 1.442695
    %v1809 = vpow.pop %v1808
    %v1810 = vadd.f32 %v1809, 1.0
    %v1811 = vrcp.pop %v1810
    %v1812 = vmul.f32 1.0, %v1811
    %v1813 = vadd.f32 %v1663, %v1734
    %v1814 = vxor.u32 %v1813, 2147483648
    %v1815 = vmul.f32 %v1814, 1.442695
    %v1816 = vpow.pop %v1815
    %v1817 = vadd.f32 %v1816, 1.0
    %v1818 = vrcp.pop %v1817
    %v1819 = vmul.f32 1.0, %v1818
    %v1820 = vadd.f32 %v1803, %v460
    %v1821 = vmul.f32 %v1812, %v1820
    %v1822 = vadd.f32 %v1664, %v1821
    %v1823 = vtanh.pop %v1822
    %v1824 = vsub.f32 1.0, %v1819
    %v1825 = vmul.f32 %v1824, %v1823
    %v1826 = vmul.f32 %v1819, %v1656
    %v1827 = vadd.f32 %v1825, %v1826
    %s1828 = scalar_lea.vmem %s10, 56
    %1829 = vst [vmem:[%s1828] sm:$0xff] %v1827
    %1830 = vst [vmem:[%s11] sm:$0xff] %v1827
    %v1831 = vld [vmem:[%s10] sm:$0xff]
    %v1832 = vld [vmem:[%s10 + $0x8] sm:$0xff]
    %v1833 = vld [vmem:[%s10 + $0x10] sm:$0xff]
    %v1834 = vld [vmem:[%s10 + $0x18] sm:$0xff]
    %v1835 = vld [vmem:[%s10 + $0x20] sm:$0xff]
    %v1836 = vld [vmem:[%s10 + $0x28] sm:$0xff]
    %v1837 = vld [vmem:[%s10 + $0x30] sm:$0xff]
    %v1838 = vld [vmem:[%s10 + $0x38] sm:$0xff]
    %v1839 = vld [vmem:[#allocation7] sm:$0xff]
    %v1840 = vld [vmem:[#allocation7 + $0x8] sm:$0xff]
    %v1841 = vld [vmem:[#allocation7 + $0x10] sm:$0xff]
    %v1842 = vld [vmem:[#allocation7 + $0x18] sm:$0xff]
    %v1843 = vld [vmem:[#allocation7 + $0x20] sm:$0xff]
    %v1844 = vld [vmem:[#allocation7 + $0x28] sm:$0xff]
    %v1845 = vld [vmem:[#allocation7 + $0x30] sm:$0xff]
    %v1846 = vld [vmem:[#allocation7 + $0x38] sm:$0xff]
    %v1847 = vld [vmem:[#allocation7 + $0x40] sm:$0xff]
    %v1848 = vld [vmem:[#allocation7 + $0x48] sm:$0xff]
    %v1849 = vld [vmem:[#allocation7 + $0x50] sm:$0xff]
    %v1850 = vld [vmem:[#allocation7 + $0x58] sm:$0xff]
    %v1851 = vld [vmem:[#allocation7 + $0x60] sm:$0xff]
    %v1852 = vld [vmem:[#allocation7 + $0x68] sm:$0xff]
    %v1853 = vld [vmem:[#allocation7 + $0x70] sm:$0xff]
    %v1854 = vld [vmem:[#allocation7 + $0x78] sm:$0xff]
    %v1855 = vld [vmem:[#allocation7 + $0x80] sm:$0xff]
    %v1856 = vld [vmem:[#allocation7 + $0x88] sm:$0xff]
    %v1857 = vld [vmem:[#allocation7 + $0x90] sm:$0xff]
    %v1858 = vld [vmem:[#allocation7 + $0x98] sm:$0xff]
    %v1859 = vld [vmem:[#allocation7 + $0xa0] sm:$0xff]
    %v1860 = vld [vmem:[#allocation7 + $0xa8] sm:$0xff]
    %v1861 = vld [vmem:[#allocation7 + $0xb0] sm:$0xff]
    %v1862 = vld [vmem:[#allocation7 + $0xb8] sm:$0xff]
    %v1863 = vld [vmem:[#allocation7 + $0xc0] sm:$0xff]
    %v1864 = vld [vmem:[#allocation7 + $0xc8] sm:$0xff]
    %v1865 = vld [vmem:[#allocation7 + $0xd0] sm:$0xff]
    %v1866 = vld [vmem:[#allocation7 + $0xd8] sm:$0xff]
    %v1867 = vld [vmem:[#allocation7 + $0xe0] sm:$0xff]
    %v1868 = vld [vmem:[#allocation7 + $0xe8] sm:$0xff]
    %v1869 = vld [vmem:[#allocation7 + $0xf0] sm:$0xff]
    %v1870 = vld [vmem:[#allocation7 + $0xf8] sm:$0xff]
    %v1871 = vld [vmem:[#allocation7 + $0x100] sm:$0xff]
    %v1872 = vld [vmem:[#allocation7 + $0x108] sm:$0xff]
    %v1873 = vld [vmem:[#allocation7 + $0x110] sm:$0xff]
    %v1874 = vld [vmem:[#allocation7 + $0x118] sm:$0xff]
    %v1875 = vld [vmem:[#allocation7 + $0x120] sm:$0xff]
    %v1876 = vld [vmem:[#allocation7 + $0x128] sm:$0xff]
    %v1877 = vld [vmem:[#allocation7 + $0x130] sm:$0xff]
    %v1878 = vld [vmem:[#allocation7 + $0x138] sm:$0xff]
    %v1879 = vld [vmem:[#allocation7 + $0x140] sm:$0xff]
    %v1880 = vld [vmem:[#allocation7 + $0x148] sm:$0xff]
    %v1881 = vld [vmem:[#allocation7 + $0x150] sm:$0xff]
    %v1882 = vld [vmem:[#allocation7 + $0x158] sm:$0xff]
    %v1883 = vld [vmem:[#allocation7 + $0x160] sm:$0xff]
    %v1884 = vld [vmem:[#allocation7 + $0x168] sm:$0xff]
    %v1885 = vld [vmem:[#allocation7 + $0x170] sm:$0xff]
    %v1886 = vld [vmem:[#allocation7 + $0x178] sm:$0xff]
    %v1887 = vld [vmem:[%s8] sm:$0x7]
    %v1889 = vlaneseq
    %v1890 = vshrl.u32 %v1889, 7
    %v1891 = vsub.s32 0, %v1890
    %v1892 = vrot.slane %v1887, %v1891
    %v1893 = vlaneseq
    %v1894 = vshrl.u32 %v1893, 7
    %v1895 = vsub.s32 1, %v1894
    %v1896 = vrot.slane %v1887, %v1895
    %v1897 = vlaneseq
    %v1898 = vshrl.u32 %v1897, 7
    %v1899 = vsub.s32 2, %v1898
    %v1900 = vrot.slane %v1887, %v1899
    %1904 = vmatprep.subr.mxu0 %v1885
    %1905 = vmatpush1.msra.mxu0 %v1884
    %1906 = vmatprep.subr.mxu0 %v1882
    %1907 = vmatpush1.msra.mxu0 %v1881
    %1908 = vmatprep.subr.mxu0 %v1879
    %1909 = vmatpush1.msra.mxu0 %v1878
    %1910 = vmatprep.subr.mxu0 %v1876
    %1911 = vmatpush1.msra.mxu0 %v1875
    %1912 = vmatprep.subr.mxu0 %v1873
    %1913 = vmatpush1.msra.mxu0 %v1872
    %1914 = vmatprep.subr.mxu0 %v1870
    %1915 = vmatpush1.msra.mxu0 %v1869
    %1916 = vmatprep.subr.mxu0 %v1867
    %1917 = vmatpush1.msra.mxu0 %v1866
    %1918 = vmatprep.subr.mxu0 %v1864
    %1919 = vmatpush1.msra.mxu0 %v1863
    %1920 = vmatprep.subr.mxu0 %v1861
    %1921 = vmatpush1.msra.mxu0 %v1860
    %1922 = vmatprep.subr.mxu0 %v1858
    %1923 = vmatpush1.msra.mxu0 %v1857
    %1924 = vmatprep.subr.mxu0 %v1855
    %1925 = vmatpush1.msra.mxu0 %v1854
    %1926 = vmatprep.subr.mxu0 %v1852
    %1927 = vmatpush1.msra.mxu0 %v1851
    %1928 = vmatprep.subr.mxu0 %v1849
    %1929 = vmatpush1.msra.mxu0 %v1848
    %1930 = vmatprep.subr.mxu0 %v1846
    %1931 = vmatpush1.msra.mxu0 %v1845
    %1932 = vmatprep.subr.mxu0 %v1843
    %1933 = vmatpush1.msra.mxu0 %v1842
    %1934 = vmatprep.subr.mxu0 %v1840
    %1935 = vmatpush1.msra.mxu0 %v1839
    %1936 = vmatprep.subr.mxu0 0.0
    %1937 = vmatpush2.msra.mxu0 0.0
    %1938 = vmatprep.subr.mxu0 0.0
    %1939 = vmatpush2.msra.mxu0 0.0
    %1940 = vmatprep.subr.mxu0 0.0
    %1941 = vmatpush2.msra.mxu0 0.0
    %1942 = vmatprep.subr.mxu0 0.0
    %1943 = vmatpush2.msra.mxu0 0.0
    %1944 = vmatprep.subr.mxu0 0.0
    %1945 = vmatpush2.msra.mxu0 0.0
    %1946 = vmatprep.subr.mxu0 0.0
    %1947 = vmatpush2.msra.mxu0 0.0
    %1948 = vmatprep.subr.mxu0 0.0
    %1949 = vmatpush2.msra.mxu0 0.0
    %1950 = vmatprep.subr.mxu0 0.0
    %1951 = vmatpush2.msra.mxu0 0.0
    %1952 = vmatprep.subr.mxu0 0.0
    %1953 = vmatpush2.msra.mxu0 0.0
    %1954 = vmatprep.subr.mxu0 0.0
    %1955 = vmatpush2.msra.mxu0 0.0
    %1956 = vmatprep.subr.mxu0 0.0
    %1957 = vmatpush2.msra.mxu0 0.0
    %1958 = vmatprep.subr.mxu0 0.0
    %1959 = vmatpush2.msra.mxu0 0.0
    %1960 = vmatprep.subr.mxu0 0.0
    %1961 = vmatpush2.msra.mxu0 0.0
    %1962 = vmatprep.subr.mxu0 0.0
    %1963 = vmatpush2.msra.mxu0 0.0
    %1964 = vmatprep.subr.mxu0 0.0
    %1965 = vmatpush2.msra.mxu0 0.0
    %1966 = vmatprep.subr.mxu0 0.0
    %1967 = vmatpush2.msra.mxu0 0.0
    %1968 = vmatprep.mubr.f32.mxu0 0.0
    %1969 = vmatmul.mubr.f32.gmra.mxu0 %v1831
    %v1970 = vpop.f32.mrf.mxu0
    %v1971 = vadd.f32 %v1892, %v1970
    %v1972 = vpop.f32.mrf.mxu0
    %v1973 = vadd.f32 %v1896, %v1972
    %1974 = vmatprep.mubr.f32.mxu0 0.0
    %1975 = vmatmul.mubr.f32.gmra.mxu0 %v1832
    %v1976 = vpop.f32.mrf.mxu0
    %v1977 = vadd.f32 %v1892, %v1976
    %v1978 = vpop.f32.mrf.mxu0
    %v1979 = vadd.f32 %v1896, %v1978
    %1980 = vmatprep.mubr.f32.mxu0 0.0
    %1981 = vmatmul.mubr.f32.gmra.mxu0 %v1833
    %v1982 = vpop.f32.mrf.mxu0
    %v1983 = vadd.f32 %v1892, %v1982
    %v1984 = vpop.f32.mrf.mxu0
    %v1985 = vadd.f32 %v1896, %v1984
    %1986 = vmatprep.mubr.f32.mxu0 0.0
    %1987 = vmatmul.mubr.f32.gmra.mxu0 %v1834
    %v1988 = vpop.f32.mrf.mxu0
    %v1989 = vadd.f32 %v1892, %v1988
    %v1990 = vpop.f32.mrf.mxu0
    %v1991 = vadd.f32 %v1896, %v1990
    %1992 = vmatprep.mubr.f32.mxu0 0.0
    %1993 = vmatmul.mubr.f32.gmra.mxu0 %v1835
    %v1994 = vpop.f32.mrf.mxu0
    %v1995 = vadd.f32 %v1892, %v1994
    %v1996 = vpop.f32.mrf.mxu0
    %v1997 = vadd.f32 %v1896, %v1996
    %1998 = vmatprep.mubr.f32.mxu0 0.0
    %1999 = vmatmul.mubr.f32.gmra.mxu0 %v1836
    %v2000 = vpop.f32.mrf.mxu0
    %v2001 = vadd.f32 %v1892, %v2000
    %v2002 = vpop.f32.mrf.mxu0
    %v2003 = vadd.f32 %v1896, %v2002
    %2004 = vmatprep.mubr.f32.mxu0 0.0
    %2005 = vmatmul.mubr.f32.gmra.mxu0 %v1837
    %v2006 = vpop.f32.mrf.mxu0
    %v2007 = vadd.f32 %v1892, %v2006
    %v2008 = vpop.f32.mrf.mxu0
    %v2009 = vadd.f32 %v1896, %v2008
    %2010 = vmatprep.mubr.f32.mxu0 0.0
    %2011 = vmatmul.mubr.f32.gmra.mxu0 %v1838
    %v2012 = vpop.f32.mrf.mxu0
    %v2013 = vadd.f32 %v1892, %v2012
    %v2014 = vpop.f32.mrf.mxu0
    %v2015 = vadd.f32 %v1896, %v2014
    %2016 = vdwg.mxu0
    %2017 = vmatprep.subr.mxu0 0.0
    %2018 = vmatpush1.msra.mxu0 %v1886
    %2019 = vmatprep.subr.mxu0 0.0
    %2020 = vmatpush1.msra.mxu0 %v1883
    %2021 = vmatprep.subr.mxu0 0.0
    %2022 = vmatpush1.msra.mxu0 %v1880
    %2023 = vmatprep.subr.mxu0 0.0
    %2024 = vmatpush1.msra.mxu0 %v1877
    %2025 = vmatprep.subr.mxu0 0.0
    %2026 = vmatpush1.msra.mxu0 %v1874
    %2027 = vmatprep.subr.mxu0 0.0
    %2028 = vmatpush1.msra.mxu0 %v1871
    %2029 = vmatprep.subr.mxu0 0.0
    %2030 = vmatpush1.msra.mxu0 %v1868
    %2031 = vmatprep.subr.mxu0 0.0
    %2032 = vmatpush1.msra.mxu0 %v1865
    %2033 = vmatprep.subr.mxu0 0.0
    %2034 = vmatpush1.msra.mxu0 %v1862
    %2035 = vmatprep.subr.mxu0 0.0
    %2036 = vmatpush1.msra.mxu0 %v1859
    %2037 = vmatprep.subr.mxu0 0.0
    %2038 = vmatpush1.msra.mxu0 %v1856
    %2039 = vmatprep.subr.mxu0 0.0
    %2040 = vmatpush1.msra.mxu0 %v1853
    %2041 = vmatprep.subr.mxu0 0.0
    %2042 = vmatpush1.msra.mxu0 %v1850
    %2043 = vmatprep.subr.mxu0 0.0
    %2044 = vmatpush1.msra.mxu0 %v1847
    %2045 = vmatprep.subr.mxu0 0.0
    %2046 = vmatpush1.msra.mxu0 %v1844
    %2047 = vmatprep.subr.mxu0 0.0
    %2048 = vmatpush1.msra.mxu0 %v1841
    %2049 = vmatprep.subr.mxu0 0.0
    %2050 = vmatpush2.msra.mxu0 0.0
    %2051 = vmatprep.subr.mxu0 0.0
    %2052 = vmatpush2.msra.mxu0 0.0
    %2053 = vmatprep.subr.mxu0 0.0
    %2054 = vmatpush2.msra.mxu0 0.0
    %2055 = vmatprep.subr.mxu0 0.0
    %2056 = vmatpush2.msra.mxu0 0.0
    %2057 = vmatprep.subr.mxu0 0.0
    %2058 = vmatpush2.msra.mxu0 0.0
    %2059 = vmatprep.subr.mxu0 0.0
    %2060 = vmatpush2.msra.mxu0 0.0
    %2061 = vmatprep.subr.mxu0 0.0
    %2062 = vmatpush2.msra.mxu0 0.0
    %2063 = vmatprep.subr.mxu0 0.0
    %2064 = vmatpush2.msra.mxu0 0.0
    %2065 = vmatprep.subr.mxu0 0.0
    %2066 = vmatpush2.msra.mxu0 0.0
    %2067 = vmatprep.subr.mxu0 0.0
    %2068 = vmatpush2.msra.mxu0 0.0
    %2069 = vmatprep.subr.mxu0 0.0
    %2070 = vmatpush2.msra.mxu0 0.0
    %2071 = vmatprep.subr.mxu0 0.0
    %2072 = vmatpush2.msra.mxu0 0.0
    %2073 = vmatprep.subr.mxu0 0.0
    %2074 = vmatpush2.msra.mxu0 0.0
    %2075 = vmatprep.subr.mxu0 0.0
    %2076 = vmatpush2.msra.mxu0 0.0
    %2077 = vmatprep.subr.mxu0 0.0
    %2078 = vmatpush2.msra.mxu0 0.0
    %2079 = vmatprep.subr.mxu0 0.0
    %2080 = vmatpush2.msra.mxu0 0.0
    %2081 = vmatprep.mubr.f32.mxu0 0.0
    %2082 = vmatmul.mubr.f32.gmra.mxu0 %v1831
    %v2083 = vpop.f32.mrf.mxu0
    %v2084 = vadd.f32 %v1900, %v2083
    %v2085 = vpop.f32.mrf.mxu0
    %2086 = vmatprep.mubr.f32.mxu0 0.0
    %2087 = vmatmul.mubr.f32.gmra.mxu0 %v1832
    %v2088 = vpop.f32.mrf.mxu0
    %v2089 = vadd.f32 %v1900, %v2088
    %v2090 = vpop.f32.mrf.mxu0
    %2091 = vmatprep.mubr.f32.mxu0 0.0
    %2092 = vmatmul.mubr.f32.gmra.mxu0 %v1833
    %v2093 = vpop.f32.mrf.mxu0
    %v2094 = vadd.f32 %v1900, %v2093
    %v2095 = vpop.f32.mrf.mxu0
    %2096 = vmatprep.mubr.f32.mxu0 0.0
    %2097 = vmatmul.mubr.f32.gmra.mxu0 %v1834
    %v2098 = vpop.f32.mrf.mxu0
    %v2099 = vadd.f32 %v1900, %v2098
    %v2100 = vpop.f32.mrf.mxu0
    %2101 = vmatprep.mubr.f32.mxu0 0.0
    %2102 = vmatmul.mubr.f32.gmra.mxu0 %v1835
    %v2103 = vpop.f32.mrf.mxu0
    %v2104 = vadd.f32 %v1900, %v2103
    %v2105 = vpop.f32.mrf.mxu0
    %2106 = vmatprep.mubr.f32.mxu0 0.0
    %2107 = vmatmul.mubr.f32.gmra.mxu0 %v1836
    %v2108 = vpop.f32.mrf.mxu0
    %v2109 = vadd.f32 %v1900, %v2108
    %v2110 = vpop.f32.mrf.mxu0
    %2111 = vmatprep.mubr.f32.mxu0 0.0
    %2112 = vmatmul.mubr.f32.gmra.mxu0 %v1837
    %v2113 = vpop.f32.mrf.mxu0
    %v2114 = vadd.f32 %v1900, %v2113
    %v2115 = vpop.f32.mrf.mxu0
    %2116 = vmatprep.mubr.f32.mxu0 0.0
    %2117 = vmatmul.mubr.f32.gmra.mxu0 %v1838
    %v2118 = vpop.f32.mrf.mxu0
    %v2119 = vadd.f32 %v1900, %v2118
    %v2120 = vpop.f32.mrf.mxu0
    %2121 = vdwg.mxu0
    %2122 = vst [vmem:[#allocation2] sm:$0xff] %v1971
    %2123 = vst [vmem:[#allocation2 + $0x8] sm:$0xff] %v1973
    %2124 = vst [vmem:[#allocation2 + $0x10] sm:$0xff] %v2084
    %2125 = vst [vmem:[#allocation2 + $0x18] sm:$0xff] %v1977
    %2126 = vst [vmem:[#allocation2 + $0x20] sm:$0xff] %v1979
    %2127 = vst [vmem:[#allocation2 + $0x28] sm:$0xff] %v2089
    %2128 = vst [vmem:[#allocation2 + $0x30] sm:$0xff] %v1983
    %2129 = vst [vmem:[#allocation2 + $0x38] sm:$0xff] %v1985
    %2130 = vst [vmem:[#allocation2 + $0x40] sm:$0xff] %v2094
    %2131 = vst [vmem:[#allocation2 + $0x48] sm:$0xff] %v1989
    %2132 = vst [vmem:[#allocation2 + $0x50] sm:$0xff] %v1991
    %2133 = vst [vmem:[#allocation2 + $0x58] sm:$0xff] %v2099
    %2134 = vst [vmem:[#allocation2 + $0x60] sm:$0xff] %v1995
    %2135 = vst [vmem:[#allocation2 + $0x68] sm:$0xff] %v1997
    %2136 = vst [vmem:[#allocation2 + $0x70] sm:$0xff] %v2104
    %2137 = vst [vmem:[#allocation2 + $0x78] sm:$0xff] %v2001
    %2138 = vst [vmem:[#allocation2 + $0x80] sm:$0xff] %v2003
    %2139 = vst [vmem:[#allocation2 + $0x88] sm:$0xff] %v2109
    %2140 = vst [vmem:[#allocation2 + $0x90] sm:$0xff] %v2007
    %2141 = vst [vmem:[#allocation2 + $0x98] sm:$0xff] %v2009
    %2142 = vst [vmem:[#allocation2 + $0xa0] sm:$0xff] %v2114
    %2143 = vst [vmem:[#allocation2 + $0xa8] sm:$0xff] %v2013
    %2144 = vst [vmem:[#allocation2 + $0xb0] sm:$0xff] %v2015
    %2145 = vst [vmem:[#allocation2 + $0xb8] sm:$0xff] %v2119
    %v2146 = vld [vmem:[#allocation8] sm:$0xff]
    %v2147 = vld [vmem:[#allocation8 + $0x8] sm:$0xff]
    %v2148 = vld [vmem:[#allocation8 + $0x10] sm:$0xff]
    %v2149 = vld [vmem:[#allocation8 + $0x18] sm:$0xff]
    %v2150 = vld [vmem:[#allocation8 + $0x20] sm:$0xff]
    %v2151 = vld [vmem:[#allocation8 + $0x28] sm:$0xff]
    %v2152 = vld [vmem:[#allocation8 + $0x30] sm:$0xff]
    %v2153 = vld [vmem:[#allocation8 + $0x38] sm:$0xff]
    %v2154 = vld [vmem:[#allocation8 + $0x40] sm:$0xff]
    %v2155 = vld [vmem:[#allocation8 + $0x48] sm:$0xff]
    %v2156 = vld [vmem:[#allocation8 + $0x50] sm:$0xff]
    %v2157 = vld [vmem:[#allocation8 + $0x58] sm:$0xff]
    %v2158 = vld [vmem:[#allocation8 + $0x60] sm:$0xff]
    %v2159 = vld [vmem:[#allocation8 + $0x68] sm:$0xff]
    %v2160 = vld [vmem:[#allocation8 + $0x70] sm:$0xff]
    %v2161 = vld [vmem:[#allocation8 + $0x78] sm:$0xff]
    %v2162 = vld [vmem:[#allocation8 + $0x80] sm:$0xff]
    %v2163 = vld [vmem:[#allocation8 + $0x88] sm:$0xff]
    %v2164 = vld [vmem:[#allocation8 + $0x90] sm:$0xff]
    %v2165 = vld [vmem:[#allocation8 + $0x98] sm:$0xff]
    %v2166 = vld [vmem:[#allocation8 + $0xa0] sm:$0xff]
    %v2167 = vld [vmem:[#allocation8 + $0xa8] sm:$0xff]
    %v2168 = vld [vmem:[#allocation8 + $0xb0] sm:$0xff]
    %v2169 = vld [vmem:[#allocation8 + $0xb8] sm:$0xff]
    %v2170 = vld [vmem:[#allocation8 + $0xc0] sm:$0xff]
    %v2171 = vld [vmem:[#allocation8 + $0xc8] sm:$0xff]
    %v2172 = vld [vmem:[#allocation8 + $0xd0] sm:$0xff]
    %v2173 = vld [vmem:[#allocation8 + $0xd8] sm:$0xff]
    %v2174 = vld [vmem:[#allocation8 + $0xe0] sm:$0xff]
    %v2175 = vld [vmem:[#allocation8 + $0xe8] sm:$0xff]
    %v2176 = vld [vmem:[#allocation8 + $0xf0] sm:$0xff]
    %v2177 = vld [vmem:[#allocation8 + $0xf8] sm:$0xff]
    %v2178 = vld [vmem:[#allocation8 + $0x100] sm:$0xff]
    %v2179 = vld [vmem:[#allocation8 + $0x108] sm:$0xff]
    %v2180 = vld [vmem:[#allocation8 + $0x110] sm:$0xff]
    %v2181 = vld [vmem:[#allocation8 + $0x118] sm:$0xff]
    %v2182 = vld [vmem:[#allocation8 + $0x120] sm:$0xff]
    %v2183 = vld [vmem:[#allocation8 + $0x128] sm:$0xff]
    %v2184 = vld [vmem:[#allocation8 + $0x130] sm:$0xff]
    %v2185 = vld [vmem:[#allocation8 + $0x138] sm:$0xff]
    %v2186 = vld [vmem:[#allocation8 + $0x140] sm:$0xff]
    %v2187 = vld [vmem:[#allocation8 + $0x148] sm:$0xff]
    %v2188 = vld [vmem:[#allocation8 + $0x150] sm:$0xff]
    %v2189 = vld [vmem:[#allocation8 + $0x158] sm:$0xff]
    %v2190 = vld [vmem:[#allocation8 + $0x160] sm:$0xff]
    %v2191 = vld [vmem:[#allocation8 + $0x168] sm:$0xff]
    %v2192 = vld [vmem:[#allocation8 + $0x170] sm:$0xff]
    %v2193 = vld [vmem:[#allocation8 + $0x178] sm:$0xff]
    %v2194 = vld [vmem:[%s9] sm:$0x1]
    %v2196 = vlaneseq
    %v2197 = vshrl.u32 %v2196, 7
    %v2198 = vsub.s32 0, %v2197
    %v2199 = vrot.slane %v2194, %v2198
    %s2201 = scalar_lea.vmem %s1, 8
    %v2202 = vld [vmem:[%s2201] sm:$0xff]
    %v2203 = vld [vmem:[%s465] sm:$0xff]
    %v2204 = vld [vmem:[%s465 + $0x8] sm:$0xff]
    %v2205 = vld [vmem:[%s465 + $0x10] sm:$0xff]
    %2206 = vmatprep.subr.mxu0 %v2192
    %2207 = vmatpush1.msra.mxu0 %v2191
    %2208 = vmatprep.subr.mxu0 %v2189
    %2209 = vmatpush1.msra.mxu0 %v2188
    %2210 = vmatprep.subr.mxu0 %v2186
    %2211 = vmatpush1.msra.mxu0 %v2185
    %2212 = vmatprep.subr.mxu0 %v2183
    %2213 = vmatpush1.msra.mxu0 %v2182
    %2214 = vmatprep.subr.mxu0 %v2180
    %2215 = vmatpush1.msra.mxu0 %v2179
    %2216 = vmatprep.subr.mxu0 %v2177
    %2217 = vmatpush1.msra.mxu0 %v2176
    %2218 = vmatprep.subr.mxu0 %v2174
    %2219 = vmatpush1.msra.mxu0 %v2173
    %2220 = vmatprep.subr.mxu0 %v2171
    %2221 = vmatpush1.msra.mxu0 %v2170
    %2222 = vmatprep.subr.mxu0 %v2168
    %2223 = vmatpush1.msra.mxu0 %v2167
    %2224 = vmatprep.subr.mxu0 %v2165
    %2225 = vmatpush1.msra.mxu0 %v2164
    %2226 = vmatprep.subr.mxu0 %v2162
    %2227 = vmatpush1.msra.mxu0 %v2161
    %2228 = vmatprep.subr.mxu0 %v2159
    %2229 = vmatpush1.msra.mxu0 %v2158
    %2230 = vmatprep.subr.mxu0 %v2156
    %2231 = vmatpush1.msra.mxu0 %v2155
    %2232 = vmatprep.subr.mxu0 %v2153
    %2233 = vmatpush1.msra.mxu0 %v2152
    %2234 = vmatprep.subr.mxu0 %v2150
    %2235 = vmatpush1.msra.mxu0 %v2149
    %2236 = vmatprep.subr.mxu0 %v2147
    %2237 = vmatpush1.msra.mxu0 %v2146
    %2238 = vmatprep.subr.mxu0 0.0
    %2239 = vmatpush2.msra.mxu0 0.0
    %2240 = vmatprep.subr.mxu0 0.0
    %2241 = vmatpush2.msra.mxu0 0.0
    %2242 = vmatprep.subr.mxu0 0.0
    %2243 = vmatpush2.msra.mxu0 0.0
    %2244 = vmatprep.subr.mxu0 0.0
    %2245 = vmatpush2.msra.mxu0 0.0
    %2246 = vmatprep.subr.mxu0 0.0
    %2247 = vmatpush2.msra.mxu0 0.0
    %2248 = vmatprep.subr.mxu0 0.0
    %2249 = vmatpush2.msra.mxu0 0.0
    %2250 = vmatprep.subr.mxu0 0.0
    %2251 = vmatpush2.msra.mxu0 0.0
    %2252 = vmatprep.subr.mxu0 0.0
    %2253 = vmatpush2.msra.mxu0 0.0
    %2254 = vmatprep.subr.mxu0 0.0
    %2255 = vmatpush2.msra.mxu0 0.0
    %2256 = vmatprep.subr.mxu0 0.0
    %2257 = vmatpush2.msra.mxu0 0.0
    %2258 = vmatprep.subr.mxu0 0.0
    %2259 = vmatpush2.msra.mxu0 0.0
    %2260 = vmatprep.subr.mxu0 0.0
    %2261 = vmatpush2.msra.mxu0 0.0
    %2262 = vmatprep.subr.mxu0 0.0
    %2263 = vmatpush2.msra.mxu0 0.0
    %2264 = vmatprep.subr.mxu0 0.0
    %2265 = vmatpush2.msra.mxu0 0.0
    %2266 = vmatprep.subr.mxu0 0.0
    %2267 = vmatpush2.msra.mxu0 0.0
    %2268 = vmatprep.subr.mxu0 0.0
    %2269 = vmatpush2.msra.mxu0 0.0
    %2270 = vmatprep.mubr.f32.mxu0 0.0
    %2271 = vmatmul.mubr.f32.gmra.mxu0 %v2202
    %v2272 = vpop.f32.mrf.mxu0
    %v2273 = vadd.f32 0.0, %v2272
    %v2274 = vpop.f32.mrf.mxu0
    %v2275 = vadd.f32 0.0, %v2274
    %2276 = vdwg.mxu0
    %2277 = vmatprep.subr.mxu0 0.0
    %2278 = vmatpush1.msra.mxu0 %v2193
    %2279 = vmatprep.subr.mxu0 0.0
    %2280 = vmatpush1.msra.mxu0 %v2190
    %2281 = vmatprep.subr.mxu0 0.0
    %2282 = vmatpush1.msra.mxu0 %v2187
    %2283 = vmatprep.subr.mxu0 0.0
    %2284 = vmatpush1.msra.mxu0 %v2184
    %2285 = vmatprep.subr.mxu0 0.0
    %2286 = vmatpush1.msra.mxu0 %v2181
    %2287 = vmatprep.subr.mxu0 0.0
    %2288 = vmatpush1.msra.mxu0 %v2178
    %2289 = vmatprep.subr.mxu0 0.0
    %2290 = vmatpush1.msra.mxu0 %v2175
    %2291 = vmatprep.subr.mxu0 0.0
    %2292 = vmatpush1.msra.mxu0 %v2172
    %2293 = vmatprep.subr.mxu0 0.0
    %2294 = vmatpush1.msra.mxu0 %v2169
    %2295 = vmatprep.subr.mxu0 0.0
    %2296 = vmatpush1.msra.mxu0 %v2166
    %2297 = vmatprep.subr.mxu0 0.0
    %2298 = vmatpush1.msra.mxu0 %v2163
    %2299 = vmatprep.subr.mxu0 0.0
    %2300 = vmatpush1.msra.mxu0 %v2160
    %2301 = vmatprep.subr.mxu0 0.0
    %2302 = vmatpush1.msra.mxu0 %v2157
    %2303 = vmatprep.subr.mxu0 0.0
    %2304 = vmatpush1.msra.mxu0 %v2154
    %2305 = vmatprep.subr.mxu0 0.0
    %2306 = vmatpush1.msra.mxu0 %v2151
    %2307 = vmatprep.subr.mxu0 0.0
    %2308 = vmatpush1.msra.mxu0 %v2148
    %2309 = vmatprep.subr.mxu0 0.0
    %2310 = vmatpush2.msra.mxu0 0.0
    %2311 = vmatprep.subr.mxu0 0.0
    %2312 = vmatpush2.msra.mxu0 0.0
    %2313 = vmatprep.subr.mxu0 0.0
    %2314 = vmatpush2.msra.mxu0 0.0
    %2315 = vmatprep.subr.mxu0 0.0
    %2316 = vmatpush2.msra.mxu0 0.0
    %2317 = vmatprep.subr.mxu0 0.0
    %2318 = vmatpush2.msra.mxu0 0.0
    %2319 = vmatprep.subr.mxu0 0.0
    %2320 = vmatpush2.msra.mxu0 0.0
    %2321 = vmatprep.subr.mxu0 0.0
    %2322 = vmatpush2.msra.mxu0 0.0
    %2323 = vmatprep.subr.mxu0 0.0
    %2324 = vmatpush2.msra.mxu0 0.0
    %2325 = vmatprep.subr.mxu0 0.0
    %2326 = vmatpush2.msra.mxu0 0.0
    %2327 = vmatprep.subr.mxu0 0.0
    %2328 = vmatpush2.msra.mxu0 0.0
    %2329 = vmatprep.subr.mxu0 0.0
    %2330 = vmatpush2.msra.mxu0 0.0
    %2331 = vmatprep.subr.mxu0 0.0
    %2332 = vmatpush2.msra.mxu0 0.0
    %2333 = vmatprep.subr.mxu0 0.0
    %2334 = vmatpush2.msra.mxu0 0.0
    %2335 = vmatprep.subr.mxu0 0.0
    %2336 = vmatpush2.msra.mxu0 0.0
    %2337 = vmatprep.subr.mxu0 0.0
    %2338 = vmatpush2.msra.mxu0 0.0
    %2339 = vmatprep.subr.mxu0 0.0
    %2340 = vmatpush2.msra.mxu0 0.0
    %2341 = vmatprep.mubr.f32.mxu0 0.0
    %2342 = vmatmul.mubr.f32.gmra.mxu0 %v2202
    %v2343 = vpop.f32.mrf.mxu0
    %v2344 = vadd.f32 0.0, %v2343
    %v2345 = vpop.f32.mrf.mxu0
    %2346 = vdwg.mxu0
    %v2347 = vadd.f32 %v2203, %v2273
    %v2348 = vxor.u32 %v2347, 2147483648
    %v2349 = vmul.f32 %v2348, 1.442695
    %v2350 = vpow.pop %v2349
    %v2351 = vadd.f32 %v2350, 1.0
    %v2352 = vrcp.pop %v2351
    %v2353 = vmul.f32 1.0, %v2352
    %v2354 = vadd.f32 %v2204, %v2275
    %v2355 = vxor.u32 %v2354, 2147483648
    %v2356 = vmul.f32 %v2355, 1.442695
    %v2357 = vpow.pop %v2356
    %v2358 = vadd.f32 %v2357, 1.0
    %v2359 = vrcp.pop %v2358
    %v2360 = vmul.f32 1.0, %v2359
    %v2361 = vadd.f32 %v2344, %v2199
    %v2362 = vmul.f32 %v2353, %v2361
    %v2363 = vadd.f32 %v2205, %v2362
    %v2364 = vtanh.pop %v2363
    %v2365 = vsub.f32 1.0, %v2360
    %v2366 = vmul.f32 %v2365, %v2364
    %v2367 = vmul.f32 %v2360, %v2202
    %v2368 = vadd.f32 %v2366, %v2367
    %2369 = vst [vmem:[%s10] sm:$0xff] %v2368
    %v2370 = vld [vmem:[%s635] sm:$0xff]
    %v2371 = vld [vmem:[%s635 + $0x8] sm:$0xff]
    %v2372 = vld [vmem:[%s635 + $0x10] sm:$0xff]
    %2373 = vmatprep.subr.mxu0 %v2192
    %2374 = vmatpush1.msra.mxu0 %v2191
    %2375 = vmatprep.subr.mxu0 %v2189
    %2376 = vmatpush1.msra.mxu0 %v2188
    %2377 = vmatprep.subr.mxu0 %v2186
    %2378 = vmatpush1.msra.mxu0 %v2185
    %2379 = vmatprep.subr.mxu0 %v2183
    %2380 = vmatpush1.msra.mxu0 %v2182
    %2381 = vmatprep.subr.mxu0 %v2180
    %2382 = vmatpush1.msra.mxu0 %v2179
    %2383 = vmatprep.subr.mxu0 %v2177
    %2384 = vmatpush1.msra.mxu0 %v2176
    %2385 = vmatprep.subr.mxu0 %v2174
    %2386 = vmatpush1.msra.mxu0 %v2173
    %2387 = vmatprep.subr.mxu0 %v2171
    %2388 = vmatpush1.msra.mxu0 %v2170
    %2389 = vmatprep.subr.mxu0 %v2168
    %2390 = vmatpush1.msra.mxu0 %v2167
    %2391 = vmatprep.subr.mxu0 %v2165
    %2392 = vmatpush1.msra.mxu0 %v2164
    %2393 = vmatprep.subr.mxu0 %v2162
    %2394 = vmatpush1.msra.mxu0 %v2161
    %2395 = vmatprep.subr.mxu0 %v2159
    %2396 = vmatpush1.msra.mxu0 %v2158
    %2397 = vmatprep.subr.mxu0 %v2156
    %2398 = vmatpush1.msra.mxu0 %v2155
    %2399 = vmatprep.subr.mxu0 %v2153
    %2400 = vmatpush1.msra.mxu0 %v2152
    %2401 = vmatprep.subr.mxu0 %v2150
    %2402 = vmatpush1.msra.mxu0 %v2149
    %2403 = vmatprep.subr.mxu0 %v2147
    %2404 = vmatpush1.msra.mxu0 %v2146
    %2405 = vmatprep.subr.mxu0 0.0
    %2406 = vmatpush2.msra.mxu0 0.0
    %2407 = vmatprep.subr.mxu0 0.0
    %2408 = vmatpush2.msra.mxu0 0.0
    %2409 = vmatprep.subr.mxu0 0.0
    %2410 = vmatpush2.msra.mxu0 0.0
    %2411 = vmatprep.subr.mxu0 0.0
    %2412 = vmatpush2.msra.mxu0 0.0
    %2413 = vmatprep.subr.mxu0 0.0
    %2414 = vmatpush2.msra.mxu0 0.0
    %2415 = vmatprep.subr.mxu0 0.0
    %2416 = vmatpush2.msra.mxu0 0.0
    %2417 = vmatprep.subr.mxu0 0.0
    %2418 = vmatpush2.msra.mxu0 0.0
    %2419 = vmatprep.subr.mxu0 0.0
    %2420 = vmatpush2.msra.mxu0 0.0
    %2421 = vmatprep.subr.mxu0 0.0
    %2422 = vmatpush2.msra.mxu0 0.0
    %2423 = vmatprep.subr.mxu0 0.0
    %2424 = vmatpush2.msra.mxu0 0.0
    %2425 = vmatprep.subr.mxu0 0.0
    %2426 = vmatpush2.msra.mxu0 0.0
    %2427 = vmatprep.subr.mxu0 0.0
    %2428 = vmatpush2.msra.mxu0 0.0
    %2429 = vmatprep.subr.mxu0 0.0
    %2430 = vmatpush2.msra.mxu0 0.0
    %2431 = vmatprep.subr.mxu0 0.0
    %2432 = vmatpush2.msra.mxu0 0.0
    %2433 = vmatprep.subr.mxu0 0.0
    %2434 = vmatpush2.msra.mxu0 0.0
    %2435 = vmatprep.subr.mxu0 0.0
    %2436 = vmatpush2.msra.mxu0 0.0
    %2437 = vmatprep.mubr.f32.mxu0 0.0
    %2438 = vmatmul.mubr.f32.gmra.mxu0 %v2368
    %v2439 = vpop.f32.mrf.mxu0
    %v2440 = vadd.f32 0.0, %v2439
    %v2441 = vpop.f32.mrf.mxu0
    %v2442 = vadd.f32 0.0, %v2441
    %2443 = vdwg.mxu0
    %2444 = vmatprep.subr.mxu0 0.0
    %2445 = vmatpush1.msra.mxu0 %v2193
    %2446 = vmatprep.subr.mxu0 0.0
    %2447 = vmatpush1.msra.mxu0 %v2190
    %2448 = vmatprep.subr.mxu0 0.0
    %2449 = vmatpush1.msra.mxu0 %v2187
    %2450 = vmatprep.subr.mxu0 0.0
    %2451 = vmatpush1.msra.mxu0 %v2184
    %2452 = vmatprep.subr.mxu0 0.0
    %2453 = vmatpush1.msra.mxu0 %v2181
    %2454 = vmatprep.subr.mxu0 0.0
    %2455 = vmatpush1.msra.mxu0 %v2178
    %2456 = vmatprep.subr.mxu0 0.0
    %2457 = vmatpush1.msra.mxu0 %v2175
    %2458 = vmatprep.subr.mxu0 0.0
    %2459 = vmatpush1.msra.mxu0 %v2172
    %2460 = vmatprep.subr.mxu0 0.0
    %2461 = vmatpush1.msra.mxu0 %v2169
    %2462 = vmatprep.subr.mxu0 0.0
    %2463 = vmatpush1.msra.mxu0 %v2166
    %2464 = vmatprep.subr.mxu0 0.0
    %2465 = vmatpush1.msra.mxu0 %v2163
    %2466 = vmatprep.subr.mxu0 0.0
    %2467 = vmatpush1.msra.mxu0 %v2160
    %2468 = vmatprep.subr.mxu0 0.0
    %2469 = vmatpush1.msra.mxu0 %v2157
    %2470 = vmatprep.subr.mxu0 0.0
    %2471 = vmatpush1.msra.mxu0 %v2154
    %2472 = vmatprep.subr.mxu0 0.0
    %2473 = vmatpush1.msra.mxu0 %v2151
    %2474 = vmatprep.subr.mxu0 0.0
    %2475 = vmatpush1.msra.mxu0 %v2148
    %2476 = vmatprep.subr.mxu0 0.0
    %2477 = vmatpush2.msra.mxu0 0.0
    %2478 = vmatprep.subr.mxu0 0.0
    %2479 = vmatpush2.msra.mxu0 0.0
    %2480 = vmatprep.subr.mxu0 0.0
    %2481 = vmatpush2.msra.mxu0 0.0
    %2482 = vmatprep.subr.mxu0 0.0
    %2483 = vmatpush2.msra.mxu0 0.0
    %2484 = vmatprep.subr.mxu0 0.0
    %2485 = vmatpush2.msra.mxu0 0.0
    %2486 = vmatprep.subr.mxu0 0.0
    %2487 = vmatpush2.msra.mxu0 0.0
    %2488 = vmatprep.subr.mxu0 0.0
    %2489 = vmatpush2.msra.mxu0 0.0
    %2490 = vmatprep.subr.mxu0 0.0
    %2491 = vmatpush2.msra.mxu0 0.0
    %2492 = vmatprep.subr.mxu0 0.0
    %2493 = vmatpush2.msra.mxu0 0.0
    %2494 = vmatprep.subr.mxu0 0.0
    %2495 = vmatpush2.msra.mxu0 0.0
    %2496 = vmatprep.subr.mxu0 0.0
    %2497 = vmatpush2.msra.mxu0 0.0
    %2498 = vmatprep.subr.mxu0 0.0
    %2499 = vmatpush2.msra.mxu0 0.0
    %2500 = vmatprep.subr.mxu0 0.0
    %2501 = vmatpush2.msra.mxu0 0.0
    %2502 = vmatprep.subr.mxu0 0.0
    %2503 = vmatpush2.msra.mxu0 0.0
    %2504 = vmatprep.subr.mxu0 0.0
    %2505 = vmatpush2.msra.mxu0 0.0
    %2506 = vmatprep.subr.mxu0 0.0
    %2507 = vmatpush2.msra.mxu0 0.0
    %2508 = vmatprep.mubr.f32.mxu0 0.0
    %2509 = vmatmul.mubr.f32.gmra.mxu0 %v2368
    %v2510 = vpop.f32.mrf.mxu0
    %v2511 = vadd.f32 0.0, %v2510
    %v2512 = vpop.f32.mrf.mxu0
    %2513 = vdwg.mxu0
    %v2514 = vadd.f32 %v2370, %v2440
    %v2515 = vxor.u32 %v2514, 2147483648
    %v2516 = vmul.f32 %v2515, 1.442695
    %v2517 = vpow.pop %v2516
    %v2518 = vadd.f32 %v2517, 1.0
    %v2519 = vrcp.pop %v2518
    %v2520 = vmul.f32 1.0, %v2519
    %v2521 = vadd.f32 %v2371, %v2442
    %v2522 = vxor.u32 %v2521, 2147483648
    %v2523 = vmul.f32 %v2522, 1.442695
    %v2524 = vpow.pop %v2523
    %v2525 = vadd.f32 %v2524, 1.0
    %v2526 = vrcp.pop %v2525
    %v2527 = vmul.f32 1.0, %v2526
    %v2528 = vadd.f32 %v2511, %v2199
    %v2529 = vmul.f32 %v2520, %v2528
    %v2530 = vadd.f32 %v2372, %v2529
    %v2531 = vtanh.pop %v2530
    %v2532 = vsub.f32 1.0, %v2527
    %v2533 = vmul.f32 %v2532, %v2531
    %v2534 = vmul.f32 %v2527, %v2368
    %v2535 = vadd.f32 %v2533, %v2534
    %2536 = vst [vmem:[%s802] sm:$0xff] %v2535
    %v2537 = vld [vmem:[%s806] sm:$0xff]
    %v2538 = vld [vmem:[%s806 + $0x8] sm:$0xff]
    %v2539 = vld [vmem:[%s806 + $0x10] sm:$0xff]
    %2540 = vmatprep.subr.mxu0 %v2192
    %2541 = vmatpush1.msra.mxu0 %v2191
    %2542 = vmatprep.subr.mxu0 %v2189
    %2543 = vmatpush1.msra.mxu0 %v2188
    %2544 = vmatprep.subr.mxu0 %v2186
    %2545 = vmatpush1.msra.mxu0 %v2185
    %2546 = vmatprep.subr.mxu0 %v2183
    %2547 = vmatpush1.msra.mxu0 %v2182
    %2548 = vmatprep.subr.mxu0 %v2180
    %2549 = vmatpush1.msra.mxu0 %v2179
    %2550 = vmatprep.subr.mxu0 %v2177
    %2551 = vmatpush1.msra.mxu0 %v2176
    %2552 = vmatprep.subr.mxu0 %v2174
    %2553 = vmatpush1.msra.mxu0 %v2173
    %2554 = vmatprep.subr.mxu0 %v2171
    %2555 = vmatpush1.msra.mxu0 %v2170
    %2556 = vmatprep.subr.mxu0 %v2168
    %2557 = vmatpush1.msra.mxu0 %v2167
    %2558 = vmatprep.subr.mxu0 %v2165
    %2559 = vmatpush1.msra.mxu0 %v2164
    %2560 = vmatprep.subr.mxu0 %v2162
    %2561 = vmatpush1.msra.mxu0 %v2161
    %2562 = vmatprep.subr.mxu0 %v2159
    %2563 = vmatpush1.msra.mxu0 %v2158
    %2564 = vmatprep.subr.mxu0 %v2156
    %2565 = vmatpush1.msra.mxu0 %v2155
    %2566 = vmatprep.subr.mxu0 %v2153
    %2567 = vmatpush1.msra.mxu0 %v2152
    %2568 = vmatprep.subr.mxu0 %v2150
    %2569 = vmatpush1.msra.mxu0 %v2149
    %2570 = vmatprep.subr.mxu0 %v2147
    %2571 = vmatpush1.msra.mxu0 %v2146
    %2572 = vmatprep.subr.mxu0 0.0
    %2573 = vmatpush2.msra.mxu0 0.0
    %2574 = vmatprep.subr.mxu0 0.0
    %2575 = vmatpush2.msra.mxu0 0.0
    %2576 = vmatprep.subr.mxu0 0.0
    %2577 = vmatpush2.msra.mxu0 0.0
    %2578 = vmatprep.subr.mxu0 0.0
    %2579 = vmatpush2.msra.mxu0 0.0
    %2580 = vmatprep.subr.mxu0 0.0
    %2581 = vmatpush2.msra.mxu0 0.0
    %2582 = vmatprep.subr.mxu0 0.0
    %2583 = vmatpush2.msra.mxu0 0.0
    %2584 = vmatprep.subr.mxu0 0.0
    %2585 = vmatpush2.msra.mxu0 0.0
    %2586 = vmatprep.subr.mxu0 0.0
    %2587 = vmatpush2.msra.mxu0 0.0
    %2588 = vmatprep.subr.mxu0 0.0
    %2589 = vmatpush2.msra.mxu0 0.0
    %2590 = vmatprep.subr.mxu0 0.0
    %2591 = vmatpush2.msra.mxu0 0.0
    %2592 = vmatprep.subr.mxu0 0.0
    %2593 = vmatpush2.msra.mxu0 0.0
    %2594 = vmatprep.subr.mxu0 0.0
    %2595 = vmatpush2.msra.mxu0 0.0
    %2596 = vmatprep.subr.mxu0 0.0
    %2597 = vmatpush2.msra.mxu0 0.0
    %2598 = vmatprep.subr.mxu0 0.0
    %2599 = vmatpush2.msra.mxu0 0.0
    %2600 = vmatprep.subr.mxu0 0.0
    %2601 = vmatpush2.msra.mxu0 0.0
    %2602 = vmatprep.subr.mxu0 0.0
    %2603 = vmatpush2.msra.mxu0 0.0
    %2604 = vmatprep.mubr.f32.mxu0 0.0
    %2605 = vmatmul.mubr.f32.gmra.mxu0 %v2535
    %v2606 = vpop.f32.mrf.mxu0
    %v2607 = vadd.f32 0.0, %v2606
    %v2608 = vpop.f32.mrf.mxu0
    %v2609 = vadd.f32 0.0, %v2608
    %2610 = vdwg.mxu0
    %2611 = vmatprep.subr.mxu0 0.0
    %2612 = vmatpush1.msra.mxu0 %v2193
    %2613 = vmatprep.subr.mxu0 0.0
    %2614 = vmatpush1.msra.mxu0 %v2190
    %2615 = vmatprep.subr.mxu0 0.0
    %2616 = vmatpush1.msra.mxu0 %v2187
    %2617 = vmatprep.subr.mxu0 0.0
    %2618 = vmatpush1.msra.mxu0 %v2184
    %2619 = vmatprep.subr.mxu0 0.0
    %2620 = vmatpush1.msra.mxu0 %v2181
    %2621 = vmatprep.subr.mxu0 0.0
    %2622 = vmatpush1.msra.mxu0 %v2178
    %2623 = vmatprep.subr.mxu0 0.0
    %2624 = vmatpush1.msra.mxu0 %v2175
    %2625 = vmatprep.subr.mxu0 0.0
    %2626 = vmatpush1.msra.mxu0 %v2172
    %2627 = vmatprep.subr.mxu0 0.0
    %2628 = vmatpush1.msra.mxu0 %v2169
    %2629 = vmatprep.subr.mxu0 0.0
    %2630 = vmatpush1.msra.mxu0 %v2166
    %2631 = vmatprep.subr.mxu0 0.0
    %2632 = vmatpush1.msra.mxu0 %v2163
    %2633 = vmatprep.subr.mxu0 0.0
    %2634 = vmatpush1.msra.mxu0 %v2160
    %2635 = vmatprep.subr.mxu0 0.0
    %2636 = vmatpush1.msra.mxu0 %v2157
    %2637 = vmatprep.subr.mxu0 0.0
    %2638 = vmatpush1.msra.mxu0 %v2154
    %2639 = vmatprep.subr.mxu0 0.0
    %2640 = vmatpush1.msra.mxu0 %v2151
    %2641 = vmatprep.subr.mxu0 0.0
    %2642 = vmatpush1.msra.mxu0 %v2148
    %2643 = vmatprep.subr.mxu0 0.0
    %2644 = vmatpush2.msra.mxu0 0.0
    %2645 = vmatprep.subr.mxu0 0.0
    %2646 = vmatpush2.msra.mxu0 0.0
    %2647 = vmatprep.subr.mxu0 0.0
    %2648 = vmatpush2.msra.mxu0 0.0
    %2649 = vmatprep.subr.mxu0 0.0
    %2650 = vmatpush2.msra.mxu0 0.0
    %2651 = vmatprep.subr.mxu0 0.0
    %2652 = vmatpush2.msra.mxu0 0.0
    %2653 = vmatprep.subr.mxu0 0.0
    %2654 = vmatpush2.msra.mxu0 0.0
    %2655 = vmatprep.subr.mxu0 0.0
    %2656 = vmatpush2.msra.mxu0 0.0
    %2657 = vmatprep.subr.mxu0 0.0
    %2658 = vmatpush2.msra.mxu0 0.0
    %2659 = vmatprep.subr.mxu0 0.0
    %2660 = vmatpush2.msra.mxu0 0.0
    %2661 = vmatprep.subr.mxu0 0.0
    %2662 = vmatpush2.msra.mxu0 0.0
    %2663 = vmatprep.subr.mxu0 0.0
    %2664 = vmatpush2.msra.mxu0 0.0
    %2665 = vmatprep.subr.mxu0 0.0
    %2666 = vmatpush2.msra.mxu0 0.0
    %2667 = vmatprep.subr.mxu0 0.0
    %2668 = vmatpush2.msra.mxu0 0.0
    %2669 = vmatprep.subr.mxu0 0.0
    %2670 = vmatpush2.msra.mxu0 0.0
    %2671 = vmatprep.subr.mxu0 0.0
    %2672 = vmatpush2.msra.mxu0 0.0
    %2673 = vmatprep.subr.mxu0 0.0
    %2674 = vmatpush2.msra.mxu0 0.0
    %2675 = vmatprep.mubr.f32.mxu0 0.0
    %2676 = vmatmul.mubr.f32.gmra.mxu0 %v2535
    %v2677 = vpop.f32.mrf.mxu0
    %v2678 = vadd.f32 0.0, %v2677
    %v2679 = vpop.f32.mrf.mxu0
    %2680 = vdwg.mxu0
    %v2681 = vadd.f32 %v2537, %v2607
    %v2682 = vxor.u32 %v2681, 2147483648
    %v2683 = vmul.f32 %v2682, 1.442695
    %v2684 = vpow.pop %v2683
    %v2685 = vadd.f32 %v2684, 1.0
    %v2686 = vrcp.pop %v2685
    %v2687 = vmul.f32 1.0, %v2686
    %v2688 = vadd.f32 %v2538, %v2609
    %v2689 = vxor.u32 %v2688, 2147483648
    %v2690 = vmul.f32 %v2689, 1.442695
    %v2691 = vpow.pop %v2690
    %v2692 = vadd.f32 %v2691, 1.0
    %v2693 = vrcp.pop %v2692
    %v2694 = vmul.f32 1.0, %v2693
    %v2695 = vadd.f32 %v2678, %v2199
    %v2696 = vmul.f32 %v2687, %v2695
    %v2697 = vadd.f32 %v2539, %v2696
    %v2698 = vtanh.pop %v2697
    %v2699 = vsub.f32 1.0, %v2694
    %v2700 = vmul.f32 %v2699, %v2698
    %v2701 = vmul.f32 %v2694, %v2535
    %v2702 = vadd.f32 %v2700, %v2701
    %2703 = vst [vmem:[%s973] sm:$0xff] %v2702
    %v2704 = vld [vmem:[%s977] sm:$0xff]
    %v2705 = vld [vmem:[%s977 + $0x8] sm:$0xff]
    %v2706 = vld [vmem:[%s977 + $0x10] sm:$0xff]
    %2707 = vmatprep.subr.mxu0 %v2192
    %2708 = vmatpush1.msra.mxu0 %v2191
    %2709 = vmatprep.subr.mxu0 %v2189
    %2710 = vmatpush1.msra.mxu0 %v2188
    %2711 = vmatprep.subr.mxu0 %v2186
    %2712 = vmatpush1.msra.mxu0 %v2185
    %2713 = vmatprep.subr.mxu0 %v2183
    %2714 = vmatpush1.msra.mxu0 %v2182
    %2715 = vmatprep.subr.mxu0 %v2180
    %2716 = vmatpush1.msra.mxu0 %v2179
    %2717 = vmatprep.subr.mxu0 %v2177
    %2718 = vmatpush1.msra.mxu0 %v2176
    %2719 = vmatprep.subr.mxu0 %v2174
    %2720 = vmatpush1.msra.mxu0 %v2173
    %2721 = vmatprep.subr.mxu0 %v2171
    %2722 = vmatpush1.msra.mxu0 %v2170
    %2723 = vmatprep.subr.mxu0 %v2168
    %2724 = vmatpush1.msra.mxu0 %v2167
    %2725 = vmatprep.subr.mxu0 %v2165
    %2726 = vmatpush1.msra.mxu0 %v2164
    %2727 = vmatprep.subr.mxu0 %v2162
    %2728 = vmatpush1.msra.mxu0 %v2161
    %2729 = vmatprep.subr.mxu0 %v2159
    %2730 = vmatpush1.msra.mxu0 %v2158
    %2731 = vmatprep.subr.mxu0 %v2156
    %2732 = vmatpush1.msra.mxu0 %v2155
    %2733 = vmatprep.subr.mxu0 %v2153
    %2734 = vmatpush1.msra.mxu0 %v2152
    %2735 = vmatprep.subr.mxu0 %v2150
    %2736 = vmatpush1.msra.mxu0 %v2149
    %2737 = vmatprep.subr.mxu0 %v2147
    %2738 = vmatpush1.msra.mxu0 %v2146
    %2739 = vmatprep.subr.mxu0 0.0
    %2740 = vmatpush2.msra.mxu0 0.0
    %2741 = vmatprep.subr.mxu0 0.0
    %2742 = vmatpush2.msra.mxu0 0.0
    %2743 = vmatprep.subr.mxu0 0.0
    %2744 = vmatpush2.msra.mxu0 0.0
    %2745 = vmatprep.subr.mxu0 0.0
    %2746 = vmatpush2.msra.mxu0 0.0
    %2747 = vmatprep.subr.mxu0 0.0
    %2748 = vmatpush2.msra.mxu0 0.0
    %2749 = vmatprep.subr.mxu0 0.0
    %2750 = vmatpush2.msra.mxu0 0.0
    %2751 = vmatprep.subr.mxu0 0.0
    %2752 = vmatpush2.msra.mxu0 0.0
    %2753 = vmatprep.subr.mxu0 0.0
    %2754 = vmatpush2.msra.mxu0 0.0
    %2755 = vmatprep.subr.mxu0 0.0
    %2756 = vmatpush2.msra.mxu0 0.0
    %2757 = vmatprep.subr.mxu0 0.0
    %2758 = vmatpush2.msra.mxu0 0.0
    %2759 = vmatprep.subr.mxu0 0.0
    %2760 = vmatpush2.msra.mxu0 0.0
    %2761 = vmatprep.subr.mxu0 0.0
    %2762 = vmatpush2.msra.mxu0 0.0
    %2763 = vmatprep.subr.mxu0 0.0
    %2764 = vmatpush2.msra.mxu0 0.0
    %2765 = vmatprep.subr.mxu0 0.0
    %2766 = vmatpush2.msra.mxu0 0.0
    %2767 = vmatprep.subr.mxu0 0.0
    %2768 = vmatpush2.msra.mxu0 0.0
    %2769 = vmatprep.subr.mxu0 0.0
    %2770 = vmatpush2.msra.mxu0 0.0
    %2771 = vmatprep.mubr.f32.mxu0 0.0
    %2772 = vmatmul.mubr.f32.gmra.mxu0 %v2702
    %v2773 = vpop.f32.mrf.mxu0
    %v2774 = vadd.f32 0.0, %v2773
    %v2775 = vpop.f32.mrf.mxu0
    %v2776 = vadd.f32 0.0, %v2775
    %2777 = vdwg.mxu0
    %2778 = vmatprep.subr.mxu0 0.0
    %2779 = vmatpush1.msra.mxu0 %v2193
    %2780 = vmatprep.subr.mxu0 0.0
    %2781 = vmatpush1.msra.mxu0 %v2190
    %2782 = vmatprep.subr.mxu0 0.0
    %2783 = vmatpush1.msra.mxu0 %v2187
    %2784 = vmatprep.subr.mxu0 0.0
    %2785 = vmatpush1.msra.mxu0 %v2184
    %2786 = vmatprep.subr.mxu0 0.0
    %2787 = vmatpush1.msra.mxu0 %v2181
    %2788 = vmatprep.subr.mxu0 0.0
    %2789 = vmatpush1.msra.mxu0 %v2178
    %2790 = vmatprep.subr.mxu0 0.0
    %2791 = vmatpush1.msra.mxu0 %v2175
    %2792 = vmatprep.subr.mxu0 0.0
    %2793 = vmatpush1.msra.mxu0 %v2172
    %2794 = vmatprep.subr.mxu0 0.0
    %2795 = vmatpush1.msra.mxu0 %v2169
    %2796 = vmatprep.subr.mxu0 0.0
    %2797 = vmatpush1.msra.mxu0 %v2166
    %2798 = vmatprep.subr.mxu0 0.0
    %2799 = vmatpush1.msra.mxu0 %v2163
    %2800 = vmatprep.subr.mxu0 0.0
    %2801 = vmatpush1.msra.mxu0 %v2160
    %2802 = vmatprep.subr.mxu0 0.0
    %2803 = vmatpush1.msra.mxu0 %v2157
    %2804 = vmatprep.subr.mxu0 0.0
    %2805 = vmatpush1.msra.mxu0 %v2154
    %2806 = vmatprep.subr.mxu0 0.0
    %2807 = vmatpush1.msra.mxu0 %v2151
    %2808 = vmatprep.subr.mxu0 0.0
    %2809 = vmatpush1.msra.mxu0 %v2148
    %2810 = vmatprep.subr.mxu0 0.0
    %2811 = vmatpush2.msra.mxu0 0.0
    %2812 = vmatprep.subr.mxu0 0.0
    %2813 = vmatpush2.msra.mxu0 0.0
    %2814 = vmatprep.subr.mxu0 0.0
    %2815 = vmatpush2.msra.mxu0 0.0
    %2816 = vmatprep.subr.mxu0 0.0
    %2817 = vmatpush2.msra.mxu0 0.0
    %2818 = vmatprep.subr.mxu0 0.0
    %2819 = vmatpush2.msra.mxu0 0.0
    %2820 = vmatprep.subr.mxu0 0.0
    %2821 = vmatpush2.msra.mxu0 0.0
    %2822 = vmatprep.subr.mxu0 0.0
    %2823 = vmatpush2.msra.mxu0 0.0
    %2824 = vmatprep.subr.mxu0 0.0
    %2825 = vmatpush2.msra.mxu0 0.0
    %2826 = vmatprep.subr.mxu0 0.0
    %2827 = vmatpush2.msra.mxu0 0.0
    %2828 = vmatprep.subr.mxu0 0.0
    %2829 = vmatpush2.msra.mxu0 0.0
    %2830 = vmatprep.subr.mxu0 0.0
    %2831 = vmatpush2.msra.mxu0 0.0
    %2832 = vmatprep.subr.mxu0 0.0
    %2833 = vmatpush2.msra.mxu0 0.0
    %2834 = vmatprep.subr.mxu0 0.0
    %2835 = vmatpush2.msra.mxu0 0.0
    %2836 = vmatprep.subr.mxu0 0.0
    %2837 = vmatpush2.msra.mxu0 0.0
    %2838 = vmatprep.subr.mxu0 0.0
    %2839 = vmatpush2.msra.mxu0 0.0
    %2840 = vmatprep.subr.mxu0 0.0
    %2841 = vmatpush2.msra.mxu0 0.0
    %2842 = vmatprep.mubr.f32.mxu0 0.0
    %2843 = vmatmul.mubr.f32.gmra.mxu0 %v2702
    %v2844 = vpop.f32.mrf.mxu0
    %v2845 = vadd.f32 0.0, %v2844
    %v2846 = vpop.f32.mrf.mxu0
    %2847 = vdwg.mxu0
    %v2848 = vadd.f32 %v2704, %v2774
    %v2849 = vxor.u32 %v2848, 2147483648
    %v2850 = vmul.f32 %v2849, 1.442695
    %v2851 = vpow.pop %v2850
    %v2852 = vadd.f32 %v2851, 1.0
    %v2853 = vrcp.pop %v2852
    %v2854 = vmul.f32 1.0, %v2853
    %v2855 = vadd.f32 %v2705, %v2776
    %v2856 = vxor.u32 %v2855, 2147483648
    %v2857 = vmul.f32 %v2856, 1.442695
    %v2858 = vpow.pop %v2857
    %v2859 = vadd.f32 %v2858, 1.0
    %v2860 = vrcp.pop %v2859
    %v2861 = vmul.f32 1.0, %v2860
    %v2862 = vadd.f32 %v2845, %v2199
    %v2863 = vmul.f32 %v2854, %v2862
    %v2864 = vadd.f32 %v2706, %v2863
    %v2865 = vtanh.pop %v2864
    %v2866 = vsub.f32 1.0, %v2861
    %v2867 = vmul.f32 %v2866, %v2865
    %v2868 = vmul.f32 %v2861, %v2702
    %v2869 = vadd.f32 %v2867, %v2868
    %2870 = vst [vmem:[%s1144] sm:$0xff] %v2869
    %v2871 = vld [vmem:[%s1148] sm:$0xff]
    %v2872 = vld [vmem:[%s1148 + $0x8] sm:$0xff]
    %v2873 = vld [vmem:[%s1148 + $0x10] sm:$0xff]
    %2874 = vmatprep.subr.mxu0 %v2192
    %2875 = vmatpush1.msra.mxu0 %v2191
    %2876 = vmatprep.subr.mxu0 %v2189
    %2877 = vmatpush1.msra.mxu0 %v2188
    %2878 = vmatprep.subr.mxu0 %v2186
    %2879 = vmatpush1.msra.mxu0 %v2185
    %2880 = vmatprep.subr.mxu0 %v2183
    %2881 = vmatpush1.msra.mxu0 %v2182
    %2882 = vmatprep.subr.mxu0 %v2180
    %2883 = vmatpush1.msra.mxu0 %v2179
    %2884 = vmatprep.subr.mxu0 %v2177
    %2885 = vmatpush1.msra.mxu0 %v2176
    %2886 = vmatprep.subr.mxu0 %v2174
    %2887 = vmatpush1.msra.mxu0 %v2173
    %2888 = vmatprep.subr.mxu0 %v2171
    %2889 = vmatpush1.msra.mxu0 %v2170
    %2890 = vmatprep.subr.mxu0 %v2168
    %2891 = vmatpush1.msra.mxu0 %v2167
    %2892 = vmatprep.subr.mxu0 %v2165
    %2893 = vmatpush1.msra.mxu0 %v2164
    %2894 = vmatprep.subr.mxu0 %v2162
    %2895 = vmatpush1.msra.mxu0 %v2161
    %2896 = vmatprep.subr.mxu0 %v2159
    %2897 = vmatpush1.msra.mxu0 %v2158
    %2898 = vmatprep.subr.mxu0 %v2156
    %2899 = vmatpush1.msra.mxu0 %v2155
    %2900 = vmatprep.subr.mxu0 %v2153
    %2901 = vmatpush1.msra.mxu0 %v2152
    %2902 = vmatprep.subr.mxu0 %v2150
    %2903 = vmatpush1.msra.mxu0 %v2149
    %2904 = vmatprep.subr.mxu0 %v2147
    %2905 = vmatpush1.msra.mxu0 %v2146
    %2906 = vmatprep.subr.mxu0 0.0
    %2907 = vmatpush2.msra.mxu0 0.0
    %2908 = vmatprep.subr.mxu0 0.0
    %2909 = vmatpush2.msra.mxu0 0.0
    %2910 = vmatprep.subr.mxu0 0.0
    %2911 = vmatpush2.msra.mxu0 0.0
    %2912 = vmatprep.subr.mxu0 0.0
    %2913 = vmatpush2.msra.mxu0 0.0
    %2914 = vmatprep.subr.mxu0 0.0
    %2915 = vmatpush2.msra.mxu0 0.0
    %2916 = vmatprep.subr.mxu0 0.0
    %2917 = vmatpush2.msra.mxu0 0.0
    %2918 = vmatprep.subr.mxu0 0.0
    %2919 = vmatpush2.msra.mxu0 0.0
    %2920 = vmatprep.subr.mxu0 0.0
    %2921 = vmatpush2.msra.mxu0 0.0
    %2922 = vmatprep.subr.mxu0 0.0
    %2923 = vmatpush2.msra.mxu0 0.0
    %2924 = vmatprep.subr.mxu0 0.0
    %2925 = vmatpush2.msra.mxu0 0.0
    %2926 = vmatprep.subr.mxu0 0.0
    %2927 = vmatpush2.msra.mxu0 0.0
    %2928 = vmatprep.subr.mxu0 0.0
    %2929 = vmatpush2.msra.mxu0 0.0
    %2930 = vmatprep.subr.mxu0 0.0
    %2931 = vmatpush2.msra.mxu0 0.0
    %2932 = vmatprep.subr.mxu0 0.0
    %2933 = vmatpush2.msra.mxu0 0.0
    %2934 = vmatprep.subr.mxu0 0.0
    %2935 = vmatpush2.msra.mxu0 0.0
    %2936 = vmatprep.subr.mxu0 0.0
    %2937 = vmatpush2.msra.mxu0 0.0
    %2938 = vmatprep.mubr.f32.mxu0 0.0
    %2939 = vmatmul.mubr.f32.gmra.mxu0 %v2869
    %v2940 = vpop.f32.mrf.mxu0
    %v2941 = vadd.f32 0.0, %v2940
    %v2942 = vpop.f32.mrf.mxu0
    %v2943 = vadd.f32 0.0, %v2942
    %2944 = vdwg.mxu0
    %2945 = vmatprep.subr.mxu0 0.0
    %2946 = vmatpush1.msra.mxu0 %v2193
    %2947 = vmatprep.subr.mxu0 0.0
    %2948 = vmatpush1.msra.mxu0 %v2190
    %2949 = vmatprep.subr.mxu0 0.0
    %2950 = vmatpush1.msra.mxu0 %v2187
    %2951 = vmatprep.subr.mxu0 0.0
    %2952 = vmatpush1.msra.mxu0 %v2184
    %2953 = vmatprep.subr.mxu0 0.0
    %2954 = vmatpush1.msra.mxu0 %v2181
    %2955 = vmatprep.subr.mxu0 0.0
    %2956 = vmatpush1.msra.mxu0 %v2178
    %2957 = vmatprep.subr.mxu0 0.0
    %2958 = vmatpush1.msra.mxu0 %v2175
    %2959 = vmatprep.subr.mxu0 0.0
    %2960 = vmatpush1.msra.mxu0 %v2172
    %2961 = vmatprep.subr.mxu0 0.0
    %2962 = vmatpush1.msra.mxu0 %v2169
    %2963 = vmatprep.subr.mxu0 0.0
    %2964 = vmatpush1.msra.mxu0 %v2166
    %2965 = vmatprep.subr.mxu0 0.0
    %2966 = vmatpush1.msra.mxu0 %v2163
    %2967 = vmatprep.subr.mxu0 0.0
    %2968 = vmatpush1.msra.mxu0 %v2160
    %2969 = vmatprep.subr.mxu0 0.0
    %2970 = vmatpush1.msra.mxu0 %v2157
    %2971 = vmatprep.subr.mxu0 0.0
    %2972 = vmatpush1.msra.mxu0 %v2154
    %2973 = vmatprep.subr.mxu0 0.0
    %2974 = vmatpush1.msra.mxu0 %v2151
    %2975 = vmatprep.subr.mxu0 0.0
    %2976 = vmatpush1.msra.mxu0 %v2148
    %2977 = vmatprep.subr.mxu0 0.0
    %2978 = vmatpush2.msra.mxu0 0.0
    %2979 = vmatprep.subr.mxu0 0.0
    %2980 = vmatpush2.msra.mxu0 0.0
    %2981 = vmatprep.subr.mxu0 0.0
    %2982 = vmatpush2.msra.mxu0 0.0
    %2983 = vmatprep.subr.mxu0 0.0
    %2984 = vmatpush2.msra.mxu0 0.0
    %2985 = vmatprep.subr.mxu0 0.0
    %2986 = vmatpush2.msra.mxu0 0.0
    %2987 = vmatprep.subr.mxu0 0.0
    %2988 = vmatpush2.msra.mxu0 0.0
    %2989 = vmatprep.subr.mxu0 0.0
    %2990 = vmatpush2.msra.mxu0 0.0
    %2991 = vmatprep.subr.mxu0 0.0
    %2992 = vmatpush2.msra.mxu0 0.0
    %2993 = vmatprep.subr.mxu0 0.0
    %2994 = vmatpush2.msra.mxu0 0.0
    %2995 = vmatprep.subr.mxu0 0.0
    %2996 = vmatpush2.msra.mxu0 0.0
    %2997 = vmatprep.subr.mxu0 0.0
    %2998 = vmatpush2.msra.mxu0 0.0
    %2999 = vmatprep.subr.mxu0 0.0
    %3000 = vmatpush2.msra.mxu0 0.0
    %3001 = vmatprep.subr.mxu0 0.0
    %3002 = vmatpush2.msra.mxu0 0.0
    %3003 = vmatprep.subr.mxu0 0.0
    %3004 = vmatpush2.msra.mxu0 0.0
    %3005 = vmatprep.subr.mxu0 0.0
    %3006 = vmatpush2.msra.mxu0 0.0
    %3007 = vmatprep.subr.mxu0 0.0
    %3008 = vmatpush2.msra.mxu0 0.0
    %3009 = vmatprep.mubr.f32.mxu0 0.0
    %3010 = vmatmul.mubr.f32.gmra.mxu0 %v2869
    %v3011 = vpop.f32.mrf.mxu0
    %v3012 = vadd.f32 0.0, %v3011
    %v3013 = vpop.f32.mrf.mxu0
    %3014 = vdwg.mxu0
    %v3015 = vadd.f32 %v2871, %v2941
    %v3016 = vxor.u32 %v3015, 2147483648
    %v3017 = vmul.f32 %v3016, 1.442695
    %v3018 = vpow.pop %v3017
    %v3019 = vadd.f32 %v3018, 1.0
    %v3020 = vrcp.pop %v3019
    %v3021 = vmul.f32 1.0, %v3020
    %v3022 = vadd.f32 %v2872, %v2943
    %v3023 = vxor.u32 %v3022, 2147483648
    %v3024 = vmul.f32 %v3023, 1.442695
    %v3025 = vpow.pop %v3024
    %v3026 = vadd.f32 %v3025, 1.0
    %v3027 = vrcp.pop %v3026
    %v3028 = vmul.f32 1.0, %v3027
    %v3029 = vadd.f32 %v3012, %v2199
    %v3030 = vmul.f32 %v3021, %v3029
    %v3031 = vadd.f32 %v2873, %v3030
    %v3032 = vtanh.pop %v3031
    %v3033 = vsub.f32 1.0, %v3028
    %v3034 = vmul.f32 %v3033, %v3032
    %v3035 = vmul.f32 %v3028, %v2869
    %v3036 = vadd.f32 %v3034, %v3035
    %3037 = vst [vmem:[%s1315] sm:$0xff] %v3036
    %v3038 = vld [vmem:[%s1319] sm:$0xff]
    %v3039 = vld [vmem:[%s1319 + $0x8] sm:$0xff]
    %v3040 = vld [vmem:[%s1319 + $0x10] sm:$0xff]
    %3041 = vmatprep.subr.mxu0 %v2192
    %3042 = vmatpush1.msra.mxu0 %v2191
    %3043 = vmatprep.subr.mxu0 %v2189
    %3044 = vmatpush1.msra.mxu0 %v2188
    %3045 = vmatprep.subr.mxu0 %v2186
    %3046 = vmatpush1.msra.mxu0 %v2185
    %3047 = vmatprep.subr.mxu0 %v2183
    %3048 = vmatpush1.msra.mxu0 %v2182
    %3049 = vmatprep.subr.mxu0 %v2180
    %3050 = vmatpush1.msra.mxu0 %v2179
    %3051 = vmatprep.subr.mxu0 %v2177
    %3052 = vmatpush1.msra.mxu0 %v2176
    %3053 = vmatprep.subr.mxu0 %v2174
    %3054 = vmatpush1.msra.mxu0 %v2173
    %3055 = vmatprep.subr.mxu0 %v2171
    %3056 = vmatpush1.msra.mxu0 %v2170
    %3057 = vmatprep.subr.mxu0 %v2168
    %3058 = vmatpush1.msra.mxu0 %v2167
    %3059 = vmatprep.subr.mxu0 %v2165
    %3060 = vmatpush1.msra.mxu0 %v2164
    %3061 = vmatprep.subr.mxu0 %v2162
    %3062 = vmatpush1.msra.mxu0 %v2161
    %3063 = vmatprep.subr.mxu0 %v2159
    %3064 = vmatpush1.msra.mxu0 %v2158
    %3065 = vmatprep.subr.mxu0 %v2156
    %3066 = vmatpush1.msra.mxu0 %v2155
    %3067 = vmatprep.subr.mxu0 %v2153
    %3068 = vmatpush1.msra.mxu0 %v2152
    %3069 = vmatprep.subr.mxu0 %v2150
    %3070 = vmatpush1.msra.mxu0 %v2149
    %3071 = vmatprep.subr.mxu0 %v2147
    %3072 = vmatpush1.msra.mxu0 %v2146
    %3073 = vmatprep.subr.mxu0 0.0
    %3074 = vmatpush2.msra.mxu0 0.0
    %3075 = vmatprep.subr.mxu0 0.0
    %3076 = vmatpush2.msra.mxu0 0.0
    %3077 = vmatprep.subr.mxu0 0.0
    %3078 = vmatpush2.msra.mxu0 0.0
    %3079 = vmatprep.subr.mxu0 0.0
    %3080 = vmatpush2.msra.mxu0 0.0
    %3081 = vmatprep.subr.mxu0 0.0
    %3082 = vmatpush2.msra.mxu0 0.0
    %3083 = vmatprep.subr.mxu0 0.0
    %3084 = vmatpush2.msra.mxu0 0.0
    %3085 = vmatprep.subr.mxu0 0.0
    %3086 = vmatpush2.msra.mxu0 0.0
    %3087 = vmatprep.subr.mxu0 0.0
    %3088 = vmatpush2.msra.mxu0 0.0
    %3089 = vmatprep.subr.mxu0 0.0
    %3090 = vmatpush2.msra.mxu0 0.0
    %3091 = vmatprep.subr.mxu0 0.0
    %3092 = vmatpush2.msra.mxu0 0.0
    %3093 = vmatprep.subr.mxu0 0.0
    %3094 = vmatpush2.msra.mxu0 0.0
    %3095 = vmatprep.subr.mxu0 0.0
    %3096 = vmatpush2.msra.mxu0 0.0
    %3097 = vmatprep.subr.mxu0 0.0
    %3098 = vmatpush2.msra.mxu0 0.0
    %3099 = vmatprep.subr.mxu0 0.0
    %3100 = vmatpush2.msra.mxu0 0.0
    %3101 = vmatprep.subr.mxu0 0.0
    %3102 = vmatpush2.msra.mxu0 0.0
    %3103 = vmatprep.subr.mxu0 0.0
    %3104 = vmatpush2.msra.mxu0 0.0
    %3105 = vmatprep.mubr.f32.mxu0 0.0
    %3106 = vmatmul.mubr.f32.gmra.mxu0 %v3036
    %v3107 = vpop.f32.mrf.mxu0
    %v3108 = vadd.f32 0.0, %v3107
    %v3109 = vpop.f32.mrf.mxu0
    %v3110 = vadd.f32 0.0, %v3109
    %3111 = vdwg.mxu0
    %3112 = vmatprep.subr.mxu0 0.0
    %3113 = vmatpush1.msra.mxu0 %v2193
    %3114 = vmatprep.subr.mxu0 0.0
    %3115 = vmatpush1.msra.mxu0 %v2190
    %3116 = vmatprep.subr.mxu0 0.0
    %3117 = vmatpush1.msra.mxu0 %v2187
    %3118 = vmatprep.subr.mxu0 0.0
    %3119 = vmatpush1.msra.mxu0 %v2184
    %3120 = vmatprep.subr.mxu0 0.0
    %3121 = vmatpush1.msra.mxu0 %v2181
    %3122 = vmatprep.subr.mxu0 0.0
    %3123 = vmatpush1.msra.mxu0 %v2178
    %3124 = vmatprep.subr.mxu0 0.0
    %3125 = vmatpush1.msra.mxu0 %v2175
    %3126 = vmatprep.subr.mxu0 0.0
    %3127 = vmatpush1.msra.mxu0 %v2172
    %3128 = vmatprep.subr.mxu0 0.0
    %3129 = vmatpush1.msra.mxu0 %v2169
    %3130 = vmatprep.subr.mxu0 0.0
    %3131 = vmatpush1.msra.mxu0 %v2166
    %3132 = vmatprep.subr.mxu0 0.0
    %3133 = vmatpush1.msra.mxu0 %v2163
    %3134 = vmatprep.subr.mxu0 0.0
    %3135 = vmatpush1.msra.mxu0 %v2160
    %3136 = vmatprep.subr.mxu0 0.0
    %3137 = vmatpush1.msra.mxu0 %v2157
    %3138 = vmatprep.subr.mxu0 0.0
    %3139 = vmatpush1.msra.mxu0 %v2154
    %3140 = vmatprep.subr.mxu0 0.0
    %3141 = vmatpush1.msra.mxu0 %v2151
    %3142 = vmatprep.subr.mxu0 0.0
    %3143 = vmatpush1.msra.mxu0 %v2148
    %3144 = vmatprep.subr.mxu0 0.0
    %3145 = vmatpush2.msra.mxu0 0.0
    %3146 = vmatprep.subr.mxu0 0.0
    %3147 = vmatpush2.msra.mxu0 0.0
    %3148 = vmatprep.subr.mxu0 0.0
    %3149 = vmatpush2.msra.mxu0 0.0
    %3150 = vmatprep.subr.mxu0 0.0
    %3151 = vmatpush2.msra.mxu0 0.0
    %3152 = vmatprep.subr.mxu0 0.0
    %3153 = vmatpush2.msra.mxu0 0.0
    %3154 = vmatprep.subr.mxu0 0.0
    %3155 = vmatpush2.msra.mxu0 0.0
    %3156 = vmatprep.subr.mxu0 0.0
    %3157 = vmatpush2.msra.mxu0 0.0
    %3158 = vmatprep.subr.mxu0 0.0
    %3159 = vmatpush2.msra.mxu0 0.0
    %3160 = vmatprep.subr.mxu0 0.0
    %3161 = vmatpush2.msra.mxu0 0.0
    %3162 = vmatprep.subr.mxu0 0.0
    %3163 = vmatpush2.msra.mxu0 0.0
    %3164 = vmatprep.subr.mxu0 0.0
    %3165 = vmatpush2.msra.mxu0 0.0
    %3166 = vmatprep.subr.mxu0 0.0
    %3167 = vmatpush2.msra.mxu0 0.0
    %3168 = vmatprep.subr.mxu0 0.0
    %3169 = vmatpush2.msra.mxu0 0.0
    %3170 = vmatprep.subr.mxu0 0.0
    %3171 = vmatpush2.msra.mxu0 0.0
    %3172 = vmatprep.subr.mxu0 0.0
    %3173 = vmatpush2.msra.mxu0 0.0
    %3174 = vmatprep.subr.mxu0 0.0
    %3175 = vmatpush2.msra.mxu0 0.0
    %3176 = vmatprep.mubr.f32.mxu0 0.0
    %3177 = vmatmul.mubr.f32.gmra.mxu0 %v3036
    %v3178 = vpop.f32.mrf.mxu0
    %v3179 = vadd.f32 0.0, %v3178
    %v3180 = vpop.f32.mrf.mxu0
    %3181 = vdwg.mxu0
    %v3182 = vadd.f32 %v3038, %v3108
    %v3183 = vxor.u32 %v3182, 2147483648
    %v3184 = vmul.f32 %v3183, 1.442695
    %v3185 = vpow.pop %v3184
    %v3186 = vadd.f32 %v3185, 1.0
    %v3187 = vrcp.pop %v3186
    %v3188 = vmul.f32 1.0, %v3187
    %v3189 = vadd.f32 %v3039, %v3110
    %v3190 = vxor.u32 %v3189, 2147483648
    %v3191 = vmul.f32 %v3190, 1.442695
    %v3192 = vpow.pop %v3191
    %v3193 = vadd.f32 %v3192, 1.0
    %v3194 = vrcp.pop %v3193
    %v3195 = vmul.f32 1.0, %v3194
    %v3196 = vadd.f32 %v3179, %v2199
    %v3197 = vmul.f32 %v3188, %v3196
    %v3198 = vadd.f32 %v3040, %v3197
    %v3199 = vtanh.pop %v3198
    %v3200 = vsub.f32 1.0, %v3195
    %v3201 = vmul.f32 %v3200, %v3199
    %v3202 = vmul.f32 %v3195, %v3036
    %v3203 = vadd.f32 %v3201, %v3202
    %3204 = vst [vmem:[%s1486] sm:$0xff] %v3203
    %v3205 = vld [vmem:[%s1490] sm:$0xff]
    %v3206 = vld [vmem:[%s1490 + $0x8] sm:$0xff]
    %v3207 = vld [vmem:[%s1490 + $0x10] sm:$0xff]
    %3208 = vmatprep.subr.mxu0 %v2192
    %3209 = vmatpush1.msra.mxu0 %v2191
    %3210 = vmatprep.subr.mxu0 %v2189
    %3211 = vmatpush1.msra.mxu0 %v2188
    %3212 = vmatprep.subr.mxu0 %v2186
    %3213 = vmatpush1.msra.mxu0 %v2185
    %3214 = vmatprep.subr.mxu0 %v2183
    %3215 = vmatpush1.msra.mxu0 %v2182
    %3216 = vmatprep.subr.mxu0 %v2180
    %3217 = vmatpush1.msra.mxu0 %v2179
    %3218 = vmatprep.subr.mxu0 %v2177
    %3219 = vmatpush1.msra.mxu0 %v2176
    %3220 = vmatprep.subr.mxu0 %v2174
    %3221 = vmatpush1.msra.mxu0 %v2173
    %3222 = vmatprep.subr.mxu0 %v2171
    %3223 = vmatpush1.msra.mxu0 %v2170
    %3224 = vmatprep.subr.mxu0 %v2168
    %3225 = vmatpush1.msra.mxu0 %v2167
    %3226 = vmatprep.subr.mxu0 %v2165
    %3227 = vmatpush1.msra.mxu0 %v2164
    %3228 = vmatprep.subr.mxu0 %v2162
    %3229 = vmatpush1.msra.mxu0 %v2161
    %3230 = vmatprep.subr.mxu0 %v2159
    %3231 = vmatpush1.msra.mxu0 %v2158
    %3232 = vmatprep.subr.mxu0 %v2156
    %3233 = vmatpush1.msra.mxu0 %v2155
    %3234 = vmatprep.subr.mxu0 %v2153
    %3235 = vmatpush1.msra.mxu0 %v2152
    %3236 = vmatprep.subr.mxu0 %v2150
    %3237 = vmatpush1.msra.mxu0 %v2149
    %3238 = vmatprep.subr.mxu0 %v2147
    %3239 = vmatpush1.msra.mxu0 %v2146
    %3240 = vmatprep.subr.mxu0 0.0
    %3241 = vmatpush2.msra.mxu0 0.0
    %3242 = vmatprep.subr.mxu0 0.0
    %3243 = vmatpush2.msra.mxu0 0.0
    %3244 = vmatprep.subr.mxu0 0.0
    %3245 = vmatpush2.msra.mxu0 0.0
    %3246 = vmatprep.subr.mxu0 0.0
    %3247 = vmatpush2.msra.mxu0 0.0
    %3248 = vmatprep.subr.mxu0 0.0
    %3249 = vmatpush2.msra.mxu0 0.0
    %3250 = vmatprep.subr.mxu0 0.0
    %3251 = vmatpush2.msra.mxu0 0.0
    %3252 = vmatprep.subr.mxu0 0.0
    %3253 = vmatpush2.msra.mxu0 0.0
    %3254 = vmatprep.subr.mxu0 0.0
    %3255 = vmatpush2.msra.mxu0 0.0
    %3256 = vmatprep.subr.mxu0 0.0
    %3257 = vmatpush2.msra.mxu0 0.0
    %3258 = vmatprep.subr.mxu0 0.0
    %3259 = vmatpush2.msra.mxu0 0.0
    %3260 = vmatprep.subr.mxu0 0.0
    %3261 = vmatpush2.msra.mxu0 0.0
    %3262 = vmatprep.subr.mxu0 0.0
    %3263 = vmatpush2.msra.mxu0 0.0
    %3264 = vmatprep.subr.mxu0 0.0
    %3265 = vmatpush2.msra.mxu0 0.0
    %3266 = vmatprep.subr.mxu0 0.0
    %3267 = vmatpush2.msra.mxu0 0.0
    %3268 = vmatprep.subr.mxu0 0.0
    %3269 = vmatpush2.msra.mxu0 0.0
    %3270 = vmatprep.subr.mxu0 0.0
    %3271 = vmatpush2.msra.mxu0 0.0
    %3272 = vmatprep.mubr.f32.mxu0 0.0
    %3273 = vmatmul.mubr.f32.gmra.mxu0 %v3203
    %v3274 = vpop.f32.mrf.mxu0
    %v3275 = vadd.f32 0.0, %v3274
    %v3276 = vpop.f32.mrf.mxu0
    %v3277 = vadd.f32 0.0, %v3276
    %3278 = vdwg.mxu0
    %3279 = vmatprep.subr.mxu0 0.0
    %3280 = vmatpush1.msra.mxu0 %v2193
    %3281 = vmatprep.subr.mxu0 0.0
    %3282 = vmatpush1.msra.mxu0 %v2190
    %3283 = vmatprep.subr.mxu0 0.0
    %3284 = vmatpush1.msra.mxu0 %v2187
    %3285 = vmatprep.subr.mxu0 0.0
    %3286 = vmatpush1.msra.mxu0 %v2184
    %3287 = vmatprep.subr.mxu0 0.0
    %3288 = vmatpush1.msra.mxu0 %v2181
    %3289 = vmatprep.subr.mxu0 0.0
    %3290 = vmatpush1.msra.mxu0 %v2178
    %3291 = vmatprep.subr.mxu0 0.0
    %3292 = vmatpush1.msra.mxu0 %v2175
    %3293 = vmatprep.subr.mxu0 0.0
    %3294 = vmatpush1.msra.mxu0 %v2172
    %3295 = vmatprep.subr.mxu0 0.0
    %3296 = vmatpush1.msra.mxu0 %v2169
    %3297 = vmatprep.subr.mxu0 0.0
    %3298 = vmatpush1.msra.mxu0 %v2166
    %3299 = vmatprep.subr.mxu0 0.0
    %3300 = vmatpush1.msra.mxu0 %v2163
    %3301 = vmatprep.subr.mxu0 0.0
    %3302 = vmatpush1.msra.mxu0 %v2160
    %3303 = vmatprep.subr.mxu0 0.0
    %3304 = vmatpush1.msra.mxu0 %v2157
    %3305 = vmatprep.subr.mxu0 0.0
    %3306 = vmatpush1.msra.mxu0 %v2154
    %3307 = vmatprep.subr.mxu0 0.0
    %3308 = vmatpush1.msra.mxu0 %v2151
    %3309 = vmatprep.subr.mxu0 0.0
    %3310 = vmatpush1.msra.mxu0 %v2148
    %3311 = vmatprep.subr.mxu0 0.0
    %3312 = vmatpush2.msra.mxu0 0.0
    %3313 = vmatprep.subr.mxu0 0.0
    %3314 = vmatpush2.msra.mxu0 0.0
    %3315 = vmatprep.subr.mxu0 0.0
    %3316 = vmatpush2.msra.mxu0 0.0
    %3317 = vmatprep.subr.mxu0 0.0
    %3318 = vmatpush2.msra.mxu0 0.0
    %3319 = vmatprep.subr.mxu0 0.0
    %3320 = vmatpush2.msra.mxu0 0.0
    %3321 = vmatprep.subr.mxu0 0.0
    %3322 = vmatpush2.msra.mxu0 0.0
    %3323 = vmatprep.subr.mxu0 0.0
    %3324 = vmatpush2.msra.mxu0 0.0
    %3325 = vmatprep.subr.mxu0 0.0
    %3326 = vmatpush2.msra.mxu0 0.0
    %3327 = vmatprep.subr.mxu0 0.0
    %3328 = vmatpush2.msra.mxu0 0.0
    %3329 = vmatprep.subr.mxu0 0.0
    %3330 = vmatpush2.msra.mxu0 0.0
    %3331 = vmatprep.subr.mxu0 0.0
    %3332 = vmatpush2.msra.mxu0 0.0
    %3333 = vmatprep.subr.mxu0 0.0
    %3334 = vmatpush2.msra.mxu0 0.0
    %3335 = vmatprep.subr.mxu0 0.0
    %3336 = vmatpush2.msra.mxu0 0.0
    %3337 = vmatprep.subr.mxu0 0.0
    %3338 = vmatpush2.msra.mxu0 0.0
    %3339 = vmatprep.subr.mxu0 0.0
    %3340 = vmatpush2.msra.mxu0 0.0
    %3341 = vmatprep.subr.mxu0 0.0
    %3342 = vmatpush2.msra.mxu0 0.0
    %3343 = vmatprep.mubr.f32.mxu0 0.0
    %3344 = vmatmul.mubr.f32.gmra.mxu0 %v3203
    %v3345 = vpop.f32.mrf.mxu0
    %v3346 = vadd.f32 0.0, %v3345
    %v3347 = vpop.f32.mrf.mxu0
    %3348 = vdwg.mxu0
    %v3349 = vadd.f32 %v3205, %v3275
    %v3350 = vxor.u32 %v3349, 2147483648
    %v3351 = vmul.f32 %v3350, 1.442695
    %v3352 = vpow.pop %v3351
    %v3353 = vadd.f32 %v3352, 1.0
    %v3354 = vrcp.pop %v3353
    %v3355 = vmul.f32 1.0, %v3354
    %v3356 = vadd.f32 %v3206, %v3277
    %v3357 = vxor.u32 %v3356, 2147483648
    %v3358 = vmul.f32 %v3357, 1.442695
    %v3359 = vpow.pop %v3358
    %v3360 = vadd.f32 %v3359, 1.0
    %v3361 = vrcp.pop %v3360
    %v3362 = vmul.f32 1.0, %v3361
    %v3363 = vadd.f32 %v3346, %v2199
    %v3364 = vmul.f32 %v3355, %v3363
    %v3365 = vadd.f32 %v3207, %v3364
    %v3366 = vtanh.pop %v3365
    %v3367 = vsub.f32 1.0, %v3362
    %v3368 = vmul.f32 %v3367, %v3366
    %v3369 = vmul.f32 %v3362, %v3203
    %v3370 = vadd.f32 %v3368, %v3369
    %3371 = vst [vmem:[%s1657] sm:$0xff] %v3370
    %v3372 = vld [vmem:[%s1661] sm:$0xff]
    %v3373 = vld [vmem:[%s1661 + $0x8] sm:$0xff]
    %v3374 = vld [vmem:[%s1661 + $0x10] sm:$0xff]
    %3375 = vmatprep.subr.mxu0 %v2192
    %3376 = vmatpush1.msra.mxu0 %v2191
    %3377 = vmatprep.subr.mxu0 %v2189
    %3378 = vmatpush1.msra.mxu0 %v2188
    %3379 = vmatprep.subr.mxu0 %v2186
    %3380 = vmatpush1.msra.mxu0 %v2185
    %3381 = vmatprep.subr.mxu0 %v2183
    %3382 = vmatpush1.msra.mxu0 %v2182
    %3383 = vmatprep.subr.mxu0 %v2180
    %3384 = vmatpush1.msra.mxu0 %v2179
    %3385 = vmatprep.subr.mxu0 %v2177
    %3386 = vmatpush1.msra.mxu0 %v2176
    %3387 = vmatprep.subr.mxu0 %v2174
    %3388 = vmatpush1.msra.mxu0 %v2173
    %3389 = vmatprep.subr.mxu0 %v2171
    %3390 = vmatpush1.msra.mxu0 %v2170
    %3391 = vmatprep.subr.mxu0 %v2168
    %3392 = vmatpush1.msra.mxu0 %v2167
    %3393 = vmatprep.subr.mxu0 %v2165
    %3394 = vmatpush1.msra.mxu0 %v2164
    %3395 = vmatprep.subr.mxu0 %v2162
    %3396 = vmatpush1.msra.mxu0 %v2161
    %3397 = vmatprep.subr.mxu0 %v2159
    %3398 = vmatpush1.msra.mxu0 %v2158
    %3399 = vmatprep.subr.mxu0 %v2156
    %3400 = vmatpush1.msra.mxu0 %v2155
    %3401 = vmatprep.subr.mxu0 %v2153
    %3402 = vmatpush1.msra.mxu0 %v2152
    %3403 = vmatprep.subr.mxu0 %v2150
    %3404 = vmatpush1.msra.mxu0 %v2149
    %3405 = vmatprep.subr.mxu0 %v2147
    %3406 = vmatpush1.msra.mxu0 %v2146
    %3407 = vmatprep.subr.mxu0 0.0
    %3408 = vmatpush2.msra.mxu0 0.0
    %3409 = vmatprep.subr.mxu0 0.0
    %3410 = vmatpush2.msra.mxu0 0.0
    %3411 = vmatprep.subr.mxu0 0.0
    %3412 = vmatpush2.msra.mxu0 0.0
    %3413 = vmatprep.subr.mxu0 0.0
    %3414 = vmatpush2.msra.mxu0 0.0
    %3415 = vmatprep.subr.mxu0 0.0
    %3416 = vmatpush2.msra.mxu0 0.0
    %3417 = vmatprep.subr.mxu0 0.0
    %3418 = vmatpush2.msra.mxu0 0.0
    %3419 = vmatprep.subr.mxu0 0.0
    %3420 = vmatpush2.msra.mxu0 0.0
    %3421 = vmatprep.subr.mxu0 0.0
    %3422 = vmatpush2.msra.mxu0 0.0
    %3423 = vmatprep.subr.mxu0 0.0
    %3424 = vmatpush2.msra.mxu0 0.0
    %3425 = vmatprep.subr.mxu0 0.0
    %3426 = vmatpush2.msra.mxu0 0.0
    %3427 = vmatprep.subr.mxu0 0.0
    %3428 = vmatpush2.msra.mxu0 0.0
    %3429 = vmatprep.subr.mxu0 0.0
    %3430 = vmatpush2.msra.mxu0 0.0
    %3431 = vmatprep.subr.mxu0 0.0
    %3432 = vmatpush2.msra.mxu0 0.0
    %3433 = vmatprep.subr.mxu0 0.0
    %3434 = vmatpush2.msra.mxu0 0.0
    %3435 = vmatprep.subr.mxu0 0.0
    %3436 = vmatpush2.msra.mxu0 0.0
    %3437 = vmatprep.subr.mxu0 0.0
    %3438 = vmatpush2.msra.mxu0 0.0
    %3439 = vmatprep.mubr.f32.mxu0 0.0
    %3440 = vmatmul.mubr.f32.gmra.mxu0 %v3370
    %v3441 = vpop.f32.mrf.mxu0
    %v3442 = vadd.f32 0.0, %v3441
    %v3443 = vpop.f32.mrf.mxu0
    %v3444 = vadd.f32 0.0, %v3443
    %3445 = vdwg.mxu0
    %3446 = vmatprep.subr.mxu0 0.0
    %3447 = vmatpush1.msra.mxu0 %v2193
    %3448 = vmatprep.subr.mxu0 0.0
    %3449 = vmatpush1.msra.mxu0 %v2190
    %3450 = vmatprep.subr.mxu0 0.0
    %3451 = vmatpush1.msra.mxu0 %v2187
    %3452 = vmatprep.subr.mxu0 0.0
    %3453 = vmatpush1.msra.mxu0 %v2184
    %3454 = vmatprep.subr.mxu0 0.0
    %3455 = vmatpush1.msra.mxu0 %v2181
    %3456 = vmatprep.subr.mxu0 0.0
    %3457 = vmatpush1.msra.mxu0 %v2178
    %3458 = vmatprep.subr.mxu0 0.0
    %3459 = vmatpush1.msra.mxu0 %v2175
    %3460 = vmatprep.subr.mxu0 0.0
    %3461 = vmatpush1.msra.mxu0 %v2172
    %3462 = vmatprep.subr.mxu0 0.0
    %3463 = vmatpush1.msra.mxu0 %v2169
    %3464 = vmatprep.subr.mxu0 0.0
    %3465 = vmatpush1.msra.mxu0 %v2166
    %3466 = vmatprep.subr.mxu0 0.0
    %3467 = vmatpush1.msra.mxu0 %v2163
    %3468 = vmatprep.subr.mxu0 0.0
    %3469 = vmatpush1.msra.mxu0 %v2160
    %3470 = vmatprep.subr.mxu0 0.0
    %3471 = vmatpush1.msra.mxu0 %v2157
    %3472 = vmatprep.subr.mxu0 0.0
    %3473 = vmatpush1.msra.mxu0 %v2154
    %3474 = vmatprep.subr.mxu0 0.0
    %3475 = vmatpush1.msra.mxu0 %v2151
    %3476 = vmatprep.subr.mxu0 0.0
    %3477 = vmatpush1.msra.mxu0 %v2148
    %3478 = vmatprep.subr.mxu0 0.0
    %3479 = vmatpush2.msra.mxu0 0.0
    %3480 = vmatprep.subr.mxu0 0.0
    %3481 = vmatpush2.msra.mxu0 0.0
    %3482 = vmatprep.subr.mxu0 0.0
    %3483 = vmatpush2.msra.mxu0 0.0
    %3484 = vmatprep.subr.mxu0 0.0
    %3485 = vmatpush2.msra.mxu0 0.0
    %3486 = vmatprep.subr.mxu0 0.0
    %3487 = vmatpush2.msra.mxu0 0.0
    %3488 = vmatprep.subr.mxu0 0.0
    %3489 = vmatpush2.msra.mxu0 0.0
    %3490 = vmatprep.subr.mxu0 0.0
    %3491 = vmatpush2.msra.mxu0 0.0
    %3492 = vmatprep.subr.mxu0 0.0
    %3493 = vmatpush2.msra.mxu0 0.0
    %3494 = vmatprep.subr.mxu0 0.0
    %3495 = vmatpush2.msra.mxu0 0.0
    %3496 = vmatprep.subr.mxu0 0.0
    %3497 = vmatpush2.msra.mxu0 0.0
    %3498 = vmatprep.subr.mxu0 0.0
    %3499 = vmatpush2.msra.mxu0 0.0
    %3500 = vmatprep.subr.mxu0 0.0
    %3501 = vmatpush2.msra.mxu0 0.0
    %3502 = vmatprep.subr.mxu0 0.0
    %3503 = vmatpush2.msra.mxu0 0.0
    %3504 = vmatprep.subr.mxu0 0.0
    %3505 = vmatpush2.msra.mxu0 0.0
    %3506 = vmatprep.subr.mxu0 0.0
    %3507 = vmatpush2.msra.mxu0 0.0
    %3508 = vmatprep.subr.mxu0 0.0
    %3509 = vmatpush2.msra.mxu0 0.0
    %3510 = vmatprep.mubr.f32.mxu0 0.0
    %3511 = vmatmul.mubr.f32.gmra.mxu0 %v3370
    %v3512 = vpop.f32.mrf.mxu0
    %v3513 = vadd.f32 0.0, %v3512
    %v3514 = vpop.f32.mrf.mxu0
    %3515 = vdwg.mxu0
    %v3516 = vadd.f32 %v3372, %v3442
    %v3517 = vxor.u32 %v3516, 2147483648
    %v3518 = vmul.f32 %v3517, 1.442695
    %v3519 = vpow.pop %v3518
    %v3520 = vadd.f32 %v3519, 1.0
    %v3521 = vrcp.pop %v3520
    %v3522 = vmul.f32 1.0, %v3521
    %v3523 = vadd.f32 %v3373, %v3444
    %v3524 = vxor.u32 %v3523, 2147483648
    %v3525 = vmul.f32 %v3524, 1.442695
    %v3526 = vpow.pop %v3525
    %v3527 = vadd.f32 %v3526, 1.0
    %v3528 = vrcp.pop %v3527
    %v3529 = vmul.f32 1.0, %v3528
    %v3530 = vadd.f32 %v3513, %v2199
    %v3531 = vmul.f32 %v3522, %v3530
    %v3532 = vadd.f32 %v3374, %v3531
    %v3533 = vtanh.pop %v3532
    %v3534 = vsub.f32 1.0, %v3529
    %v3535 = vmul.f32 %v3534, %v3533
    %v3536 = vmul.f32 %v3529, %v3370
    %v3537 = vadd.f32 %v3535, %v3536
    %3538 = vst [vmem:[%s1828] sm:$0xff] %v3537
    %s3539 = scalar_lea.vmem %s11, 8
    %3540 = vst [vmem:[%s3539] sm:$0xff] %v3537
    // Predicated region
    $region58: #{rnn_model_forward.1} parent=1 // pred_check
      _
    $region59: #{rnn_model_forward.1} parent=1 // pred_check_branch
      %3542 = sbr.rel (0) target = $region61
    $region60: #{rnn_model_forward.1} parent=1 // pred_region
      _
    $region61: #{rnn_model_forward.1} parent=1 // pred_fallthru
      _
    // Predicated region
    $region62: #{rnn_model_forward.1} parent=1 // pred_check
      _
    $region63: #{rnn_model_forward.1} parent=1 // pred_check_branch
      %3544 = sbr.rel (0) target = $region65
    $region64: #{rnn_model_forward.1} parent=1 // pred_region
      _
    $region65: #{rnn_model_forward.1} parent=1 // pred_fallthru
      _
    // Predicated region
    $region66: #{rnn_model_forward.1} parent=1 // pred_check
      _
    $region67: #{rnn_model_forward.1} parent=1 // pred_check_branch
      %3546 = sbr.rel (0) target = $region69
    $region68: #{rnn_model_forward.1} parent=1 // pred_region
      _
    $region69: #{rnn_model_forward.1} parent=1 // pred_fallthru
      _
    // Predicated region
    $region70: #{rnn_model_forward.1} parent=1 // pred_check
      _
    $region71: #{rnn_model_forward.1} parent=1 // pred_check_branch
      %3548 = sbr.rel (0) target = $region73
    $region72: #{rnn_model_forward.1} parent=1 // pred_region
      _
    $region73: #{rnn_model_forward.1} parent=1 // pred_fallthru
      _
    %3549 = vsyncpa [#allocation4], 1
    %3550 = vsyncpa [#allocation6], 1
    %3551 = vsyncpa [#allocation9], 1

</llo_original>
